<compile_context>
chip_gen: v6e
topology: v6e:2x2x1
jax: 0.10.0
libtpu: 0.0.40
codegen_flags: <defaults>
</compile_context>

<pallas_src>
import jax
import jax.numpy as jnp
from jax import lax
from jax.experimental import pallas as pl
from jax.experimental.pallas import tpu as pltpu


# ----------------------------------------------------------------------------
# In-kernel helpers
# ----------------------------------------------------------------------------
def _conv_row(in_ref, row0, kh, kw, wo, wmat_bf16, bias_f32):
    """One output row of a stride-1 'valid' conv.

    in_ref : (B*Hin, Win, Cin) VMEM ref (NHWC, batch*height flattened leading)
    row0   : first input row feeding this output row (b*Hin + h)
    returns: (wo, Cout) float32, bias-added and ReLU'd.
    Patch lane order = (kj, ki, cin) -- matches the weight prep below.
    """
    rows = [in_ref[row0 + ki] for ki in range(kh)]          # kh x (Win, Cin)
    rowcat = jnp.concatenate(rows, axis=1)                  # (Win, kh*Cin)
    pieces = [rowcat[kj:kj + wo, :] for kj in range(kw)]    # kw x (wo, kh*Cin)
    patch = jnp.concatenate(pieces, axis=1)                 # (wo, kw*kh*Cin)
    y = jnp.dot(patch.astype(jnp.bfloat16), wmat_bf16,
                preferred_element_type=jnp.float32)
    return jnp.maximum(y + bias_f32, 0.0)                   # (wo, Cout) f32


def _conv_layer(in_ref, out_ref, w_ref, b_ref, *, B, hin, ho, wo, kh, kw):
    wmat = w_ref[...]   # (kw*kh*Cin, Cout) bf16, loaded once (loop-invariant)
    bias = b_ref[...]   # (1, Cout) f32

    def body(h, carry):
        for b in range(B):
            out_ref[b * ho + h] = _conv_row(in_ref, b * hin + h,
                                            kh, kw, wo, wmat, bias)
        return carry

    lax.fori_loop(0, ho, body, 0)


def _pool_selectors(w_out, w_in):
    """0/1 matrices selecting even / odd columns (for W-pair compaction)."""
    r = lax.broadcasted_iota(jnp.int32, (w_out, w_in), 0)
    c = lax.broadcasted_iota(jnp.int32, (w_out, w_in), 1)
    even = (c == 2 * r).astype(jnp.float32)
    odd = (c == 2 * r + 1).astype(jnp.float32)
    return even, odd


def _pool_layer(in_ref, out_ref, *, B, hin, win):
    """2x2, stride-2 max pool on (B*hin, win, C) -> (B*hin//2, win//2, C)."""
    ho, wo = hin // 2, win // 2
    sel_e, sel_o = _pool_selectors(wo, win)   # loop-invariant constants

    def body(hp, carry):
        for b in range(B):
            r0 = in_ref[b * hin + 2 * hp]                     # (win, C)
            r1 = in_ref[b * hin + 2 * hp + 1]                 # (win, C)
            rm = jnp.maximum(r0, r1)                          # H-pair max
            e = jnp.dot(sel_e, rm, preferred_element_type=jnp.float32)
            o = jnp.dot(sel_o, rm, preferred_element_type=jnp.float32)
            out_ref[b * ho + hp] = jnp.maximum(e, o)          # (wo, C)
        return carry

    lax.fori_loop(0, ho, body, 0)


# ----------------------------------------------------------------------------
# Fused forward kernel
# ----------------------------------------------------------------------------
def _net_kernel(x_ref, w1_ref, b1_ref, w2_ref, b2_ref, w3_ref, b3_ref,
                fw1_ref, fb1_ref, fw2_ref, fb2_ref, fw3_ref, fb3_ref,
                out_ref,
                c1_ref, p1_ref, c2_ref, p2_ref):
    B = out_ref.shape[0]

    # conv1 + ReLU : padded (B,36,36,3) -> (B,32,32,6)
    _conv_layer(x_ref, c1_ref, w1_ref, b1_ref, B=B, hin=36, ho=32, wo=32, kh=5, kw=5)
    # 2x2 max pool : -> (B,16,16,6)
    _pool_layer(c1_ref, p1_ref, B=B, hin=32, win=32)
    # conv2 + ReLU : -> (B,14,14,16)
    _conv_layer(p1_ref, c2_ref, w2_ref, b2_ref, B=B, hin=16, ho=14, wo=14, kh=3, kw=3)
    # 2x2 max pool : -> (B,7,7,16)
    _pool_layer(c2_ref, p2_ref, B=B, hin=14, win=14)

    # conv3 + ReLU : -> (B,5,5,32), unrolled (tiny) and flattened directly
    # into the FC input. The PyTorch NCHW .view(-1, 800) order is absorbed
    # into the pre-permuted fc1 weight (see prepare_params), so here we
    # flatten in NHWC (h, w, c) lane order.
    w3 = w3_ref[...]
    b3 = b3_ref[...]
    flat_rows = []
    for b in range(B):
        pieces = []
        for h in range(5):
            y = _conv_row(p2_ref, b * 7 + h, 3, 3, 5, w3, b3)   # (5, 32)
            for w in range(5):
                pieces.append(y[w:w + 1, :])                    # (1, 32)
        flat_rows.append(jnp.concatenate(pieces, axis=1))       # (1, 800)
    x_flat = jnp.concatenate(flat_rows, axis=0)                 # (B, 800) f32

    def dense(x, w_ref_, b_ref_):
        return jnp.dot(x.astype(jnp.bfloat16), w_ref_[...],
                       preferred_element_type=jnp.float32) + b_ref_[...]

    h1 = jnp.maximum(dense(x_flat, fw1_ref, fb1_ref), 0.0)      # (B, 150)
    z2 = dense(h1, fw2_ref, fb2_ref)                            # (B, 90)
    # numerically stable log(sigmoid(z)) = min(z,0) - log(1 + exp(-|z|))
    h2 = jnp.minimum(z2, 0.0) - jnp.log(1.0 + jnp.exp(-jnp.abs(z2)))
    out_ref[...] = dense(h2, fw3_ref, fb3_ref)                  # (B, 10)


# ----------------------------------------------------------------------------
# Parameters
# ----------------------------------------------------------------------------
def init_params(key):
    ks = jax.random.split(key, 12)
    s = 0.05
    return {
        "conv1_w": jax.random.normal(ks[0], (6, 3, 5, 5), jnp.float32) * s,
        "conv1_b": jax.random.normal(ks[1], (6,), jnp.float32) * s,
        "conv2_w": jax.random.normal(ks[2], (16, 6, 3, 3), jnp.float32) * s,
        "conv2_b": jax.random.normal(ks[3], (16,), jnp.float32) * s,
        "conv3_w": jax.random.normal(ks[4], (32, 16, 3, 3), jnp.float32) * s,
        "conv3_b": jax.random.normal(ks[5], (32,), jnp.float32) * s,
        "fc1_w": jax.random.normal(ks[6], (150, 800), jnp.float32) * s,
        "fc1_b": jax.random.normal(ks[7], (150,), jnp.float32) * s,
        "fc2_w": jax.random.normal(ks[8], (90, 150), jnp.float32) * s,
        "fc2_b": jax.random.normal(ks[9], (90,), jnp.float32) * s,
        "fc3_w": jax.random.normal(ks[10], (10, 90), jnp.float32) * s,
        "fc3_b": jax.random.normal(ks[11], (10,), jnp.float32) * s,
    }


def prepare_params(p):
    """One-time conversion of PyTorch-layout params into kernel layout.

    conv weights : (Cout,Cin,kh,kw) -> (kw*kh*Cin, Cout) bf16 (tap-major,
                   (kj, ki, cin) row order to match in-kernel patch build).
    fc1 weight   : columns permuted from PyTorch NCHW flatten (c*25+h*5+w)
                   to the kernel's NHWC flatten (h*160+w*32+c), then
                   transposed to (in, out) bf16.
    fc2/fc3      : transposed to (in, out) bf16.  Biases kept f32 as (1, N).
    """
    def conv_w(w):
        cout, cin, kh, kw = w.shape
        return (jnp.transpose(w, (3, 2, 1, 0))
                .reshape(kw * kh * cin, cout).astype(jnp.bfloat16))

    def bias(b):
        return b.reshape(1, -1).astype(jnp.float32)

    fc1 = (p["fc1_w"].reshape(150, 32, 5, 5)
           .transpose(0, 2, 3, 1).reshape(150, 800))
    return {
        "w1": conv_w(p["conv1_w"]), "b1": bias(p["conv1_b"]),
        "w2": conv_w(p["conv2_w"]), "b2": bias(p["conv2_b"]),
        "w3": conv_w(p["conv3_w"]), "b3": bias(p["conv3_b"]),
        "fw1": fc1.T.astype(jnp.bfloat16), "fb1": bias(p["fc1_b"]),
        "fw2": p["fc2_w"].T.astype(jnp.bfloat16), "fb2": bias(p["fc2_b"]),
        "fw3": p["fc3_w"].T.astype(jnp.bfloat16), "fb3": bias(p["fc3_b"]),
    }


# ----------------------------------------------------------------------------
# Forward pass (single fused pallas_call)
# ----------------------------------------------------------------------------
@jax.jit
def net_forward(prepped, x_nchw):
    B = x_nchw.shape[0]
    assert x_nchw.shape[1:] == (3, 32, 32)

    # NCHW -> NHWC, pad H/W by 2 for conv1, flatten (B, H) rows so all VMEM
    # refs inside the kernel are 3-D with a single leading (untiled) dim.
    x = jnp.transpose(x_nchw, (0, 2, 3, 1)).astype(jnp.float32)
    x = jnp.pad(x, ((0, 0), (2, 2), (2, 2), (0, 0)))
    x = x.reshape(B * 36, 36, 3)

    vmem = pl.BlockSpec(memory_space=pltpu.MemorySpace.VMEM)
    args = (x,
            prepped["w1"], prepped["b1"],
            prepped["w2"], prepped["b2"],
            prepped["w3"], prepped["b3"],
            prepped["fw1"], prepped["fb1"],
            prepped["fw2"], prepped["fb2"],
            prepped["fw3"], prepped["fb3"])

    return pl.pallas_call(
        _net_kernel,
        out_shape=jax.ShapeDtypeStruct((B, 10), jnp.float32),
        in_specs=[vmem] * len(args),
        out_specs=vmem,
        scratch_shapes=[
            pltpu.VMEM((B * 32, 32, 6), jnp.float32),    # conv1 out
            pltpu.VMEM((B * 16, 16, 6), jnp.float32),    # pool1 out
            pltpu.VMEM((B * 14, 14, 16), jnp.float32),   # conv2 out
            pltpu.VMEM((B * 7, 7, 16), jnp.float32),     # pool2 out
        ],
    )(*args)


# ----------------------------------------------------------------------------
if __name__ == "__main__":
    key = jax.random.PRNGKey(0)
    k_param, k_x = jax.random.split(key)
    params = init_params(k_param)
    prepped = prepare_params(params)   # weight reordering done once, not per call

    # CIFAR-like input implied by the module: (B, 3, 32, 32), small batch.
    x = jax.random.normal(k_x, (2, 3, 32, 32), dtype=jnp.float32)

    out = net_forward(prepped, x)
    out = jax.block_until_ready(out)
    assert out.shape == (2, 10), out.shape
    assert out.dtype == jnp.float32
    print("KERNEL_OK")
</pallas_src>

<mosaic_0001>
module attributes {stable_mosaic.version = 11 : i64} {
  func.func @_net_kernel(%arg0: memref<72x36x3xf32, #tpu.memory_space<vmem>>, %arg1: memref<75x6xbf16, #tpu.memory_space<vmem>>, %arg2: memref<1x6xf32, #tpu.memory_space<vmem>>, %arg3: memref<54x16xbf16, #tpu.memory_space<vmem>>, %arg4: memref<1x16xf32, #tpu.memory_space<vmem>>, %arg5: memref<144x32xbf16, #tpu.memory_space<vmem>>, %arg6: memref<1x32xf32, #tpu.memory_space<vmem>>, %arg7: memref<800x150xbf16, #tpu.memory_space<vmem>>, %arg8: memref<1x150xf32, #tpu.memory_space<vmem>>, %arg9: memref<150x90xbf16, #tpu.memory_space<vmem>>, %arg10: memref<1x90xf32, #tpu.memory_space<vmem>>, %arg11: memref<90x10xbf16, #tpu.memory_space<vmem>>, %arg12: memref<1x10xf32, #tpu.memory_space<vmem>>, %arg13: memref<2x10xf32, #tpu.memory_space<vmem>>, %arg14: memref<64x32x6xf32, #tpu.memory_space<vmem>>, %arg15: memref<32x16x6xf32, #tpu.memory_space<vmem>>, %arg16: memref<28x14x16xf32, #tpu.memory_space<vmem>>, %arg17: memref<14x7x16xf32, #tpu.memory_space<vmem>>) attributes {dimension_semantics = [], scalar_prefetch = 0 : i64, scratch_operands = 4 : i64, tpu.core_type = #tpu.core_type<tc>} {
    %c0 = arith.constant 0 : index
    %c0_0 = arith.constant 0 : index
    %0 = vector.load %arg1[%c0, %c0_0] : memref<75x6xbf16, #tpu.memory_space<vmem>>, vector<75x6xbf16>
    %c0_1 = arith.constant 0 : index
    %c0_2 = arith.constant 0 : index
    %1 = vector.load %arg2[%c0_1, %c0_2] : memref<1x6xf32, #tpu.memory_space<vmem>>, vector<1x6xf32>
    %c0_i32 = arith.constant 0 : i32
    %c32_i32 = arith.constant 32 : i32
    %2 = arith.addi %c0_i32, %c32_i32 : i32
    %c1_i32 = arith.constant 1 : i32
    scf.for %arg18 = %c0_i32 to %2 step %c1_i32  : i32 {
      %c0_i32_143 = arith.constant 0 : i32
      %296 = arith.addi %c0_i32_143, %arg18 : i32
      %c0_i32_144 = arith.constant 0 : i32
      %297 = arith.addi %296, %c0_i32_144 : i32
      %298 = arith.index_cast %297 : i32 to index
      %c0_145 = arith.constant 0 : index
      %c0_146 = arith.constant 0 : index
      %299 = vector.load %arg0[%298, %c0_145, %c0_146] : memref<72x36x3xf32, #tpu.memory_space<vmem>>, vector<1x36x3xf32>
      %300 = vector.shape_cast %299 : vector<1x36x3xf32> to vector<36x3xf32>
      %c1_i32_147 = arith.constant 1 : i32
      %301 = arith.addi %296, %c1_i32_147 : i32
      %302 = arith.index_cast %301 : i32 to index
      %c0_148 = arith.constant 0 : index
      %c0_149 = arith.constant 0 : index
      %303 = vector.load %arg0[%302, %c0_148, %c0_149] : memref<72x36x3xf32, #tpu.memory_space<vmem>>, vector<1x36x3xf32>
      %304 = vector.shape_cast %303 : vector<1x36x3xf32> to vector<36x3xf32>
      %c2_i32_150 = arith.constant 2 : i32
      %305 = arith.addi %296, %c2_i32_150 : i32
      %306 = arith.index_cast %305 : i32 to index
      %c0_151 = arith.constant 0 : index
      %c0_152 = arith.constant 0 : index
      %307 = vector.load %arg0[%306, %c0_151, %c0_152] : memref<72x36x3xf32, #tpu.memory_space<vmem>>, vector<1x36x3xf32>
      %308 = vector.shape_cast %307 : vector<1x36x3xf32> to vector<36x3xf32>
      %c3_i32 = arith.constant 3 : i32
      %309 = arith.addi %296, %c3_i32 : i32
      %310 = arith.index_cast %309 : i32 to index
      %c0_153 = arith.constant 0 : index
      %c0_154 = arith.constant 0 : index
      %311 = vector.load %arg0[%310, %c0_153, %c0_154] : memref<72x36x3xf32, #tpu.memory_space<vmem>>, vector<1x36x3xf32>
      %312 = vector.shape_cast %311 : vector<1x36x3xf32> to vector<36x3xf32>
      %c4_i32 = arith.constant 4 : i32
      %313 = arith.addi %296, %c4_i32 : i32
      %314 = arith.index_cast %313 : i32 to index
      %c0_155 = arith.constant 0 : index
      %c0_156 = arith.constant 0 : index
      %315 = vector.load %arg0[%314, %c0_155, %c0_156] : memref<72x36x3xf32, #tpu.memory_space<vmem>>, vector<1x36x3xf32>
      %316 = vector.shape_cast %315 : vector<1x36x3xf32> to vector<36x3xf32>
      %317 = tpu.concatenate %300, %304, %308, %312, %316 in 1 : vector<36x3xf32>, vector<36x3xf32>, vector<36x3xf32>, vector<36x3xf32>, vector<36x3xf32> -> vector<36x15xf32>
      %318 = vector.extract_strided_slice %317 {offsets = [0, 0], sizes = [32, 15], strides = [1, 1]} : vector<36x15xf32> to vector<32x15xf32>
      %319 = vector.extract_strided_slice %317 {offsets = [1, 0], sizes = [32, 15], strides = [1, 1]} : vector<36x15xf32> to vector<32x15xf32>
      %320 = vector.extract_strided_slice %317 {offsets = [2, 0], sizes = [32, 15], strides = [1, 1]} : vector<36x15xf32> to vector<32x15xf32>
      %321 = vector.extract_strided_slice %317 {offsets = [3, 0], sizes = [32, 15], strides = [1, 1]} : vector<36x15xf32> to vector<32x15xf32>
      %322 = vector.extract_strided_slice %317 {offsets = [4, 0], sizes = [32, 15], strides = [1, 1]} : vector<36x15xf32> to vector<32x15xf32>
      %323 = tpu.concatenate %318, %319, %320, %321, %322 in 1 : vector<32x15xf32>, vector<32x15xf32>, vector<32x15xf32>, vector<32x15xf32>, vector<32x15xf32> -> vector<32x75xf32>
      %324 = arith.truncf %323 : vector<32x75xf32> to vector<32x75xbf16>
      %cst_157 = arith.constant dense<0.000000e+00> : vector<32x6xf32>
      %325 = tpu.matmul %324, %0, %cst_157 {dimension_numbers = #tpu.dot_dimension_numbers<[1], [0], [0], [1], [0, 0, 1, 1], [], []>} : vector<32x75xbf16>, vector<75x6xbf16>, vector<32x6xf32> -> vector<32x6xf32>
      %326 = vector.broadcast %1 : vector<1x6xf32> to vector<32x6xf32>
      %327 = arith.addf %325, %326 : vector<32x6xf32>
      %cst_158 = arith.constant 0.000000e+00 : f32
      %328 = vector.broadcast %cst_158 : f32 to vector<32x6xf32>
      %329 = arith.maximumf %327, %328 : vector<32x6xf32>
      %c0_i32_159 = arith.constant 0 : i32
      %330 = arith.addi %c0_i32_159, %arg18 : i32
      %331 = arith.index_cast %330 : i32 to index
      %c0_160 = arith.constant 0 : index
      %c0_161 = arith.constant 0 : index
      %332 = vector.load %arg14[%331, %c0_160, %c0_161] : memref<64x32x6xf32, #tpu.memory_space<vmem>>, vector<1x32x6xf32>
      %333 = vector.shape_cast %332 : vector<1x32x6xf32> to vector<32x6xf32>
      %334 = vector.shape_cast %329 : vector<32x6xf32> to vector<1x32x6xf32>
      tpu.vector_store %arg14[%331, %c0_160, %c0_161], %334 {strides = array<i32>} : memref<64x32x6xf32, #tpu.memory_space<vmem>>, vector<1x32x6xf32>,
      %c36_i32 = arith.constant 36 : i32
      %335 = arith.addi %c36_i32, %arg18 : i32
      %c0_i32_162 = arith.constant 0 : i32
      %336 = arith.addi %335, %c0_i32_162 : i32
      %337 = arith.index_cast %336 : i32 to index
      %c0_163 = arith.constant 0 : index
      %c0_164 = arith.constant 0 : index
      %338 = vector.load %arg0[%337, %c0_163, %c0_164] : memref<72x36x3xf32, #tpu.memory_space<vmem>>, vector<1x36x3xf32>
      %339 = vector.shape_cast %338 : vector<1x36x3xf32> to vector<36x3xf32>
      %c1_i32_165 = arith.constant 1 : i32
      %340 = arith.addi %335, %c1_i32_165 : i32
      %341 = arith.index_cast %340 : i32 to index
      %c0_166 = arith.constant 0 : index
      %c0_167 = arith.constant 0 : index
      %342 = vector.load %arg0[%341, %c0_166, %c0_167] : memref<72x36x3xf32, #tpu.memory_space<vmem>>, vector<1x36x3xf32>
      %343 = vector.shape_cast %342 : vector<1x36x3xf32> to vector<36x3xf32>
      %c2_i32_168 = arith.constant 2 : i32
      %344 = arith.addi %335, %c2_i32_168 : i32
      %345 = arith.index_cast %344 : i32 to index
      %c0_169 = arith.constant 0 : index
      %c0_170 = arith.constant 0 : index
      %346 = vector.load %arg0[%345, %c0_169, %c0_170] : memref<72x36x3xf32, #tpu.memory_space<vmem>>, vector<1x36x3xf32>
      %347 = vector.shape_cast %346 : vector<1x36x3xf32> to vector<36x3xf32>
      %c3_i32_171 = arith.constant 3 : i32
      %348 = arith.addi %335, %c3_i32_171 : i32
      %349 = arith.index_cast %348 : i32 to index
      %c0_172 = arith.constant 0 : index
      %c0_173 = arith.constant 0 : index
      %350 = vector.load %arg0[%349, %c0_172, %c0_173] : memref<72x36x3xf32, #tpu.memory_space<vmem>>, vector<1x36x3xf32>
      %351 = vector.shape_cast %350 : vector<1x36x3xf32> to vector<36x3xf32>
      %c4_i32_174 = arith.constant 4 : i32
      %352 = arith.addi %335, %c4_i32_174 : i32
      %353 = arith.index_cast %352 : i32 to index
      %c0_175 = arith.constant 0 : index
      %c0_176 = arith.constant 0 : index
      %354 = vector.load %arg0[%353, %c0_175, %c0_176] : memref<72x36x3xf32, #tpu.memory_space<vmem>>, vector<1x36x3xf32>
      %355 = vector.shape_cast %354 : vector<1x36x3xf32> to vector<36x3xf32>
      %356 = tpu.concatenate %339, %343, %347, %351, %355 in 1 : vector<36x3xf32>, vector<36x3xf32>, vector<36x3xf32>, vector<36x3xf32>, vector<36x3xf32> -> vector<36x15xf32>
      %357 = vector.extract_strided_slice %356 {offsets = [0, 0], sizes = [32, 15], strides = [1, 1]} : vector<36x15xf32> to vector<32x15xf32>
      %358 = vector.extract_strided_slice %356 {offsets = [1, 0], sizes = [32, 15], strides = [1, 1]} : vector<36x15xf32> to vector<32x15xf32>
      %359 = vector.extract_strided_slice %356 {offsets = [2, 0], sizes = [32, 15], strides = [1, 1]} : vector<36x15xf32> to vector<32x15xf32>
      %360 = vector.extract_strided_slice %356 {offsets = [3, 0], sizes = [32, 15], strides = [1, 1]} : vector<36x15xf32> to vector<32x15xf32>
      %361 = vector.extract_strided_slice %356 {offsets = [4, 0], sizes = [32, 15], strides = [1, 1]} : vector<36x15xf32> to vector<32x15xf32>
      %362 = tpu.concatenate %357, %358, %359, %360, %361 in 1 : vector<32x15xf32>, vector<32x15xf32>, vector<32x15xf32>, vector<32x15xf32>, vector<32x15xf32> -> vector<32x75xf32>
      %363 = arith.truncf %362 : vector<32x75xf32> to vector<32x75xbf16>
      %cst_177 = arith.constant dense<0.000000e+00> : vector<32x6xf32>
      %364 = tpu.matmul %363, %0, %cst_177 {dimension_numbers = #tpu.dot_dimension_numbers<[1], [0], [0], [1], [0, 0, 1, 1], [], []>} : vector<32x75xbf16>, vector<75x6xbf16>, vector<32x6xf32> -> vector<32x6xf32>
      %365 = vector.broadcast %1 : vector<1x6xf32> to vector<32x6xf32>
      %366 = arith.addf %364, %365 : vector<32x6xf32>
      %cst_178 = arith.constant 0.000000e+00 : f32
      %367 = vector.broadcast %cst_178 : f32 to vector<32x6xf32>
      %368 = arith.maximumf %366, %367 : vector<32x6xf32>
      %c32_i32_179 = arith.constant 32 : i32
      %369 = arith.addi %c32_i32_179, %arg18 : i32
      %370 = arith.index_cast %369 : i32 to index
      %c0_180 = arith.constant 0 : index
      %c0_181 = arith.constant 0 : index
      %371 = vector.load %arg14[%370, %c0_180, %c0_181] : memref<64x32x6xf32, #tpu.memory_space<vmem>>, vector<1x32x6xf32>
      %372 = vector.shape_cast %371 : vector<1x32x6xf32> to vector<32x6xf32>
      %373 = vector.shape_cast %368 : vector<32x6xf32> to vector<1x32x6xf32>
      tpu.vector_store %arg14[%370, %c0_180, %c0_181], %373 {strides = array<i32>} : memref<64x32x6xf32, #tpu.memory_space<vmem>>, vector<1x32x6xf32>,
    }
    %c32_i32_3 = arith.constant 32 : i32
    %3 = tpu.iota {dimensions = array<i32: 0>} : vector<16x32xi32>
    %4 = tpu.iota {dimensions = array<i32: 1>} : vector<16x32xi32>
    %c2_i32 = arith.constant 2 : i32
    %5 = vector.broadcast %c2_i32 : i32 to vector<16x32xi32>
    %6 = arith.muli %5, %3 : vector<16x32xi32>
    %7 = arith.cmpi eq, %4, %6 : vector<16x32xi32>
    %8 = arith.extui %7 : vector<16x32xi1> to vector<16x32xi32>
    %9 = arith.sitofp %8 : vector<16x32xi32> to vector<16x32xf32>
    %c2_i32_4 = arith.constant 2 : i32
    %10 = vector.broadcast %c2_i32_4 : i32 to vector<16x32xi32>
    %11 = arith.muli %10, %3 : vector<16x32xi32>
    %c1_i32_5 = arith.constant 1 : i32
    %12 = vector.broadcast %c1_i32_5 : i32 to vector<16x32xi32>
    %13 = arith.addi %11, %12 : vector<16x32xi32>
    %14 = arith.cmpi eq, %4, %13 : vector<16x32xi32>
    %15 = arith.extui %14 : vector<16x32xi1> to vector<16x32xi32>
    %16 = arith.sitofp %15 : vector<16x32xi32> to vector<16x32xf32>
    %c0_i32_6 = arith.constant 0 : i32
    %c16_i32 = arith.constant 16 : i32
    %17 = arith.addi %c0_i32_6, %c16_i32 : i32
    %c1_i32_7 = arith.constant 1 : i32
    scf.for %arg18 = %c0_i32_6 to %17 step %c1_i32_7  : i32 {
      %c2_i32_143 = arith.constant 2 : i32
      %296 = arith.muli %c2_i32_143, %arg18 : i32
      %c0_i32_144 = arith.constant 0 : i32
      %297 = arith.addi %c0_i32_144, %296 : i32
      %298 = arith.index_cast %297 : i32 to index
      %c0_145 = arith.constant 0 : index
      %c0_146 = arith.constant 0 : index
      %299 = vector.load %arg14[%298, %c0_145, %c0_146] : memref<64x32x6xf32, #tpu.memory_space<vmem>>, vector<1x32x6xf32>
      %300 = vector.shape_cast %299 : vector<1x32x6xf32> to vector<32x6xf32>
      %c2_i32_147 = arith.constant 2 : i32
      %301 = arith.muli %c2_i32_147, %arg18 : i32
      %c0_i32_148 = arith.constant 0 : i32
      %302 = arith.addi %c0_i32_148, %301 : i32
      %c1_i32_149 = arith.constant 1 : i32
      %303 = arith.addi %302, %c1_i32_149 : i32
      %304 = arith.index_cast %303 : i32 to index
      %c0_150 = arith.constant 0 : index
      %c0_151 = arith.constant 0 : index
      %305 = vector.load %arg14[%304, %c0_150, %c0_151] : memref<64x32x6xf32, #tpu.memory_space<vmem>>, vector<1x32x6xf32>
      %306 = vector.shape_cast %305 : vector<1x32x6xf32> to vector<32x6xf32>
      %307 = arith.maximumf %300, %306 : vector<32x6xf32>
      %cst_152 = arith.constant dense<0.000000e+00> : vector<16x6xf32>
      %308 = tpu.matmul %9, %307, %cst_152 {dimension_numbers = #tpu.dot_dimension_numbers<[1], [0], [0], [1], [0, 0, 1, 1], [], []>} : vector<16x32xf32>, vector<32x6xf32>, vector<16x6xf32> -> vector<16x6xf32>
      %cst_153 = arith.constant dense<0.000000e+00> : vector<16x6xf32>
      %309 = tpu.matmul %16, %307, %cst_153 {dimension_numbers = #tpu.dot_dimension_numbers<[1], [0], [0], [1], [0, 0, 1, 1], [], []>} : vector<16x32xf32>, vector<32x6xf32>, vector<16x6xf32> -> vector<16x6xf32>
      %310 = arith.maximumf %308, %309 : vector<16x6xf32>
      %c0_i32_154 = arith.constant 0 : i32
      %311 = arith.addi %c0_i32_154, %arg18 : i32
      %312 = arith.index_cast %311 : i32 to index
      %c0_155 = arith.constant 0 : index
      %c0_156 = arith.constant 0 : index
      %313 = vector.load %arg15[%312, %c0_155, %c0_156] : memref<32x16x6xf32, #tpu.memory_space<vmem>>, vector<1x16x6xf32>
      %314 = vector.shape_cast %313 : vector<1x16x6xf32> to vector<16x6xf32>
      %315 = vector.shape_cast %310 : vector<16x6xf32> to vector<1x16x6xf32>
      tpu.vector_store %arg15[%312, %c0_155, %c0_156], %315 {strides = array<i32>} : memref<32x16x6xf32, #tpu.memory_space<vmem>>, vector<1x16x6xf32>,
      %c2_i32_157 = arith.constant 2 : i32
      %316 = arith.muli %c2_i32_157, %arg18 : i32
      %c32_i32_158 = arith.constant 32 : i32
      %317 = arith.addi %c32_i32_158, %316 : i32
      %318 = arith.index_cast %317 : i32 to index
      %c0_159 = arith.constant 0 : index
      %c0_160 = arith.constant 0 : index
      %319 = vector.load %arg14[%318, %c0_159, %c0_160] : memref<64x32x6xf32, #tpu.memory_space<vmem>>, vector<1x32x6xf32>
      %320 = vector.shape_cast %319 : vector<1x32x6xf32> to vector<32x6xf32>
      %c2_i32_161 = arith.constant 2 : i32
      %321 = arith.muli %c2_i32_161, %arg18 : i32
      %c32_i32_162 = arith.constant 32 : i32
      %322 = arith.addi %c32_i32_162, %321 : i32
      %c1_i32_163 = arith.constant 1 : i32
      %323 = arith.addi %322, %c1_i32_163 : i32
      %324 = arith.index_cast %323 : i32 to index
      %c0_164 = arith.constant 0 : index
      %c0_165 = arith.constant 0 : index
      %325 = vector.load %arg14[%324, %c0_164, %c0_165] : memref<64x32x6xf32, #tpu.memory_space<vmem>>, vector<1x32x6xf32>
      %326 = vector.shape_cast %325 : vector<1x32x6xf32> to vector<32x6xf32>
      %327 = arith.maximumf %320, %326 : vector<32x6xf32>
      %cst_166 = arith.constant dense<0.000000e+00> : vector<16x6xf32>
      %328 = tpu.matmul %9, %327, %cst_166 {dimension_numbers = #tpu.dot_dimension_numbers<[1], [0], [0], [1], [0, 0, 1, 1], [], []>} : vector<16x32xf32>, vector<32x6xf32>, vector<16x6xf32> -> vector<16x6xf32>
      %cst_167 = arith.constant dense<0.000000e+00> : vector<16x6xf32>
      %329 = tpu.matmul %16, %327, %cst_167 {dimension_numbers = #tpu.dot_dimension_numbers<[1], [0], [0], [1], [0, 0, 1, 1], [], []>} : vector<16x32xf32>, vector<32x6xf32>, vector<16x6xf32> -> vector<16x6xf32>
      %330 = arith.maximumf %328, %329 : vector<16x6xf32>
      %c16_i32_168 = arith.constant 16 : i32
      %331 = arith.addi %c16_i32_168, %arg18 : i32
      %332 = arith.index_cast %331 : i32 to index
      %c0_169 = arith.constant 0 : index
      %c0_170 = arith.constant 0 : index
      %333 = vector.load %arg15[%332, %c0_169, %c0_170] : memref<32x16x6xf32, #tpu.memory_space<vmem>>, vector<1x16x6xf32>
      %334 = vector.shape_cast %333 : vector<1x16x6xf32> to vector<16x6xf32>
      %335 = vector.shape_cast %330 : vector<16x6xf32> to vector<1x16x6xf32>
      tpu.vector_store %arg15[%332, %c0_169, %c0_170], %335 {strides = array<i32>} : memref<32x16x6xf32, #tpu.memory_space<vmem>>, vector<1x16x6xf32>,
    }
    %c16_i32_8 = arith.constant 16 : i32
    %c0_9 = arith.constant 0 : index
    %c0_10 = arith.constant 0 : index
    %18 = vector.load %arg3[%c0_9, %c0_10] : memref<54x16xbf16, #tpu.memory_space<vmem>>, vector<54x16xbf16>
    %c0_11 = arith.constant 0 : index
    %c0_12 = arith.constant 0 : index
    %19 = vector.load %arg4[%c0_11, %c0_12] : memref<1x16xf32, #tpu.memory_space<vmem>>, vector<1x16xf32>
    %c0_i32_13 = arith.constant 0 : i32
    %c14_i32 = arith.constant 14 : i32
    %20 = arith.addi %c0_i32_13, %c14_i32 : i32
    %c1_i32_14 = arith.constant 1 : i32
    scf.for %arg18 = %c0_i32_13 to %20 step %c1_i32_14  : i32 {
      %c0_i32_143 = arith.constant 0 : i32
      %296 = arith.addi %c0_i32_143, %arg18 : i32
      %c0_i32_144 = arith.constant 0 : i32
      %297 = arith.addi %296, %c0_i32_144 : i32
      %298 = arith.index_cast %297 : i32 to index
      %c0_145 = arith.constant 0 : index
      %c0_146 = arith.constant 0 : index
      %299 = vector.load %arg15[%298, %c0_145, %c0_146] : memref<32x16x6xf32, #tpu.memory_space<vmem>>, vector<1x16x6xf32>
      %300 = vector.shape_cast %299 : vector<1x16x6xf32> to vector<16x6xf32>
      %c1_i32_147 = arith.constant 1 : i32
      %301 = arith.addi %296, %c1_i32_147 : i32
      %302 = arith.index_cast %301 : i32 to index
      %c0_148 = arith.constant 0 : index
      %c0_149 = arith.constant 0 : index
      %303 = vector.load %arg15[%302, %c0_148, %c0_149] : memref<32x16x6xf32, #tpu.memory_space<vmem>>, vector<1x16x6xf32>
      %304 = vector.shape_cast %303 : vector<1x16x6xf32> to vector<16x6xf32>
      %c2_i32_150 = arith.constant 2 : i32
      %305 = arith.addi %296, %c2_i32_150 : i32
      %306 = arith.index_cast %305 : i32 to index
      %c0_151 = arith.constant 0 : index
      %c0_152 = arith.constant 0 : index
      %307 = vector.load %arg15[%306, %c0_151, %c0_152] : memref<32x16x6xf32, #tpu.memory_space<vmem>>, vector<1x16x6xf32>
      %308 = vector.shape_cast %307 : vector<1x16x6xf32> to vector<16x6xf32>
      %309 = tpu.concatenate %300, %304, %308 in 1 : vector<16x6xf32>, vector<16x6xf32>, vector<16x6xf32> -> vector<16x18xf32>
      %310 = vector.extract_strided_slice %309 {offsets = [0, 0], sizes = [14, 18], strides = [1, 1]} : vector<16x18xf32> to vector<14x18xf32>
      %311 = vector.extract_strided_slice %309 {offsets = [1, 0], sizes = [14, 18], strides = [1, 1]} : vector<16x18xf32> to vector<14x18xf32>
      %312 = vector.extract_strided_slice %309 {offsets = [2, 0], sizes = [14, 18], strides = [1, 1]} : vector<16x18xf32> to vector<14x18xf32>
      %313 = tpu.concatenate %310, %311, %312 in 1 : vector<14x18xf32>, vector<14x18xf32>, vector<14x18xf32> -> vector<14x54xf32>
      %314 = arith.truncf %313 : vector<14x54xf32> to vector<14x54xbf16>
      %cst_153 = arith.constant dense<0.000000e+00> : vector<14x16xf32>
      %315 = tpu.matmul %314, %18, %cst_153 {dimension_numbers = #tpu.dot_dimension_numbers<[1], [0], [0], [1], [0, 0, 1, 1], [], []>} : vector<14x54xbf16>, vector<54x16xbf16>, vector<14x16xf32> -> vector<14x16xf32>
      %316 = vector.broadcast %19 : vector<1x16xf32> to vector<14x16xf32>
      %317 = arith.addf %315, %316 : vector<14x16xf32>
      %cst_154 = arith.constant 0.000000e+00 : f32
      %318 = vector.broadcast %cst_154 : f32 to vector<14x16xf32>
      %319 = arith.maximumf %317, %318 : vector<14x16xf32>
      %c0_i32_155 = arith.constant 0 : i32
      %320 = arith.addi %c0_i32_155, %arg18 : i32
      %321 = arith.index_cast %320 : i32 to index
      %c0_156 = arith.constant 0 : index
      %c0_157 = arith.constant 0 : index
      %322 = vector.load %arg16[%321, %c0_156, %c0_157] : memref<28x14x16xf32, #tpu.memory_space<vmem>>, vector<1x14x16xf32>
      %323 = vector.shape_cast %322 : vector<1x14x16xf32> to vector<14x16xf32>
      %324 = vector.shape_cast %319 : vector<14x16xf32> to vector<1x14x16xf32>
      tpu.vector_store %arg16[%321, %c0_156, %c0_157], %324 {strides = array<i32>} : memref<28x14x16xf32, #tpu.memory_space<vmem>>, vector<1x14x16xf32>,
      %c16_i32_158 = arith.constant 16 : i32
      %325 = arith.addi %c16_i32_158, %arg18 : i32
      %c0_i32_159 = arith.constant 0 : i32
      %326 = arith.addi %325, %c0_i32_159 : i32
      %327 = arith.index_cast %326 : i32 to index
      %c0_160 = arith.constant 0 : index
      %c0_161 = arith.constant 0 : index
      %328 = vector.load %arg15[%327, %c0_160, %c0_161] : memref<32x16x6xf32, #tpu.memory_space<vmem>>, vector<1x16x6xf32>
      %329 = vector.shape_cast %328 : vector<1x16x6xf32> to vector<16x6xf32>
      %c1_i32_162 = arith.constant 1 : i32
      %330 = arith.addi %325, %c1_i32_162 : i32
      %331 = arith.index_cast %330 : i32 to index
      %c0_163 = arith.constant 0 : index
      %c0_164 = arith.constant 0 : index
      %332 = vector.load %arg15[%331, %c0_163, %c0_164] : memref<32x16x6xf32, #tpu.memory_space<vmem>>, vector<1x16x6xf32>
      %333 = vector.shape_cast %332 : vector<1x16x6xf32> to vector<16x6xf32>
      %c2_i32_165 = arith.constant 2 : i32
      %334 = arith.addi %325, %c2_i32_165 : i32
      %335 = arith.index_cast %334 : i32 to index
      %c0_166 = arith.constant 0 : index
      %c0_167 = arith.constant 0 : index
      %336 = vector.load %arg15[%335, %c0_166, %c0_167] : memref<32x16x6xf32, #tpu.memory_space<vmem>>, vector<1x16x6xf32>
      %337 = vector.shape_cast %336 : vector<1x16x6xf32> to vector<16x6xf32>
      %338 = tpu.concatenate %329, %333, %337 in 1 : vector<16x6xf32>, vector<16x6xf32>, vector<16x6xf32> -> vector<16x18xf32>
      %339 = vector.extract_strided_slice %338 {offsets = [0, 0], sizes = [14, 18], strides = [1, 1]} : vector<16x18xf32> to vector<14x18xf32>
      %340 = vector.extract_strided_slice %338 {offsets = [1, 0], sizes = [14, 18], strides = [1, 1]} : vector<16x18xf32> to vector<14x18xf32>
      %341 = vector.extract_strided_slice %338 {offsets = [2, 0], sizes = [14, 18], strides = [1, 1]} : vector<16x18xf32> to vector<14x18xf32>
      %342 = tpu.concatenate %339, %340, %341 in 1 : vector<14x18xf32>, vector<14x18xf32>, vector<14x18xf32> -> vector<14x54xf32>
      %343 = arith.truncf %342 : vector<14x54xf32> to vector<14x54xbf16>
      %cst_168 = arith.constant dense<0.000000e+00> : vector<14x16xf32>
      %344 = tpu.matmul %343, %18, %cst_168 {dimension_numbers = #tpu.dot_dimension_numbers<[1], [0], [0], [1], [0, 0, 1, 1], [], []>} : vector<14x54xbf16>, vector<54x16xbf16>, vector<14x16xf32> -> vector<14x16xf32>
      %345 = vector.broadcast %19 : vector<1x16xf32> to vector<14x16xf32>
      %346 = arith.addf %344, %345 : vector<14x16xf32>
      %cst_169 = arith.constant 0.000000e+00 : f32
      %347 = vector.broadcast %cst_169 : f32 to vector<14x16xf32>
      %348 = arith.maximumf %346, %347 : vector<14x16xf32>
      %c14_i32_170 = arith.constant 14 : i32
      %349 = arith.addi %c14_i32_170, %arg18 : i32
      %350 = arith.index_cast %349 : i32 to index
      %c0_171 = arith.constant 0 : index
      %c0_172 = arith.constant 0 : index
      %351 = vector.load %arg16[%350, %c0_171, %c0_172] : memref<28x14x16xf32, #tpu.memory_space<vmem>>, vector<1x14x16xf32>
      %352 = vector.shape_cast %351 : vector<1x14x16xf32> to vector<14x16xf32>
      %353 = vector.shape_cast %348 : vector<14x16xf32> to vector<1x14x16xf32>
      tpu.vector_store %arg16[%350, %c0_171, %c0_172], %353 {strides = array<i32>} : memref<28x14x16xf32, #tpu.memory_space<vmem>>, vector<1x14x16xf32>,
    }
    %c14_i32_15 = arith.constant 14 : i32
    %21 = tpu.iota {dimensions = array<i32: 0>} : vector<7x14xi32>
    %22 = tpu.iota {dimensions = array<i32: 1>} : vector<7x14xi32>
    %c2_i32_16 = arith.constant 2 : i32
    %23 = vector.broadcast %c2_i32_16 : i32 to vector<7x14xi32>
    %24 = arith.muli %23, %21 : vector<7x14xi32>
    %25 = arith.cmpi eq, %22, %24 : vector<7x14xi32>
    %26 = arith.extui %25 : vector<7x14xi1> to vector<7x14xi32>
    %27 = arith.sitofp %26 : vector<7x14xi32> to vector<7x14xf32>
    %c2_i32_17 = arith.constant 2 : i32
    %28 = vector.broadcast %c2_i32_17 : i32 to vector<7x14xi32>
    %29 = arith.muli %28, %21 : vector<7x14xi32>
    %c1_i32_18 = arith.constant 1 : i32
    %30 = vector.broadcast %c1_i32_18 : i32 to vector<7x14xi32>
    %31 = arith.addi %29, %30 : vector<7x14xi32>
    %32 = arith.cmpi eq, %22, %31 : vector<7x14xi32>
    %33 = arith.extui %32 : vector<7x14xi1> to vector<7x14xi32>
    %34 = arith.sitofp %33 : vector<7x14xi32> to vector<7x14xf32>
    %c0_i32_19 = arith.constant 0 : i32
    %c7_i32 = arith.constant 7 : i32
    %35 = arith.addi %c0_i32_19, %c7_i32 : i32
    %c1_i32_20 = arith.constant 1 : i32
    scf.for %arg18 = %c0_i32_19 to %35 step %c1_i32_20  : i32 {
      %c2_i32_143 = arith.constant 2 : i32
      %296 = arith.muli %c2_i32_143, %arg18 : i32
      %c0_i32_144 = arith.constant 0 : i32
      %297 = arith.addi %c0_i32_144, %296 : i32
      %298 = arith.index_cast %297 : i32 to index
      %c0_145 = arith.constant 0 : index
      %c0_146 = arith.constant 0 : index
      %299 = vector.load %arg16[%298, %c0_145, %c0_146] : memref<28x14x16xf32, #tpu.memory_space<vmem>>, vector<1x14x16xf32>
      %300 = vector.shape_cast %299 : vector<1x14x16xf32> to vector<14x16xf32>
      %c2_i32_147 = arith.constant 2 : i32
      %301 = arith.muli %c2_i32_147, %arg18 : i32
      %c0_i32_148 = arith.constant 0 : i32
      %302 = arith.addi %c0_i32_148, %301 : i32
      %c1_i32_149 = arith.constant 1 : i32
      %303 = arith.addi %302, %c1_i32_149 : i32
      %304 = arith.index_cast %303 : i32 to index
      %c0_150 = arith.constant 0 : index
      %c0_151 = arith.constant 0 : index
      %305 = vector.load %arg16[%304, %c0_150, %c0_151] : memref<28x14x16xf32, #tpu.memory_space<vmem>>, vector<1x14x16xf32>
      %306 = vector.shape_cast %305 : vector<1x14x16xf32> to vector<14x16xf32>
      %307 = arith.maximumf %300, %306 : vector<14x16xf32>
      %cst_152 = arith.constant dense<0.000000e+00> : vector<7x16xf32>
      %308 = tpu.matmul %27, %307, %cst_152 {dimension_numbers = #tpu.dot_dimension_numbers<[1], [0], [0], [1], [0, 0, 1, 1], [], []>} : vector<7x14xf32>, vector<14x16xf32>, vector<7x16xf32> -> vector<7x16xf32>
      %cst_153 = arith.constant dense<0.000000e+00> : vector<7x16xf32>
      %309 = tpu.matmul %34, %307, %cst_153 {dimension_numbers = #tpu.dot_dimension_numbers<[1], [0], [0], [1], [0, 0, 1, 1], [], []>} : vector<7x14xf32>, vector<14x16xf32>, vector<7x16xf32> -> vector<7x16xf32>
      %310 = arith.maximumf %308, %309 : vector<7x16xf32>
      %c0_i32_154 = arith.constant 0 : i32
      %311 = arith.addi %c0_i32_154, %arg18 : i32
      %312 = arith.index_cast %311 : i32 to index
      %c0_155 = arith.constant 0 : index
      %c0_156 = arith.constant 0 : index
      %313 = vector.load %arg17[%312, %c0_155, %c0_156] : memref<14x7x16xf32, #tpu.memory_space<vmem>>, vector<1x7x16xf32>
      %314 = vector.shape_cast %313 : vector<1x7x16xf32> to vector<7x16xf32>
      %315 = vector.shape_cast %310 : vector<7x16xf32> to vector<1x7x16xf32>
      tpu.vector_store %arg17[%312, %c0_155, %c0_156], %315 {strides = array<i32>} : memref<14x7x16xf32, #tpu.memory_space<vmem>>, vector<1x7x16xf32>,
      %c2_i32_157 = arith.constant 2 : i32
      %316 = arith.muli %c2_i32_157, %arg18 : i32
      %c14_i32_158 = arith.constant 14 : i32
      %317 = arith.addi %c14_i32_158, %316 : i32
      %318 = arith.index_cast %317 : i32 to index
      %c0_159 = arith.constant 0 : index
      %c0_160 = arith.constant 0 : index
      %319 = vector.load %arg16[%318, %c0_159, %c0_160] : memref<28x14x16xf32, #tpu.memory_space<vmem>>, vector<1x14x16xf32>
      %320 = vector.shape_cast %319 : vector<1x14x16xf32> to vector<14x16xf32>
      %c2_i32_161 = arith.constant 2 : i32
      %321 = arith.muli %c2_i32_161, %arg18 : i32
      %c14_i32_162 = arith.constant 14 : i32
      %322 = arith.addi %c14_i32_162, %321 : i32
      %c1_i32_163 = arith.constant 1 : i32
      %323 = arith.addi %322, %c1_i32_163 : i32
      %324 = arith.index_cast %323 : i32 to index
      %c0_164 = arith.constant 0 : index
      %c0_165 = arith.constant 0 : index
      %325 = vector.load %arg16[%324, %c0_164, %c0_165] : memref<28x14x16xf32, #tpu.memory_space<vmem>>, vector<1x14x16xf32>
      %326 = vector.shape_cast %325 : vector<1x14x16xf32> to vector<14x16xf32>
      %327 = arith.maximumf %320, %326 : vector<14x16xf32>
      %cst_166 = arith.constant dense<0.000000e+00> : vector<7x16xf32>
      %328 = tpu.matmul %27, %327, %cst_166 {dimension_numbers = #tpu.dot_dimension_numbers<[1], [0], [0], [1], [0, 0, 1, 1], [], []>} : vector<7x14xf32>, vector<14x16xf32>, vector<7x16xf32> -> vector<7x16xf32>
      %cst_167 = arith.constant dense<0.000000e+00> : vector<7x16xf32>
      %329 = tpu.matmul %34, %327, %cst_167 {dimension_numbers = #tpu.dot_dimension_numbers<[1], [0], [0], [1], [0, 0, 1, 1], [], []>} : vector<7x14xf32>, vector<14x16xf32>, vector<7x16xf32> -> vector<7x16xf32>
      %330 = arith.maximumf %328, %329 : vector<7x16xf32>
      %c7_i32_168 = arith.constant 7 : i32
      %331 = arith.addi %c7_i32_168, %arg18 : i32
      %332 = arith.index_cast %331 : i32 to index
      %c0_169 = arith.constant 0 : index
      %c0_170 = arith.constant 0 : index
      %333 = vector.load %arg17[%332, %c0_169, %c0_170] : memref<14x7x16xf32, #tpu.memory_space<vmem>>, vector<1x7x16xf32>
      %334 = vector.shape_cast %333 : vector<1x7x16xf32> to vector<7x16xf32>
      %335 = vector.shape_cast %330 : vector<7x16xf32> to vector<1x7x16xf32>
      tpu.vector_store %arg17[%332, %c0_169, %c0_170], %335 {strides = array<i32>} : memref<14x7x16xf32, #tpu.memory_space<vmem>>, vector<1x7x16xf32>,
    }
    %c7_i32_21 = arith.constant 7 : i32
    %c0_22 = arith.constant 0 : index
    %c0_23 = arith.constant 0 : index
    %36 = vector.load %arg5[%c0_22, %c0_23] : memref<144x32xbf16, #tpu.memory_space<vmem>>, vector<144x32xbf16>
    %c0_24 = arith.constant 0 : index
    %c0_25 = arith.constant 0 : index
    %37 = vector.load %arg6[%c0_24, %c0_25] : memref<1x32xf32, #tpu.memory_space<vmem>>, vector<1x32xf32>
    %c0_26 = arith.constant 0 : index
    %c0_27 = arith.constant 0 : index
    %c0_28 = arith.constant 0 : index
    %38 = vector.load %arg17[%c0_26, %c0_27, %c0_28] : memref<14x7x16xf32, #tpu.memory_space<vmem>>, vector<1x7x16xf32>
    %39 = vector.shape_cast %38 : vector<1x7x16xf32> to vector<7x16xf32>
    %c1 = arith.constant 1 : index
    %c0_29 = arith.constant 0 : index
    %c0_30 = arith.constant 0 : index
    %40 = vector.load %arg17[%c1, %c0_29, %c0_30] : memref<14x7x16xf32, #tpu.memory_space<vmem>>, vector<1x7x16xf32>
    %41 = vector.shape_cast %40 : vector<1x7x16xf32> to vector<7x16xf32>
    %c2 = arith.constant 2 : index
    %c0_31 = arith.constant 0 : index
    %c0_32 = arith.constant 0 : index
    %42 = vector.load %arg17[%c2, %c0_31, %c0_32] : memref<14x7x16xf32, #tpu.memory_space<vmem>>, vector<1x7x16xf32>
    %43 = vector.shape_cast %42 : vector<1x7x16xf32> to vector<7x16xf32>
    %44 = tpu.concatenate %39, %41, %43 in 1 : vector<7x16xf32>, vector<7x16xf32>, vector<7x16xf32> -> vector<7x48xf32>
    %45 = vector.extract_strided_slice %44 {offsets = [0, 0], sizes = [5, 48], strides = [1, 1]} : vector<7x48xf32> to vector<5x48xf32>
    %46 = vector.extract_strided_slice %44 {offsets = [1, 0], sizes = [5, 48], strides = [1, 1]} : vector<7x48xf32> to vector<5x48xf32>
    %47 = vector.extract_strided_slice %44 {offsets = [2, 0], sizes = [5, 48], strides = [1, 1]} : vector<7x48xf32> to vector<5x48xf32>
    %48 = tpu.concatenate %45, %46, %47 in 1 : vector<5x48xf32>, vector<5x48xf32>, vector<5x48xf32> -> vector<5x144xf32>
    %49 = arith.truncf %48 : vector<5x144xf32> to vector<5x144xbf16>
    %cst = arith.constant dense<0.000000e+00> : vector<5x32xf32>
    %50 = tpu.matmul %49, %36, %cst {dimension_numbers = #tpu.dot_dimension_numbers<[1], [0], [0], [1], [0, 0, 1, 1], [], []>} : vector<5x144xbf16>, vector<144x32xbf16>, vector<5x32xf32> -> vector<5x32xf32>
    %51 = vector.broadcast %37 : vector<1x32xf32> to vector<5x32xf32>
    %52 = arith.addf %50, %51 : vector<5x32xf32>
    %cst_33 = arith.constant 0.000000e+00 : f32
    %53 = vector.broadcast %cst_33 : f32 to vector<5x32xf32>
    %54 = arith.maximumf %52, %53 : vector<5x32xf32>
    %55 = vector.extract_strided_slice %54 {offsets = [0, 0], sizes = [1, 32], strides = [1, 1]} : vector<5x32xf32> to vector<1x32xf32>
    %56 = vector.extract_strided_slice %54 {offsets = [1, 0], sizes = [1, 32], strides = [1, 1]} : vector<5x32xf32> to vector<1x32xf32>
    %57 = vector.extract_strided_slice %54 {offsets = [2, 0], sizes = [1, 32], strides = [1, 1]} : vector<5x32xf32> to vector<1x32xf32>
    %58 = vector.extract_strided_slice %54 {offsets = [3, 0], sizes = [1, 32], strides = [1, 1]} : vector<5x32xf32> to vector<1x32xf32>
    %59 = vector.extract_strided_slice %54 {offsets = [4, 0], sizes = [1, 32], strides = [1, 1]} : vector<5x32xf32> to vector<1x32xf32>
    %c1_34 = arith.constant 1 : index
    %c0_35 = arith.constant 0 : index
    %c0_36 = arith.constant 0 : index
    %60 = vector.load %arg17[%c1_34, %c0_35, %c0_36] : memref<14x7x16xf32, #tpu.memory_space<vmem>>, vector<1x7x16xf32>
    %61 = vector.shape_cast %60 : vector<1x7x16xf32> to vector<7x16xf32>
    %c2_37 = arith.constant 2 : index
    %c0_38 = arith.constant 0 : index
    %c0_39 = arith.constant 0 : index
    %62 = vector.load %arg17[%c2_37, %c0_38, %c0_39] : memref<14x7x16xf32, #tpu.memory_space<vmem>>, vector<1x7x16xf32>
    %63 = vector.shape_cast %62 : vector<1x7x16xf32> to vector<7x16xf32>
    %c3 = arith.constant 3 : index
    %c0_40 = arith.constant 0 : index
    %c0_41 = arith.constant 0 : index
    %64 = vector.load %arg17[%c3, %c0_40, %c0_41] : memref<14x7x16xf32, #tpu.memory_space<vmem>>, vector<1x7x16xf32>
    %65 = vector.shape_cast %64 : vector<1x7x16xf32> to vector<7x16xf32>
    %66 = tpu.concatenate %61, %63, %65 in 1 : vector<7x16xf32>, vector<7x16xf32>, vector<7x16xf32> -> vector<7x48xf32>
    %67 = vector.extract_strided_slice %66 {offsets = [0, 0], sizes = [5, 48], strides = [1, 1]} : vector<7x48xf32> to vector<5x48xf32>
    %68 = vector.extract_strided_slice %66 {offsets = [1, 0], sizes = [5, 48], strides = [1, 1]} : vector<7x48xf32> to vector<5x48xf32>
    %69 = vector.extract_strided_slice %66 {offsets = [2, 0], sizes = [5, 48], strides = [1, 1]} : vector<7x48xf32> to vector<5x48xf32>
    %70 = tpu.concatenate %67, %68, %69 in 1 : vector<5x48xf32>, vector<5x48xf32>, vector<5x48xf32> -> vector<5x144xf32>
    %71 = arith.truncf %70 : vector<5x144xf32> to vector<5x144xbf16>
    %cst_42 = arith.constant dense<0.000000e+00> : vector<5x32xf32>
    %72 = tpu.matmul %71, %36, %cst_42 {dimension_numbers = #tpu.dot_dimension_numbers<[1], [0], [0], [1], [0, 0, 1, 1], [], []>} : vector<5x144xbf16>, vector<144x32xbf16>, vector<5x32xf32> -> vector<5x32xf32>
    %73 = vector.broadcast %37 : vector<1x32xf32> to vector<5x32xf32>
    %74 = arith.addf %72, %73 : vector<5x32xf32>
    %cst_43 = arith.constant 0.000000e+00 : f32
    %75 = vector.broadcast %cst_43 : f32 to vector<5x32xf32>
    %76 = arith.maximumf %74, %75 : vector<5x32xf32>
    %77 = vector.extract_strided_slice %76 {offsets = [0, 0], sizes = [1, 32], strides = [1, 1]} : vector<5x32xf32> to vector<1x32xf32>
    %78 = vector.extract_strided_slice %76 {offsets = [1, 0], sizes = [1, 32], strides = [1, 1]} : vector<5x32xf32> to vector<1x32xf32>
    %79 = vector.extract_strided_slice %76 {offsets = [2, 0], sizes = [1, 32], strides = [1, 1]} : vector<5x32xf32> to vector<1x32xf32>
    %80 = vector.extract_strided_slice %76 {offsets = [3, 0], sizes = [1, 32], strides = [1, 1]} : vector<5x32xf32> to vector<1x32xf32>
    %81 = vector.extract_strided_slice %76 {offsets = [4, 0], sizes = [1, 32], strides = [1, 1]} : vector<5x32xf32> to vector<1x32xf32>
    %c2_44 = arith.constant 2 : index
    %c0_45 = arith.constant 0 : index
    %c0_46 = arith.constant 0 : index
    %82 = vector.load %arg17[%c2_44, %c0_45, %c0_46] : memref<14x7x16xf32, #tpu.memory_space<vmem>>, vector<1x7x16xf32>
    %83 = vector.shape_cast %82 : vector<1x7x16xf32> to vector<7x16xf32>
    %c3_47 = arith.constant 3 : index
    %c0_48 = arith.constant 0 : index
    %c0_49 = arith.constant 0 : index
    %84 = vector.load %arg17[%c3_47, %c0_48, %c0_49] : memref<14x7x16xf32, #tpu.memory_space<vmem>>, vector<1x7x16xf32>
    %85 = vector.shape_cast %84 : vector<1x7x16xf32> to vector<7x16xf32>
    %c4 = arith.constant 4 : index
    %c0_50 = arith.constant 0 : index
    %c0_51 = arith.constant 0 : index
    %86 = vector.load %arg17[%c4, %c0_50, %c0_51] : memref<14x7x16xf32, #tpu.memory_space<vmem>>, vector<1x7x16xf32>
    %87 = vector.shape_cast %86 : vector<1x7x16xf32> to vector<7x16xf32>
    %88 = tpu.concatenate %83, %85, %87 in 1 : vector<7x16xf32>, vector<7x16xf32>, vector<7x16xf32> -> vector<7x48xf32>
    %89 = vector.extract_strided_slice %88 {offsets = [0, 0], sizes = [5, 48], strides = [1, 1]} : vector<7x48xf32> to vector<5x48xf32>
    %90 = vector.extract_strided_slice %88 {offsets = [1, 0], sizes = [5, 48], strides = [1, 1]} : vector<7x48xf32> to vector<5x48xf32>
    %91 = vector.extract_strided_slice %88 {offsets = [2, 0], sizes = [5, 48], strides = [1, 1]} : vector<7x48xf32> to vector<5x48xf32>
    %92 = tpu.concatenate %89, %90, %91 in 1 : vector<5x48xf32>, vector<5x48xf32>, vector<5x48xf32> -> vector<5x144xf32>
    %93 = arith.truncf %92 : vector<5x144xf32> to vector<5x144xbf16>
    %cst_52 = arith.constant dense<0.000000e+00> : vector<5x32xf32>
    %94 = tpu.matmul %93, %36, %cst_52 {dimension_numbers = #tpu.dot_dimension_numbers<[1], [0], [0], [1], [0, 0, 1, 1], [], []>} : vector<5x144xbf16>, vector<144x32xbf16>, vector<5x32xf32> -> vector<5x32xf32>
    %95 = vector.broadcast %37 : vector<1x32xf32> to vector<5x32xf32>
    %96 = arith.addf %94, %95 : vector<5x32xf32>
    %cst_53 = arith.constant 0.000000e+00 : f32
    %97 = vector.broadcast %cst_53 : f32 to vector<5x32xf32>
    %98 = arith.maximumf %96, %97 : vector<5x32xf32>
    %99 = vector.extract_strided_slice %98 {offsets = [0, 0], sizes = [1, 32], strides = [1, 1]} : vector<5x32xf32> to vector<1x32xf32>
    %100 = vector.extract_strided_slice %98 {offsets = [1, 0], sizes = [1, 32], strides = [1, 1]} : vector<5x32xf32> to vector<1x32xf32>
    %101 = vector.extract_strided_slice %98 {offsets = [2, 0], sizes = [1, 32], strides = [1, 1]} : vector<5x32xf32> to vector<1x32xf32>
    %102 = vector.extract_strided_slice %98 {offsets = [3, 0], sizes = [1, 32], strides = [1, 1]} : vector<5x32xf32> to vector<1x32xf32>
    %103 = vector.extract_strided_slice %98 {offsets = [4, 0], sizes = [1, 32], strides = [1, 1]} : vector<5x32xf32> to vector<1x32xf32>
    %c3_54 = arith.constant 3 : index
    %c0_55 = arith.constant 0 : index
    %c0_56 = arith.constant 0 : index
    %104 = vector.load %arg17[%c3_54, %c0_55, %c0_56] : memref<14x7x16xf32, #tpu.memory_space<vmem>>, vector<1x7x16xf32>
    %105 = vector.shape_cast %104 : vector<1x7x16xf32> to vector<7x16xf32>
    %c4_57 = arith.constant 4 : index
    %c0_58 = arith.constant 0 : index
    %c0_59 = arith.constant 0 : index
    %106 = vector.load %arg17[%c4_57, %c0_58, %c0_59] : memref<14x7x16xf32, #tpu.memory_space<vmem>>, vector<1x7x16xf32>
    %107 = vector.shape_cast %106 : vector<1x7x16xf32> to vector<7x16xf32>
    %c5 = arith.constant 5 : index
    %c0_60 = arith.constant 0 : index
    %c0_61 = arith.constant 0 : index
    %108 = vector.load %arg17[%c5, %c0_60, %c0_61] : memref<14x7x16xf32, #tpu.memory_space<vmem>>, vector<1x7x16xf32>
    %109 = vector.shape_cast %108 : vector<1x7x16xf32> to vector<7x16xf32>
    %110 = tpu.concatenate %105, %107, %109 in 1 : vector<7x16xf32>, vector<7x16xf32>, vector<7x16xf32> -> vector<7x48xf32>
    %111 = vector.extract_strided_slice %110 {offsets = [0, 0], sizes = [5, 48], strides = [1, 1]} : vector<7x48xf32> to vector<5x48xf32>
    %112 = vector.extract_strided_slice %110 {offsets = [1, 0], sizes = [5, 48], strides = [1, 1]} : vector<7x48xf32> to vector<5x48xf32>
    %113 = vector.extract_strided_slice %110 {offsets = [2, 0], sizes = [5, 48], strides = [1, 1]} : vector<7x48xf32> to vector<5x48xf32>
    %114 = tpu.concatenate %111, %112, %113 in 1 : vector<5x48xf32>, vector<5x48xf32>, vector<5x48xf32> -> vector<5x144xf32>
    %115 = arith.truncf %114 : vector<5x144xf32> to vector<5x144xbf16>
    %cst_62 = arith.constant dense<0.000000e+00> : vector<5x32xf32>
    %116 = tpu.matmul %115, %36, %cst_62 {dimension_numbers = #tpu.dot_dimension_numbers<[1], [0], [0], [1], [0, 0, 1, 1], [], []>} : vector<5x144xbf16>, vector<144x32xbf16>, vector<5x32xf32> -> vector<5x32xf32>
    %117 = vector.broadcast %37 : vector<1x32xf32> to vector<5x32xf32>
    %118 = arith.addf %116, %117 : vector<5x32xf32>
    %cst_63 = arith.constant 0.000000e+00 : f32
    %119 = vector.broadcast %cst_63 : f32 to vector<5x32xf32>
    %120 = arith.maximumf %118, %119 : vector<5x32xf32>
    %121 = vector.extract_strided_slice %120 {offsets = [0, 0], sizes = [1, 32], strides = [1, 1]} : vector<5x32xf32> to vector<1x32xf32>
    %122 = vector.extract_strided_slice %120 {offsets = [1, 0], sizes = [1, 32], strides = [1, 1]} : vector<5x32xf32> to vector<1x32xf32>
    %123 = vector.extract_strided_slice %120 {offsets = [2, 0], sizes = [1, 32], strides = [1, 1]} : vector<5x32xf32> to vector<1x32xf32>
    %124 = vector.extract_strided_slice %120 {offsets = [3, 0], sizes = [1, 32], strides = [1, 1]} : vector<5x32xf32> to vector<1x32xf32>
    %125 = vector.extract_strided_slice %120 {offsets = [4, 0], sizes = [1, 32], strides = [1, 1]} : vector<5x32xf32> to vector<1x32xf32>
    %c4_64 = arith.constant 4 : index
    %c0_65 = arith.constant 0 : index
    %c0_66 = arith.constant 0 : index
    %126 = vector.load %arg17[%c4_64, %c0_65, %c0_66] : memref<14x7x16xf32, #tpu.memory_space<vmem>>, vector<1x7x16xf32>
    %127 = vector.shape_cast %126 : vector<1x7x16xf32> to vector<7x16xf32>
    %c5_67 = arith.constant 5 : index
    %c0_68 = arith.constant 0 : index
    %c0_69 = arith.constant 0 : index
    %128 = vector.load %arg17[%c5_67, %c0_68, %c0_69] : memref<14x7x16xf32, #tpu.memory_space<vmem>>, vector<1x7x16xf32>
    %129 = vector.shape_cast %128 : vector<1x7x16xf32> to vector<7x16xf32>
    %c6 = arith.constant 6 : index
    %c0_70 = arith.constant 0 : index
    %c0_71 = arith.constant 0 : index
    %130 = vector.load %arg17[%c6, %c0_70, %c0_71] : memref<14x7x16xf32, #tpu.memory_space<vmem>>, vector<1x7x16xf32>
    %131 = vector.shape_cast %130 : vector<1x7x16xf32> to vector<7x16xf32>
    %132 = tpu.concatenate %127, %129, %131 in 1 : vector<7x16xf32>, vector<7x16xf32>, vector<7x16xf32> -> vector<7x48xf32>
    %133 = vector.extract_strided_slice %132 {offsets = [0, 0], sizes = [5, 48], strides = [1, 1]} : vector<7x48xf32> to vector<5x48xf32>
    %134 = vector.extract_strided_slice %132 {offsets = [1, 0], sizes = [5, 48], strides = [1, 1]} : vector<7x48xf32> to vector<5x48xf32>
    %135 = vector.extract_strided_slice %132 {offsets = [2, 0], sizes = [5, 48], strides = [1, 1]} : vector<7x48xf32> to vector<5x48xf32>
    %136 = tpu.concatenate %133, %134, %135 in 1 : vector<5x48xf32>, vector<5x48xf32>, vector<5x48xf32> -> vector<5x144xf32>
    %137 = arith.truncf %136 : vector<5x144xf32> to vector<5x144xbf16>
    %cst_72 = arith.constant dense<0.000000e+00> : vector<5x32xf32>
    %138 = tpu.matmul %137, %36, %cst_72 {dimension_numbers = #tpu.dot_dimension_numbers<[1], [0], [0], [1], [0, 0, 1, 1], [], []>} : vector<5x144xbf16>, vector<144x32xbf16>, vector<5x32xf32> -> vector<5x32xf32>
    %139 = vector.broadcast %37 : vector<1x32xf32> to vector<5x32xf32>
    %140 = arith.addf %138, %139 : vector<5x32xf32>
    %cst_73 = arith.constant 0.000000e+00 : f32
    %141 = vector.broadcast %cst_73 : f32 to vector<5x32xf32>
    %142 = arith.maximumf %140, %141 : vector<5x32xf32>
    %143 = vector.extract_strided_slice %142 {offsets = [0, 0], sizes = [1, 32], strides = [1, 1]} : vector<5x32xf32> to vector<1x32xf32>
    %144 = vector.extract_strided_slice %142 {offsets = [1, 0], sizes = [1, 32], strides = [1, 1]} : vector<5x32xf32> to vector<1x32xf32>
    %145 = vector.extract_strided_slice %142 {offsets = [2, 0], sizes = [1, 32], strides = [1, 1]} : vector<5x32xf32> to vector<1x32xf32>
    %146 = vector.extract_strided_slice %142 {offsets = [3, 0], sizes = [1, 32], strides = [1, 1]} : vector<5x32xf32> to vector<1x32xf32>
    %147 = vector.extract_strided_slice %142 {offsets = [4, 0], sizes = [1, 32], strides = [1, 1]} : vector<5x32xf32> to vector<1x32xf32>
    %148 = tpu.concatenate %55, %56, %57, %58, %59, %77, %78, %79, %80, %81, %99, %100, %101, %102, %103, %121 in 1 : vector<1x32xf32>, vector<1x32xf32>, vector<1x32xf32>, vector<1x32xf32>, vector<1x32xf32>, vector<1x32xf32>, vector<1x32xf32>, vector<1x32xf32>, vector<1x32xf32>, vector<1x32xf32>, vector<1x32xf32>, vector<1x32xf32>, vector<1x32xf32>, vector<1x32xf32>, vector<1x32xf32>, vector<1x32xf32> -> vector<1x512xf32>
    %149 = tpu.concatenate %122, %123, %124, %125, %143, %144, %145, %146, %147 in 1 : vector<1x32xf32>, vector<1x32xf32>, vector<1x32xf32>, vector<1x32xf32>, vector<1x32xf32>, vector<1x32xf32>, vector<1x32xf32>, vector<1x32xf32>, vector<1x32xf32> -> vector<1x288xf32>
    %150 = tpu.concatenate %148, %149 in 1 : vector<1x512xf32>, vector<1x288xf32> -> vector<1x800xf32>
    %c7 = arith.constant 7 : index
    %c0_74 = arith.constant 0 : index
    %c0_75 = arith.constant 0 : index
    %151 = vector.load %arg17[%c7, %c0_74, %c0_75] : memref<14x7x16xf32, #tpu.memory_space<vmem>>, vector<1x7x16xf32>
    %152 = vector.shape_cast %151 : vector<1x7x16xf32> to vector<7x16xf32>
    %c8 = arith.constant 8 : index
    %c0_76 = arith.constant 0 : index
    %c0_77 = arith.constant 0 : index
    %153 = vector.load %arg17[%c8, %c0_76, %c0_77] : memref<14x7x16xf32, #tpu.memory_space<vmem>>, vector<1x7x16xf32>
    %154 = vector.shape_cast %153 : vector<1x7x16xf32> to vector<7x16xf32>
    %c9 = arith.constant 9 : index
    %c0_78 = arith.constant 0 : index
    %c0_79 = arith.constant 0 : index
    %155 = vector.load %arg17[%c9, %c0_78, %c0_79] : memref<14x7x16xf32, #tpu.memory_space<vmem>>, vector<1x7x16xf32>
    %156 = vector.shape_cast %155 : vector<1x7x16xf32> to vector<7x16xf32>
    %157 = tpu.concatenate %152, %154, %156 in 1 : vector<7x16xf32>, vector<7x16xf32>, vector<7x16xf32> -> vector<7x48xf32>
    %158 = vector.extract_strided_slice %157 {offsets = [0, 0], sizes = [5, 48], strides = [1, 1]} : vector<7x48xf32> to vector<5x48xf32>
    %159 = vector.extract_strided_slice %157 {offsets = [1, 0], sizes = [5, 48], strides = [1, 1]} : vector<7x48xf32> to vector<5x48xf32>
    %160 = vector.extract_strided_slice %157 {offsets = [2, 0], sizes = [5, 48], strides = [1, 1]} : vector<7x48xf32> to vector<5x48xf32>
    %161 = tpu.concatenate %158, %159, %160 in 1 : vector<5x48xf32>, vector<5x48xf32>, vector<5x48xf32> -> vector<5x144xf32>
    %162 = arith.truncf %161 : vector<5x144xf32> to vector<5x144xbf16>
    %cst_80 = arith.constant dense<0.000000e+00> : vector<5x32xf32>
    %163 = tpu.matmul %162, %36, %cst_80 {dimension_numbers = #tpu.dot_dimension_numbers<[1], [0], [0], [1], [0, 0, 1, 1], [], []>} : vector<5x144xbf16>, vector<144x32xbf16>, vector<5x32xf32> -> vector<5x32xf32>
    %164 = vector.broadcast %37 : vector<1x32xf32> to vector<5x32xf32>
    %165 = arith.addf %163, %164 : vector<5x32xf32>
    %cst_81 = arith.constant 0.000000e+00 : f32
    %166 = vector.broadcast %cst_81 : f32 to vector<5x32xf32>
    %167 = arith.maximumf %165, %166 : vector<5x32xf32>
    %168 = vector.extract_strided_slice %167 {offsets = [0, 0], sizes = [1, 32], strides = [1, 1]} : vector<5x32xf32> to vector<1x32xf32>
    %169 = vector.extract_strided_slice %167 {offsets = [1, 0], sizes = [1, 32], strides = [1, 1]} : vector<5x32xf32> to vector<1x32xf32>
    %170 = vector.extract_strided_slice %167 {offsets = [2, 0], sizes = [1, 32], strides = [1, 1]} : vector<5x32xf32> to vector<1x32xf32>
    %171 = vector.extract_strided_slice %167 {offsets = [3, 0], sizes = [1, 32], strides = [1, 1]} : vector<5x32xf32> to vector<1x32xf32>
    %172 = vector.extract_strided_slice %167 {offsets = [4, 0], sizes = [1, 32], strides = [1, 1]} : vector<5x32xf32> to vector<1x32xf32>
    %c8_82 = arith.constant 8 : index
    %c0_83 = arith.constant 0 : index
    %c0_84 = arith.constant 0 : index
    %173 = vector.load %arg17[%c8_82, %c0_83, %c0_84] : memref<14x7x16xf32, #tpu.memory_space<vmem>>, vector<1x7x16xf32>
    %174 = vector.shape_cast %173 : vector<1x7x16xf32> to vector<7x16xf32>
    %c9_85 = arith.constant 9 : index
    %c0_86 = arith.constant 0 : index
    %c0_87 = arith.constant 0 : index
    %175 = vector.load %arg17[%c9_85, %c0_86, %c0_87] : memref<14x7x16xf32, #tpu.memory_space<vmem>>, vector<1x7x16xf32>
    %176 = vector.shape_cast %175 : vector<1x7x16xf32> to vector<7x16xf32>
    %c10 = arith.constant 10 : index
    %c0_88 = arith.constant 0 : index
    %c0_89 = arith.constant 0 : index
    %177 = vector.load %arg17[%c10, %c0_88, %c0_89] : memref<14x7x16xf32, #tpu.memory_space<vmem>>, vector<1x7x16xf32>
    %178 = vector.shape_cast %177 : vector<1x7x16xf32> to vector<7x16xf32>
    %179 = tpu.concatenate %174, %176, %178 in 1 : vector<7x16xf32>, vector<7x16xf32>, vector<7x16xf32> -> vector<7x48xf32>
    %180 = vector.extract_strided_slice %179 {offsets = [0, 0], sizes = [5, 48], strides = [1, 1]} : vector<7x48xf32> to vector<5x48xf32>
    %181 = vector.extract_strided_slice %179 {offsets = [1, 0], sizes = [5, 48], strides = [1, 1]} : vector<7x48xf32> to vector<5x48xf32>
    %182 = vector.extract_strided_slice %179 {offsets = [2, 0], sizes = [5, 48], strides = [1, 1]} : vector<7x48xf32> to vector<5x48xf32>
    %183 = tpu.concatenate %180, %181, %182 in 1 : vector<5x48xf32>, vector<5x48xf32>, vector<5x48xf32> -> vector<5x144xf32>
    %184 = arith.truncf %183 : vector<5x144xf32> to vector<5x144xbf16>
    %cst_90 = arith.constant dense<0.000000e+00> : vector<5x32xf32>
    %185 = tpu.matmul %184, %36, %cst_90 {dimension_numbers = #tpu.dot_dimension_numbers<[1], [0], [0], [1], [0, 0, 1, 1], [], []>} : vector<5x144xbf16>, vector<144x32xbf16>, vector<5x32xf32> -> vector<5x32xf32>
    %186 = vector.broadcast %37 : vector<1x32xf32> to vector<5x32xf32>
    %187 = arith.addf %185, %186 : vector<5x32xf32>
    %cst_91 = arith.constant 0.000000e+00 : f32
    %188 = vector.broadcast %cst_91 : f32 to vector<5x32xf32>
    %189 = arith.maximumf %187, %188 : vector<5x32xf32>
    %190 = vector.extract_strided_slice %189 {offsets = [0, 0], sizes = [1, 32], strides = [1, 1]} : vector<5x32xf32> to vector<1x32xf32>
    %191 = vector.extract_strided_slice %189 {offsets = [1, 0], sizes = [1, 32], strides = [1, 1]} : vector<5x32xf32> to vector<1x32xf32>
    %192 = vector.extract_strided_slice %189 {offsets = [2, 0], sizes = [1, 32], strides = [1, 1]} : vector<5x32xf32> to vector<1x32xf32>
    %193 = vector.extract_strided_slice %189 {offsets = [3, 0], sizes = [1, 32], strides = [1, 1]} : vector<5x32xf32> to vector<1x32xf32>
    %194 = vector.extract_strided_slice %189 {offsets = [4, 0], sizes = [1, 32], strides = [1, 1]} : vector<5x32xf32> to vector<1x32xf32>
    %c9_92 = arith.constant 9 : index
    %c0_93 = arith.constant 0 : index
    %c0_94 = arith.constant 0 : index
    %195 = vector.load %arg17[%c9_92, %c0_93, %c0_94] : memref<14x7x16xf32, #tpu.memory_space<vmem>>, vector<1x7x16xf32>
    %196 = vector.shape_cast %195 : vector<1x7x16xf32> to vector<7x16xf32>
    %c10_95 = arith.constant 10 : index
    %c0_96 = arith.constant 0 : index
    %c0_97 = arith.constant 0 : index
    %197 = vector.load %arg17[%c10_95, %c0_96, %c0_97] : memref<14x7x16xf32, #tpu.memory_space<vmem>>, vector<1x7x16xf32>
    %198 = vector.shape_cast %197 : vector<1x7x16xf32> to vector<7x16xf32>
    %c11 = arith.constant 11 : index
    %c0_98 = arith.constant 0 : index
    %c0_99 = arith.constant 0 : index
    %199 = vector.load %arg17[%c11, %c0_98, %c0_99] : memref<14x7x16xf32, #tpu.memory_space<vmem>>, vector<1x7x16xf32>
    %200 = vector.shape_cast %199 : vector<1x7x16xf32> to vector<7x16xf32>
    %201 = tpu.concatenate %196, %198, %200 in 1 : vector<7x16xf32>, vector<7x16xf32>, vector<7x16xf32> -> vector<7x48xf32>
    %202 = vector.extract_strided_slice %201 {offsets = [0, 0], sizes = [5, 48], strides = [1, 1]} : vector<7x48xf32> to vector<5x48xf32>
    %203 = vector.extract_strided_slice %201 {offsets = [1, 0], sizes = [5, 48], strides = [1, 1]} : vector<7x48xf32> to vector<5x48xf32>
    %204 = vector.extract_strided_slice %201 {offsets = [2, 0], sizes = [5, 48], strides = [1, 1]} : vector<7x48xf32> to vector<5x48xf32>
    %205 = tpu.concatenate %202, %203, %204 in 1 : vector<5x48xf32>, vector<5x48xf32>, vector<5x48xf32> -> vector<5x144xf32>
    %206 = arith.truncf %205 : vector<5x144xf32> to vector<5x144xbf16>
    %cst_100 = arith.constant dense<0.000000e+00> : vector<5x32xf32>
    %207 = tpu.matmul %206, %36, %cst_100 {dimension_numbers = #tpu.dot_dimension_numbers<[1], [0], [0], [1], [0, 0, 1, 1], [], []>} : vector<5x144xbf16>, vector<144x32xbf16>, vector<5x32xf32> -> vector<5x32xf32>
    %208 = vector.broadcast %37 : vector<1x32xf32> to vector<5x32xf32>
    %209 = arith.addf %207, %208 : vector<5x32xf32>
    %cst_101 = arith.constant 0.000000e+00 : f32
    %210 = vector.broadcast %cst_101 : f32 to vector<5x32xf32>
    %211 = arith.maximumf %209, %210 : vector<5x32xf32>
    %212 = vector.extract_strided_slice %211 {offsets = [0, 0], sizes = [1, 32], strides = [1, 1]} : vector<5x32xf32> to vector<1x32xf32>
    %213 = vector.extract_strided_slice %211 {offsets = [1, 0], sizes = [1, 32], strides = [1, 1]} : vector<5x32xf32> to vector<1x32xf32>
    %214 = vector.extract_strided_slice %211 {offsets = [2, 0], sizes = [1, 32], strides = [1, 1]} : vector<5x32xf32> to vector<1x32xf32>
    %215 = vector.extract_strided_slice %211 {offsets = [3, 0], sizes = [1, 32], strides = [1, 1]} : vector<5x32xf32> to vector<1x32xf32>
    %216 = vector.extract_strided_slice %211 {offsets = [4, 0], sizes = [1, 32], strides = [1, 1]} : vector<5x32xf32> to vector<1x32xf32>
    %c10_102 = arith.constant 10 : index
    %c0_103 = arith.constant 0 : index
    %c0_104 = arith.constant 0 : index
    %217 = vector.load %arg17[%c10_102, %c0_103, %c0_104] : memref<14x7x16xf32, #tpu.memory_space<vmem>>, vector<1x7x16xf32>
    %218 = vector.shape_cast %217 : vector<1x7x16xf32> to vector<7x16xf32>
    %c11_105 = arith.constant 11 : index
    %c0_106 = arith.constant 0 : index
    %c0_107 = arith.constant 0 : index
    %219 = vector.load %arg17[%c11_105, %c0_106, %c0_107] : memref<14x7x16xf32, #tpu.memory_space<vmem>>, vector<1x7x16xf32>
    %220 = vector.shape_cast %219 : vector<1x7x16xf32> to vector<7x16xf32>
    %c12 = arith.constant 12 : index
    %c0_108 = arith.constant 0 : index
    %c0_109 = arith.constant 0 : index
    %221 = vector.load %arg17[%c12, %c0_108, %c0_109] : memref<14x7x16xf32, #tpu.memory_space<vmem>>, vector<1x7x16xf32>
    %222 = vector.shape_cast %221 : vector<1x7x16xf32> to vector<7x16xf32>
    %223 = tpu.concatenate %218, %220, %222 in 1 : vector<7x16xf32>, vector<7x16xf32>, vector<7x16xf32> -> vector<7x48xf32>
    %224 = vector.extract_strided_slice %223 {offsets = [0, 0], sizes = [5, 48], strides = [1, 1]} : vector<7x48xf32> to vector<5x48xf32>
    %225 = vector.extract_strided_slice %223 {offsets = [1, 0], sizes = [5, 48], strides = [1, 1]} : vector<7x48xf32> to vector<5x48xf32>
    %226 = vector.extract_strided_slice %223 {offsets = [2, 0], sizes = [5, 48], strides = [1, 1]} : vector<7x48xf32> to vector<5x48xf32>
    %227 = tpu.concatenate %224, %225, %226 in 1 : vector<5x48xf32>, vector<5x48xf32>, vector<5x48xf32> -> vector<5x144xf32>
    %228 = arith.truncf %227 : vector<5x144xf32> to vector<5x144xbf16>
    %cst_110 = arith.constant dense<0.000000e+00> : vector<5x32xf32>
    %229 = tpu.matmul %228, %36, %cst_110 {dimension_numbers = #tpu.dot_dimension_numbers<[1], [0], [0], [1], [0, 0, 1, 1], [], []>} : vector<5x144xbf16>, vector<144x32xbf16>, vector<5x32xf32> -> vector<5x32xf32>
    %230 = vector.broadcast %37 : vector<1x32xf32> to vector<5x32xf32>
    %231 = arith.addf %229, %230 : vector<5x32xf32>
    %cst_111 = arith.constant 0.000000e+00 : f32
    %232 = vector.broadcast %cst_111 : f32 to vector<5x32xf32>
    %233 = arith.maximumf %231, %232 : vector<5x32xf32>
    %234 = vector.extract_strided_slice %233 {offsets = [0, 0], sizes = [1, 32], strides = [1, 1]} : vector<5x32xf32> to vector<1x32xf32>
    %235 = vector.extract_strided_slice %233 {offsets = [1, 0], sizes = [1, 32], strides = [1, 1]} : vector<5x32xf32> to vector<1x32xf32>
    %236 = vector.extract_strided_slice %233 {offsets = [2, 0], sizes = [1, 32], strides = [1, 1]} : vector<5x32xf32> to vector<1x32xf32>
    %237 = vector.extract_strided_slice %233 {offsets = [3, 0], sizes = [1, 32], strides = [1, 1]} : vector<5x32xf32> to vector<1x32xf32>
    %238 = vector.extract_strided_slice %233 {offsets = [4, 0], sizes = [1, 32], strides = [1, 1]} : vector<5x32xf32> to vector<1x32xf32>
    %c11_112 = arith.constant 11 : index
    %c0_113 = arith.constant 0 : index
    %c0_114 = arith.constant 0 : index
    %239 = vector.load %arg17[%c11_112, %c0_113, %c0_114] : memref<14x7x16xf32, #tpu.memory_space<vmem>>, vector<1x7x16xf32>
    %240 = vector.shape_cast %239 : vector<1x7x16xf32> to vector<7x16xf32>
    %c12_115 = arith.constant 12 : index
    %c0_116 = arith.constant 0 : index
    %c0_117 = arith.constant 0 : index
    %241 = vector.load %arg17[%c12_115, %c0_116, %c0_117] : memref<14x7x16xf32, #tpu.memory_space<vmem>>, vector<1x7x16xf32>
    %242 = vector.shape_cast %241 : vector<1x7x16xf32> to vector<7x16xf32>
    %c13 = arith.constant 13 : index
    %c0_118 = arith.constant 0 : index
    %c0_119 = arith.constant 0 : index
    %243 = vector.load %arg17[%c13, %c0_118, %c0_119] : memref<14x7x16xf32, #tpu.memory_space<vmem>>, vector<1x7x16xf32>
    %244 = vector.shape_cast %243 : vector<1x7x16xf32> to vector<7x16xf32>
    %245 = tpu.concatenate %240, %242, %244 in 1 : vector<7x16xf32>, vector<7x16xf32>, vector<7x16xf32> -> vector<7x48xf32>
    %246 = vector.extract_strided_slice %245 {offsets = [0, 0], sizes = [5, 48], strides = [1, 1]} : vector<7x48xf32> to vector<5x48xf32>
    %247 = vector.extract_strided_slice %245 {offsets = [1, 0], sizes = [5, 48], strides = [1, 1]} : vector<7x48xf32> to vector<5x48xf32>
    %248 = vector.extract_strided_slice %245 {offsets = [2, 0], sizes = [5, 48], strides = [1, 1]} : vector<7x48xf32> to vector<5x48xf32>
    %249 = tpu.concatenate %246, %247, %248 in 1 : vector<5x48xf32>, vector<5x48xf32>, vector<5x48xf32> -> vector<5x144xf32>
    %250 = arith.truncf %249 : vector<5x144xf32> to vector<5x144xbf16>
    %cst_120 = arith.constant dense<0.000000e+00> : vector<5x32xf32>
    %251 = tpu.matmul %250, %36, %cst_120 {dimension_numbers = #tpu.dot_dimension_numbers<[1], [0], [0], [1], [0, 0, 1, 1], [], []>} : vector<5x144xbf16>, vector<144x32xbf16>, vector<5x32xf32> -> vector<5x32xf32>
    %252 = vector.broadcast %37 : vector<1x32xf32> to vector<5x32xf32>
    %253 = arith.addf %251, %252 : vector<5x32xf32>
    %cst_121 = arith.constant 0.000000e+00 : f32
    %254 = vector.broadcast %cst_121 : f32 to vector<5x32xf32>
    %255 = arith.maximumf %253, %254 : vector<5x32xf32>
    %256 = vector.extract_strided_slice %255 {offsets = [0, 0], sizes = [1, 32], strides = [1, 1]} : vector<5x32xf32> to vector<1x32xf32>
    %257 = vector.extract_strided_slice %255 {offsets = [1, 0], sizes = [1, 32], strides = [1, 1]} : vector<5x32xf32> to vector<1x32xf32>
    %258 = vector.extract_strided_slice %255 {offsets = [2, 0], sizes = [1, 32], strides = [1, 1]} : vector<5x32xf32> to vector<1x32xf32>
    %259 = vector.extract_strided_slice %255 {offsets = [3, 0], sizes = [1, 32], strides = [1, 1]} : vector<5x32xf32> to vector<1x32xf32>
    %260 = vector.extract_strided_slice %255 {offsets = [4, 0], sizes = [1, 32], strides = [1, 1]} : vector<5x32xf32> to vector<1x32xf32>
    %261 = tpu.concatenate %168, %169, %170, %171, %172, %190, %191, %192, %193, %194, %212, %213, %214, %215, %216, %234 in 1 : vector<1x32xf32>, vector<1x32xf32>, vector<1x32xf32>, vector<1x32xf32>, vector<1x32xf32>, vector<1x32xf32>, vector<1x32xf32>, vector<1x32xf32>, vector<1x32xf32>, vector<1x32xf32>, vector<1x32xf32>, vector<1x32xf32>, vector<1x32xf32>, vector<1x32xf32>, vector<1x32xf32>, vector<1x32xf32> -> vector<1x512xf32>
    %262 = tpu.concatenate %235, %236, %237, %238, %256, %257, %258, %259, %260 in 1 : vector<1x32xf32>, vector<1x32xf32>, vector<1x32xf32>, vector<1x32xf32>, vector<1x32xf32>, vector<1x32xf32>, vector<1x32xf32>, vector<1x32xf32>, vector<1x32xf32> -> vector<1x288xf32>
    %263 = tpu.concatenate %261, %262 in 1 : vector<1x512xf32>, vector<1x288xf32> -> vector<1x800xf32>
    %264 = tpu.concatenate %150, %263 in 0 : vector<1x800xf32>, vector<1x800xf32> -> vector<2x800xf32>
    %265 = arith.truncf %264 : vector<2x800xf32> to vector<2x800xbf16>
    %c0_122 = arith.constant 0 : index
    %c0_123 = arith.constant 0 : index
    %266 = vector.load %arg7[%c0_122, %c0_123] : memref<800x150xbf16, #tpu.memory_space<vmem>>, vector<800x150xbf16>
    %cst_124 = arith.constant dense<0.000000e+00> : vector<2x150xf32>
    %267 = tpu.matmul %265, %266, %cst_124 {dimension_numbers = #tpu.dot_dimension_numbers<[1], [0], [0], [1], [0, 0, 1, 1], [], []>} : vector<2x800xbf16>, vector<800x150xbf16>, vector<2x150xf32> -> vector<2x150xf32>
    %c0_125 = arith.constant 0 : index
    %c0_126 = arith.constant 0 : index
    %268 = vector.load %arg8[%c0_125, %c0_126] : memref<1x150xf32, #tpu.memory_space<vmem>>, vector<1x150xf32>
    %269 = vector.broadcast %268 : vector<1x150xf32> to vector<2x150xf32>
    %270 = arith.addf %267, %269 : vector<2x150xf32>
    %cst_127 = arith.constant 0.000000e+00 : f32
    %271 = vector.broadcast %cst_127 : f32 to vector<2x150xf32>
    %272 = arith.maximumf %270, %271 : vector<2x150xf32>
    %273 = arith.truncf %272 : vector<2x150xf32> to vector<2x150xbf16>
    %c0_128 = arith.constant 0 : index
    %c0_129 = arith.constant 0 : index
    %274 = vector.load %arg9[%c0_128, %c0_129] : memref<150x90xbf16, #tpu.memory_space<vmem>>, vector<150x90xbf16>
    %cst_130 = arith.constant dense<0.000000e+00> : vector<2x90xf32>
    %275 = tpu.matmul %273, %274, %cst_130 {dimension_numbers = #tpu.dot_dimension_numbers<[1], [0], [0], [1], [0, 0, 1, 1], [], []>} : vector<2x150xbf16>, vector<150x90xbf16>, vector<2x90xf32> -> vector<2x90xf32>
    %c0_131 = arith.constant 0 : index
    %c0_132 = arith.constant 0 : index
    %276 = vector.load %arg10[%c0_131, %c0_132] : memref<1x90xf32, #tpu.memory_space<vmem>>, vector<1x90xf32>
    %277 = vector.broadcast %276 : vector<1x90xf32> to vector<2x90xf32>
    %278 = arith.addf %275, %277 : vector<2x90xf32>
    %cst_133 = arith.constant 0.000000e+00 : f32
    %279 = vector.broadcast %cst_133 : f32 to vector<2x90xf32>
    %280 = arith.minimumf %278, %279 : vector<2x90xf32>
    %281 = math.absf %278 : vector<2x90xf32>
    %cst_134 = arith.constant 0.000000e+00 : f32
    %282 = vector.broadcast %cst_134 : f32 to vector<2x90xf32>
    %283 = arith.subf %282, %281 : vector<2x90xf32>
    %284 = math.exp %283 : vector<2x90xf32>
    %cst_135 = arith.constant 1.000000e+00 : f32
    %285 = vector.broadcast %cst_135 : f32 to vector<2x90xf32>
    %286 = arith.addf %285, %284 : vector<2x90xf32>
    %287 = math.log %286 : vector<2x90xf32>
    %288 = arith.subf %280, %287 : vector<2x90xf32>
    %289 = arith.truncf %288 : vector<2x90xf32> to vector<2x90xbf16>
    %c0_136 = arith.constant 0 : index
    %c0_137 = arith.constant 0 : index
    %290 = vector.load %arg11[%c0_136, %c0_137] : memref<90x10xbf16, #tpu.memory_space<vmem>>, vector<90x10xbf16>
    %cst_138 = arith.constant dense<0.000000e+00> : vector<2x10xf32>
    %291 = tpu.matmul %289, %290, %cst_138 {dimension_numbers = #tpu.dot_dimension_numbers<[1], [0], [0], [1], [0, 0, 1, 1], [], []>} : vector<2x90xbf16>, vector<90x10xbf16>, vector<2x10xf32> -> vector<2x10xf32>
    %c0_139 = arith.constant 0 : index
    %c0_140 = arith.constant 0 : index
    %292 = vector.load %arg12[%c0_139, %c0_140] : memref<1x10xf32, #tpu.memory_space<vmem>>, vector<1x10xf32>
    %293 = vector.broadcast %292 : vector<1x10xf32> to vector<2x10xf32>
    %294 = arith.addf %291, %293 : vector<2x10xf32>
    %c0_141 = arith.constant 0 : index
    %c0_142 = arith.constant 0 : index
    %295 = vector.load %arg13[%c0_141, %c0_142] : memref<2x10xf32, #tpu.memory_space<vmem>>, vector<2x10xf32>
    tpu.vector_store %arg13[%c0_141, %c0_142], %294 {strides = array<i32>} : memref<2x10xf32, #tpu.memory_space<vmem>>, vector<2x10xf32>,
    return
  }
}

</mosaic_0001>

<llo_original>
// kernel: net_forward.1
$region0: #{net_forward.1}
  #allocation0 [shape = 'u32[]', space=smem, size = 0x4, offset = 0x4, fixed_abs, tag = 'smem constant byte address 0x4 - core index']
  #allocation1 [shape = 'u32[144,128]{1,0:T(1,128)}', space=vmem, size = 0x12000, scoped, tag = 'internal scratch']
  #allocation2 [shape = 'f32[64,32,6]{2,1,0:T(8,128)}', space=vmem, size = 0x100000, scoped, tag = 'scratch operand']
  #allocation3 [shape = 'f32[32,16,6]{2,1,0:T(8,128)}', space=vmem, size = 0x40000, scoped, tag = 'scratch operand']
  #allocation4 [shape = 'f32[28,14,16]{2,1,0:T(8,128)}', space=vmem, size = 0x38000, scoped, tag = 'scratch operand']
  #allocation5 [shape = 'f32[14,7,16]{2,1,0:T(8,128)}', space=vmem, size = 0xe000, scoped, tag = 'scratch operand']
  %s0 = inlined_call_operand.vmem [shape: f32[72,36,3], index: 0, kind: input, shape index: {}]
  %s1 = inlined_call_operand.vmem [shape: bf16[75,6], index: 1, kind: input, shape index: {}]
  %s2 = inlined_call_operand.vmem [shape: f32[1,6], index: 2, kind: input, shape index: {}]
  %s3 = inlined_call_operand.vmem [shape: bf16[54,16], index: 3, kind: input, shape index: {}]
  %s4 = inlined_call_operand.vmem [shape: f32[1,16], index: 4, kind: input, shape index: {}]
  %s5 = inlined_call_operand.vmem [shape: bf16[144,32], index: 5, kind: input, shape index: {}]
  %s6 = inlined_call_operand.vmem [shape: f32[1,32], index: 6, kind: input, shape index: {}]
  %s7 = inlined_call_operand.vmem [shape: bf16[800,150], index: 7, kind: input, shape index: {}]
  %s8 = inlined_call_operand.vmem [shape: f32[1,150], index: 8, kind: input, shape index: {}]
  %s9 = inlined_call_operand.vmem [shape: bf16[150,90], index: 9, kind: input, shape index: {}]
  %s10 = inlined_call_operand.vmem [shape: f32[1,90], index: 10, kind: input, shape index: {}]
  %s11 = inlined_call_operand.vmem [shape: bf16[90,10], index: 11, kind: input, shape index: {}]
  %s12 = inlined_call_operand.vmem [shape: f32[1,10], index: 12, kind: input, shape index: {}]
  %s13 = inlined_call_operand.hbm [shape: f32[2,10], index: 13, kind: output, shape index: {}]
  %s14 = sld [smem:[#allocation0]]
  $region90: #{net_forward.1} parent=0
    _
  %s16 = ssub.s32 1, %s14
  %s17 = scalar_select 0, %s16, %s14
  $region1: #{net_forward.1} parent=0
    #allocation6 [shape = 'u8[1024]{0}', space=vmem, size = 0x400, scoped, tag = 'output window, operand 0, single buffered']
    #allocation7 [shape = 's32[1]{0}', space=sflag, size = 0x4, scoped, tag = 'scoped memory for net_forward.1']
    %18 = vsyncpa [#allocation7], 0
    // Predicated region
    $region2: #{net_forward.1} parent=1 // pred_check
      _
    $region3: #{net_forward.1} parent=1 // pred_check_branch
      %20 = sbr.rel (0) target = $region5
    $region4: #{net_forward.1} parent=1 // pred_region
      _
    $region5: #{net_forward.1} parent=1 // pred_fallthru
      _
    // Predicated region
    $region6: #{net_forward.1} parent=1 // pred_check
      _
    $region7: #{net_forward.1} parent=1 // pred_check_branch
      %22 = sbr.rel (0) target = $region9
    $region8: #{net_forward.1} parent=1 // pred_region
      _
    $region9: #{net_forward.1} parent=1 // pred_fallthru
      _
    // Predicated region
    $region10: #{net_forward.1} parent=1 // pred_check
      _
    $region11: #{net_forward.1} parent=1 // pred_check_branch
      %24 = sbr.rel (0) target = $region13
    $region12: #{net_forward.1} parent=1 // pred_region
      _
    $region13: #{net_forward.1} parent=1 // pred_fallthru
      _
    // Predicated region
    $region14: #{net_forward.1} parent=1 // pred_check
      _
    $region15: #{net_forward.1} parent=1 // pred_check_branch
      %26 = sbr.rel (0) target = $region17
    $region16: #{net_forward.1} parent=1 // pred_region
      _
    $region17: #{net_forward.1} parent=1 // pred_fallthru
      _
    // Predicated region
    $region18: #{net_forward.1} parent=1 // pred_check
      _
    $region19: #{net_forward.1} parent=1 // pred_check_branch
      %28 = sbr.rel (0) target = $region21
    $region20: #{net_forward.1} parent=1 // pred_region
      _
    $region21: #{net_forward.1} parent=1 // pred_fallthru
      _
    // Predicated region
    $region22: #{net_forward.1} parent=1 // pred_check
      _
    $region23: #{net_forward.1} parent=1 // pred_check_branch
      %30 = sbr.rel (0) target = $region25
    $region24: #{net_forward.1} parent=1 // pred_region
      _
    $region25: #{net_forward.1} parent=1 // pred_fallthru
      _
    // Predicated region
    $region26: #{net_forward.1} parent=1 // pred_check
      _
    $region27: #{net_forward.1} parent=1 // pred_check_branch
      %32 = sbr.rel (0) target = $region29
    $region28: #{net_forward.1} parent=1 // pred_region
      _
    $region29: #{net_forward.1} parent=1 // pred_fallthru
      _
    // Predicated region
    $region30: #{net_forward.1} parent=1 // pred_check
      _
    $region31: #{net_forward.1} parent=1 // pred_check_branch
      %34 = sbr.rel (0) target = $region33
    $region32: #{net_forward.1} parent=1 // pred_region
      _
    $region33: #{net_forward.1} parent=1 // pred_fallthru
      _
    // Predicated region
    $region34: #{net_forward.1} parent=1 // pred_check
      _
    $region35: #{net_forward.1} parent=1 // pred_check_branch
      %36 = sbr.rel (0) target = $region37
    $region36: #{net_forward.1} parent=1 // pred_region
      _
    $region37: #{net_forward.1} parent=1 // pred_fallthru
      _
    // Predicated region
    $region38: #{net_forward.1} parent=1 // pred_check
      _
    $region39: #{net_forward.1} parent=1 // pred_check_branch
      %38 = sbr.rel (0) target = $region41
    $region40: #{net_forward.1} parent=1 // pred_region
      _
    $region41: #{net_forward.1} parent=1 // pred_fallthru
      _
    // Predicated region
    $region42: #{net_forward.1} parent=1 // pred_check
      _
    $region43: #{net_forward.1} parent=1 // pred_check_branch
      %40 = sbr.rel (0) target = $region45
    $region44: #{net_forward.1} parent=1 // pred_region
      _
    $region45: #{net_forward.1} parent=1 // pred_fallthru
      _
    // Predicated region
    $region46: #{net_forward.1} parent=1 // pred_check
      _
    $region47: #{net_forward.1} parent=1 // pred_check_branch
      %42 = sbr.rel (0) target = $region49
    $region48: #{net_forward.1} parent=1 // pred_region
      _
    $region49: #{net_forward.1} parent=1 // pred_fallthru
      _
    // Predicated region
    $region50: #{net_forward.1} parent=1 // pred_check
      _
    $region51: #{net_forward.1} parent=1 // pred_check_branch
      %44 = sbr.rel (0) target = $region53
    $region52: #{net_forward.1} parent=1 // pred_region
      _
    $region53: #{net_forward.1} parent=1 // pred_fallthru
      _
    %v46 = vld [vmem:[%s1] sm:$0xf]
    %v47 = vld [vmem:[%s1 + $0x4] sm:$0xf]
    %v48 = vld [vmem:[%s1 + $0x8] sm:$0xf]
    %v49 = vld [vmem:[%s1 + $0xc] sm:$0xf]
    %v50 = vld [vmem:[%s1 + $0x10] sm:$0xf]
    %v51 = vld [vmem:[%s1 + $0x14] sm:$0xf]
    %v52 = vld [vmem:[%s1 + $0x18] sm:$0xf]
    %v53 = vld [vmem:[%s1 + $0x1c] sm:$0xf]
    %v54 = vld [vmem:[%s1 + $0x20] sm:$0xf]
    %v55 = vld [vmem:[%s1 + $0x24] sm:$0x3]
    %v56 = vld [vmem:[%s2] sm:$0x1]
    loop: start=0, step=1, limit=32
    $region54: #{net_forward.1} parent=1 // loop_pre_header
      _
    $region55: #{net_forward.1} parent=1 // loop_header
      %s58 = sphi 0, %s62
      %p59 = scmp.ge.s32.totalorder %s58, 32
    $region56: #{net_forward.1} parent=1 // loop_header_branch
      %61 = sbr.rel (%p59) target = $region60
    $region57: #{net_forward.1} parent=1 // loop_body
      %s63 = smul.u32 %s58, 40
      %s64 = scalar_lea.vmem %s0, %s63
      %v65 = vld [vmem:[%s64] sm:$0xff]
      %v66 = vld [vmem:[%s64 + $0x8] sm:$0xff]
      %v67 = vld [vmem:[%s64 + $0x10] sm:$0xff]
      %v68 = vld [vmem:[%s64 + $0x18] sm:$0xff]
      %v69 = vld [vmem:[%s64 + $0x20] sm:$0xf]
      %s70 = sadd.s32 %s58, 1
      %s71 = smul.u32 %s70, 40
      %s72 = scalar_lea.vmem %s0, %s71
      %v73 = vld [vmem:[%s72] sm:$0xff]
      %v74 = vld [vmem:[%s72 + $0x8] sm:$0xff]
      %v75 = vld [vmem:[%s72 + $0x10] sm:$0xff]
      %v76 = vld [vmem:[%s72 + $0x18] sm:$0xff]
      %v77 = vld [vmem:[%s72 + $0x20] sm:$0xf]
      %s78 = sadd.s32 %s58, 2
      %s79 = smul.u32 %s78, 40
      %s80 = scalar_lea.vmem %s0, %s79
      %v81 = vld [vmem:[%s80] sm:$0xff]
      %v82 = vld [vmem:[%s80 + $0x8] sm:$0xff]
      %v83 = vld [vmem:[%s80 + $0x10] sm:$0xff]
      %v84 = vld [vmem:[%s80 + $0x18] sm:$0xff]
      %v85 = vld [vmem:[%s80 + $0x20] sm:$0xf]
      %s86 = sadd.s32 %s58, 3
      %s87 = smul.u32 %s86, 40
      %s88 = scalar_lea.vmem %s0, %s87
      %v89 = vld [vmem:[%s88] sm:$0xff]
      %v90 = vld [vmem:[%s88 + $0x8] sm:$0xff]
      %v91 = vld [vmem:[%s88 + $0x10] sm:$0xff]
      %v92 = vld [vmem:[%s88 + $0x18] sm:$0xff]
      %v93 = vld [vmem:[%s88 + $0x20] sm:$0xf]
      %s94 = sadd.s32 %s58, 4
      %s95 = smul.u32 %s94, 40
      %s96 = scalar_lea.vmem %s0, %s95
      %v97 = vld [vmem:[%s96] sm:$0xff]
      %v98 = vld [vmem:[%s96 + $0x8] sm:$0xff]
      %v99 = vld [vmem:[%s96 + $0x10] sm:$0xff]
      %v100 = vld [vmem:[%s96 + $0x18] sm:$0xff]
      %v101 = vld [vmem:[%s96 + $0x20] sm:$0xf]
      %107 = vrot.lane.b32.xlu0 %v73, 3
      %v108 = vpop.permute.xlu0 %107
      %109 = vrot.lane.b32.xlu0 %v74, 3
      %v110 = vpop.permute.xlu0 %109
      %111 = vrot.lane.b32.xlu0 %v75, 3
      %v112 = vpop.permute.xlu0 %111
      %113 = vrot.lane.b32.xlu0 %v76, 3
      %v114 = vpop.permute.xlu0 %113
      %115 = vrot.lane.b32.xlu0 %v77, 3
      %v116 = vpop.permute.xlu0 %115
      %127 = vrot.lane.b32.xlu0 %v81, 6
      %v128 = vpop.permute.xlu0 %127
      %129 = vrot.lane.b32.xlu0 %v82, 6
      %v130 = vpop.permute.xlu0 %129
      %131 = vrot.lane.b32.xlu0 %v83, 6
      %v132 = vpop.permute.xlu0 %131
      %133 = vrot.lane.b32.xlu0 %v84, 6
      %v134 = vpop.permute.xlu0 %133
      %135 = vrot.lane.b32.xlu0 %v85, 6
      %v136 = vpop.permute.xlu0 %135
      %147 = vrot.lane.b32.xlu0 %v89, 9
      %v148 = vpop.permute.xlu0 %147
      %149 = vrot.lane.b32.xlu0 %v90, 9
      %v150 = vpop.permute.xlu0 %149
      %151 = vrot.lane.b32.xlu0 %v91, 9
      %v152 = vpop.permute.xlu0 %151
      %153 = vrot.lane.b32.xlu0 %v92, 9
      %v154 = vpop.permute.xlu0 %153
      %155 = vrot.lane.b32.xlu0 %v93, 9
      %v156 = vpop.permute.xlu0 %155
      %167 = vrot.lane.b32.xlu0 %v97, 12
      %v168 = vpop.permute.xlu0 %167
      %169 = vrot.lane.b32.xlu0 %v98, 12
      %v170 = vpop.permute.xlu0 %169
      %171 = vrot.lane.b32.xlu0 %v99, 12
      %v172 = vpop.permute.xlu0 %171
      %173 = vrot.lane.b32.xlu0 %v100, 12
      %v174 = vpop.permute.xlu0 %173
      %175 = vrot.lane.b32.xlu0 %v101, 12
      %v176 = vpop.permute.xlu0 %175
      %vm182 = vcmask 23552
      %v183 = vsel %vm182, %v65, %v108
      %v184 = vsel %vm182, %v66, %v110
      %v185 = vsel %vm182, %v67, %v112
      %v186 = vsel %vm182, %v68, %v114
      %v187 = vsel %vm182, %v69, %v116
      %vm188 = vcmask 48128
      %v189 = vsel %vm188, %v183, %v128
      %v190 = vsel %vm188, %v184, %v130
      %v191 = vsel %vm188, %v185, %v132
      %v192 = vsel %vm188, %v186, %v134
      %v193 = vsel %vm188, %v187, %v136
      %vm194 = vcmask 72704
      %v195 = vsel %vm194, %v189, %v148
      %v196 = vsel %vm194, %v190, %v150
      %v197 = vsel %vm194, %v191, %v152
      %v198 = vsel %vm194, %v192, %v154
      %v199 = vsel %vm194, %v193, %v156
      %vm200 = vcmask 97280
      %v201 = vsel %vm200, %v195, %v168
      %v202 = vsel %vm200, %v196, %v170
      %v203 = vsel %vm200, %v197, %v172
      %v204 = vsel %vm200, %v198, %v174
      %v205 = vsel %vm200, %v199, %v176
      %vm211 = vcmask 1046528
      %v212 = vrot.slane %v201, 1
      %v213 = vrot.slane %v202, 1
      %v214 = vsel %vm211, %v212, %v213
      %v215 = vrot.slane %v203, 1
      %v216 = vsel %vm211, %v213, %v215
      %v217 = vrot.slane %v204, 1
      %v218 = vsel %vm211, %v215, %v217
      %v219 = vrot.slane %v205, 1
      %v220 = vsel %vm211, %v217, %v219
      %221 = vrot.lane.b32.xlu0 %v214, 15
      %v222 = vpop.permute.xlu0 %221
      %223 = vrot.lane.b32.xlu0 %v216, 15
      %v224 = vpop.permute.xlu0 %223
      %225 = vrot.lane.b32.xlu0 %v218, 15
      %v226 = vpop.permute.xlu0 %225
      %227 = vrot.lane.b32.xlu0 %v220, 15
      %v228 = vpop.permute.xlu0 %227
      %vm233 = vcmask 1045504
      %v234 = vrot.slane %v201, 2
      %v235 = vrot.slane %v202, 2
      %v236 = vsel %vm233, %v234, %v235
      %v237 = vrot.slane %v203, 2
      %v238 = vsel %vm233, %v235, %v237
      %v239 = vrot.slane %v204, 2
      %v240 = vsel %vm233, %v237, %v239
      %v241 = vrot.slane %v205, 2
      %v242 = vsel %vm233, %v239, %v241
      %243 = vrot.lane.b32.xlu0 %v236, 30
      %v244 = vpop.permute.xlu0 %243
      %245 = vrot.lane.b32.xlu0 %v238, 30
      %v246 = vpop.permute.xlu0 %245
      %247 = vrot.lane.b32.xlu0 %v240, 30
      %v248 = vpop.permute.xlu0 %247
      %249 = vrot.lane.b32.xlu0 %v242, 30
      %v250 = vpop.permute.xlu0 %249
      %vm255 = vcmask 1044480
      %v256 = vrot.slane %v201, 3
      %v257 = vrot.slane %v202, 3
      %v258 = vsel %vm255, %v256, %v257
      %v259 = vrot.slane %v203, 3
      %v260 = vsel %vm255, %v257, %v259
      %v261 = vrot.slane %v204, 3
      %v262 = vsel %vm255, %v259, %v261
      %v263 = vrot.slane %v205, 3
      %v264 = vsel %vm255, %v261, %v263
      %265 = vrot.lane.b32.xlu0 %v258, 45
      %v266 = vpop.permute.xlu0 %265
      %267 = vrot.lane.b32.xlu0 %v260, 45
      %v268 = vpop.permute.xlu0 %267
      %269 = vrot.lane.b32.xlu0 %v262, 45
      %v270 = vpop.permute.xlu0 %269
      %271 = vrot.lane.b32.xlu0 %v264, 45
      %v272 = vpop.permute.xlu0 %271
      %vm277 = vcmask 1043456
      %v278 = vrot.slane %v201, 4
      %v279 = vrot.slane %v202, 4
      %v280 = vsel %vm277, %v278, %v279
      %v281 = vrot.slane %v203, 4
      %v282 = vsel %vm277, %v279, %v281
      %v283 = vrot.slane %v204, 4
      %v284 = vsel %vm277, %v281, %v283
      %v285 = vrot.slane %v205, 4
      %v286 = vsel %vm277, %v283, %v285
      %287 = vrot.lane.b32.xlu0 %v280, 60
      %v288 = vpop.permute.xlu0 %287
      %289 = vrot.lane.b32.xlu0 %v282, 60
      %v290 = vpop.permute.xlu0 %289
      %291 = vrot.lane.b32.xlu0 %v284, 60
      %v292 = vpop.permute.xlu0 %291
      %293 = vrot.lane.b32.xlu0 %v286, 60
      %v294 = vpop.permute.xlu0 %293
      %vm299 = vcmask 121856
      %v300 = vsel %vm299, %v201, %v222
      %v301 = vsel %vm299, %v202, %v224
      %v302 = vsel %vm299, %v203, %v226
      %v303 = vsel %vm299, %v204, %v228
      %vm304 = vcmask 244736
      %v305 = vsel %vm304, %v300, %v244
      %v306 = vsel %vm304, %v301, %v246
      %v307 = vsel %vm304, %v302, %v248
      %v308 = vsel %vm304, %v303, %v250
      %vm309 = vcmask 367616
      %v310 = vsel %vm309, %v305, %v266
      %v311 = vsel %vm309, %v306, %v268
      %v312 = vsel %vm309, %v307, %v270
      %v313 = vsel %vm309, %v308, %v272
      %vm314 = vcmask 490496
      %v315 = vsel %vm314, %v310, %v288
      %v316 = vsel %vm314, %v311, %v290
      %v317 = vsel %vm314, %v312, %v292
      %v318 = vsel %vm314, %v313, %v294
      %v319 = vpack.c.bf16 %v316, %v315
      %v320 = vpack.c.bf16 %v318, %v317
      %v322 = vlaneseq
      %v323 = vshrl.u32 %v322, 7
      %v324 = vsub.s32 0, %v323
      %v325 = vrot.slane %v56, %v324
      %v337 = vunpack.c.l.b16 %v46
      %v338 = vunpack.c.l.b16 %v47
      %v339 = vunpack.c.l.b16 %v48
      %v340 = vunpack.c.l.b16 %v49
      %v341 = vunpack.c.l.b16 %v50
      %v342 = vunpack.c.l.b16 %v51
      %v343 = vunpack.c.l.b16 %v52
      %v344 = vunpack.c.l.b16 %v53
      %v345 = vunpack.c.l.b16 %v54
      %v346 = vunpack.c.l.b16 %v55
      %v347 = vpack.c.b16 %v338, %v337
      %v348 = vpack.c.b16 %v340, %v339
      %v349 = vpack.c.b16 %v342, %v341
      %v350 = vpack.c.b16 %v344, %v343
      %v351 = vpack.c.b16 %v346, %v345
      %vm356 = vcmask 613376
      %v358 = vsel %vm356, %v319, 0
      %v361 = vsel %vm356, %v320, 0
      %v363 = vsel %vm255, 4294967295, 65535
      %v364 = vsel %vm233, %v363, 0
      %v366 = vand.u32 %v351, %v364
      %368 = vmatprep.subr.bf16.mxu0 0
      %369 = vmatpush1.bf16.msra.mxu0 0
      %370 = vmatprep.subr.bf16.mxu0 0
      %371 = vmatpush1.bf16.msra.mxu0 0
      %372 = vmatprep.subr.bf16.mxu0 0
      %373 = vmatpush1.bf16.msra.mxu0 0
      %374 = vmatprep.subr.bf16.mxu0 0
      %375 = vmatpush1.bf16.msra.mxu0 %v366
      %376 = vmatprep.subr.bf16.mxu0 0
      %377 = vmatpush1.bf16.msra.mxu0 %v350
      %378 = vmatprep.subr.bf16.mxu0 0
      %379 = vmatpush1.bf16.msra.mxu0 %v349
      %380 = vmatprep.subr.bf16.mxu0 0
      %381 = vmatpush1.bf16.msra.mxu0 %v348
      %382 = vmatprep.subr.bf16.mxu0 0
      %383 = vmatpush1.bf16.msra.mxu0 %v347
      %384 = vmatprep.subr.bf16.mxu0 0
      %385 = vmatpush2.bf16.msra.mxu0 0
      %386 = vmatprep.subr.bf16.mxu0 0
      %387 = vmatpush2.bf16.msra.mxu0 0
      %388 = vmatprep.subr.bf16.mxu0 0
      %389 = vmatpush2.bf16.msra.mxu0 0
      %390 = vmatprep.subr.bf16.mxu0 0
      %391 = vmatpush2.bf16.msra.mxu0 0
      %392 = vmatprep.subr.bf16.mxu0 0
      %393 = vmatpush2.bf16.msra.mxu0 0
      %394 = vmatprep.subr.bf16.mxu0 0
      %395 = vmatpush2.bf16.msra.mxu0 0
      %396 = vmatprep.subr.bf16.mxu0 0
      %397 = vmatpush2.bf16.msra.mxu0 0
      %398 = vmatprep.subr.bf16.mxu0 0
      %399 = vmatpush2.bf16.msra.mxu0 0
      %400 = vmatprep.mubr.bf16.mxu0 0
      %401 = vmatmul.mubr.bf16.gmra.mxu0 %v358
      %v402 = vpop.f32.mrf.mxu0
      %v403 = vadd.f32 %v325, %v402
      %v404 = vpop.f32.mrf.mxu0
      %v405 = vpop.f32.mrf.mxu0
      %v406 = vadd.f32 %v325, %v405
      %v407 = vpop.f32.mrf.mxu0
      %408 = vmatprep.mubr.bf16.mxu0 0
      %409 = vmatmul.mubr.bf16.gmra.mxu0 %v361
      %v410 = vpop.f32.mrf.mxu0
      %v411 = vadd.f32 %v325, %v410
      %v412 = vpop.f32.mrf.mxu0
      %v413 = vpop.f32.mrf.mxu0
      %v414 = vadd.f32 %v325, %v413
      %v415 = vpop.f32.mrf.mxu0
      %416 = vdwg.mxu0
      %v417 = vmax.f32 %v403, 0.0
      %v418 = vmax.f32 %v406, 0.0
      %v419 = vmax.f32 %v411, 0.0
      %v420 = vmax.f32 %v414, 0.0
      %s421 = smul.u32 %s58, 32
      %s422 = scalar_lea.vmem [#allocation2], %s421
      %423 = vst.msk [vmem:[%s422] sm:$0xff] %vm188, %v417
      %424 = vst.msk [vmem:[%s422 + $0x8] sm:$0xff] %vm188, %v418
      %425 = vst.msk [vmem:[%s422 + $0x10] sm:$0xff] %vm188, %v419
      %426 = vst.msk [vmem:[%s422 + $0x18] sm:$0xff] %vm188, %v420
      %s427 = sadd.s32 %s58, 36
      %s428 = smul.u32 %s427, 40
      %s429 = scalar_lea.vmem %s0, %s428
      %v430 = vld [vmem:[%s429] sm:$0xff]
      %v431 = vld [vmem:[%s429 + $0x8] sm:$0xff]
      %v432 = vld [vmem:[%s429 + $0x10] sm:$0xff]
      %v433 = vld [vmem:[%s429 + $0x18] sm:$0xff]
      %v434 = vld [vmem:[%s429 + $0x20] sm:$0xf]
      %s435 = sadd.s32 %s58, 37
      %s436 = smul.u32 %s435, 40
      %s437 = scalar_lea.vmem %s0, %s436
      %v438 = vld [vmem:[%s437] sm:$0xff]
      %v439 = vld [vmem:[%s437 + $0x8] sm:$0xff]
      %v440 = vld [vmem:[%s437 + $0x10] sm:$0xff]
      %v441 = vld [vmem:[%s437 + $0x18] sm:$0xff]
      %v442 = vld [vmem:[%s437 + $0x20] sm:$0xf]
      %s443 = sadd.s32 %s58, 38
      %s444 = smul.u32 %s443, 40
      %s445 = scalar_lea.vmem %s0, %s444
      %v446 = vld [vmem:[%s445] sm:$0xff]
      %v447 = vld [vmem:[%s445 + $0x8] sm:$0xff]
      %v448 = vld [vmem:[%s445 + $0x10] sm:$0xff]
      %v449 = vld [vmem:[%s445 + $0x18] sm:$0xff]
      %v450 = vld [vmem:[%s445 + $0x20] sm:$0xf]
      %s451 = sadd.s32 %s58, 39
      %s452 = smul.u32 %s451, 40
      %s453 = scalar_lea.vmem %s0, %s452
      %v454 = vld [vmem:[%s453] sm:$0xff]
      %v455 = vld [vmem:[%s453 + $0x8] sm:$0xff]
      %v456 = vld [vmem:[%s453 + $0x10] sm:$0xff]
      %v457 = vld [vmem:[%s453 + $0x18] sm:$0xff]
      %v458 = vld [vmem:[%s453 + $0x20] sm:$0xf]
      %s459 = sadd.s32 %s58, 40
      %s460 = smul.u32 %s459, 40
      %s461 = scalar_lea.vmem %s0, %s460
      %v462 = vld [vmem:[%s461] sm:$0xff]
      %v463 = vld [vmem:[%s461 + $0x8] sm:$0xff]
      %v464 = vld [vmem:[%s461 + $0x10] sm:$0xff]
      %v465 = vld [vmem:[%s461 + $0x18] sm:$0xff]
      %v466 = vld [vmem:[%s461 + $0x20] sm:$0xf]
      %472 = vrot.lane.b32.xlu0 %v438, 3
      %v473 = vpop.permute.xlu0 %472
      %474 = vrot.lane.b32.xlu0 %v439, 3
      %v475 = vpop.permute.xlu0 %474
      %476 = vrot.lane.b32.xlu0 %v440, 3
      %v477 = vpop.permute.xlu0 %476
      %478 = vrot.lane.b32.xlu0 %v441, 3
      %v479 = vpop.permute.xlu0 %478
      %480 = vrot.lane.b32.xlu0 %v442, 3
      %v481 = vpop.permute.xlu0 %480
      %492 = vrot.lane.b32.xlu0 %v446, 6
      %v493 = vpop.permute.xlu0 %492
      %494 = vrot.lane.b32.xlu0 %v447, 6
      %v495 = vpop.permute.xlu0 %494
      %496 = vrot.lane.b32.xlu0 %v448, 6
      %v497 = vpop.permute.xlu0 %496
      %498 = vrot.lane.b32.xlu0 %v449, 6
      %v499 = vpop.permute.xlu0 %498
      %500 = vrot.lane.b32.xlu0 %v450, 6
      %v501 = vpop.permute.xlu0 %500
      %512 = vrot.lane.b32.xlu0 %v454, 9
      %v513 = vpop.permute.xlu0 %512
      %514 = vrot.lane.b32.xlu0 %v455, 9
      %v515 = vpop.permute.xlu0 %514
      %516 = vrot.lane.b32.xlu0 %v456, 9
      %v517 = vpop.permute.xlu0 %516
      %518 = vrot.lane.b32.xlu0 %v457, 9
      %v519 = vpop.permute.xlu0 %518
      %520 = vrot.lane.b32.xlu0 %v458, 9
      %v521 = vpop.permute.xlu0 %520
      %532 = vrot.lane.b32.xlu0 %v462, 12
      %v533 = vpop.permute.xlu0 %532
      %534 = vrot.lane.b32.xlu0 %v463, 12
      %v535 = vpop.permute.xlu0 %534
      %536 = vrot.lane.b32.xlu0 %v464, 12
      %v537 = vpop.permute.xlu0 %536
      %538 = vrot.lane.b32.xlu0 %v465, 12
      %v539 = vpop.permute.xlu0 %538
      %540 = vrot.lane.b32.xlu0 %v466, 12
      %v541 = vpop.permute.xlu0 %540
      %v547 = vsel %vm182, %v430, %v473
      %v548 = vsel %vm182, %v431, %v475
      %v549 = vsel %vm182, %v432, %v477
      %v550 = vsel %vm182, %v433, %v479
      %v551 = vsel %vm182, %v434, %v481
      %v552 = vsel %vm188, %v547, %v493
      %v553 = vsel %vm188, %v548, %v495
      %v554 = vsel %vm188, %v549, %v497
      %v555 = vsel %vm188, %v550, %v499
      %v556 = vsel %vm188, %v551, %v501
      %v557 = vsel %vm194, %v552, %v513
      %v558 = vsel %vm194, %v553, %v515
      %v559 = vsel %vm194, %v554, %v517
      %v560 = vsel %vm194, %v555, %v519
      %v561 = vsel %vm194, %v556, %v521
      %v562 = vsel %vm200, %v557, %v533
      %v563 = vsel %vm200, %v558, %v535
      %v564 = vsel %vm200, %v559, %v537
      %v565 = vsel %vm200, %v560, %v539
      %v566 = vsel %vm200, %v561, %v541
      %v572 = vrot.slane %v562, 1
      %v573 = vrot.slane %v563, 1
      %v574 = vsel %vm211, %v572, %v573
      %v575 = vrot.slane %v564, 1
      %v576 = vsel %vm211, %v573, %v575
      %v577 = vrot.slane %v565, 1
      %v578 = vsel %vm211, %v575, %v577
      %v579 = vrot.slane %v566, 1
      %v580 = vsel %vm211, %v577, %v579
      %581 = vrot.lane.b32.xlu0 %v574, 15
      %v582 = vpop.permute.xlu0 %581
      %583 = vrot.lane.b32.xlu0 %v576, 15
      %v584 = vpop.permute.xlu0 %583
      %585 = vrot.lane.b32.xlu0 %v578, 15
      %v586 = vpop.permute.xlu0 %585
      %587 = vrot.lane.b32.xlu0 %v580, 15
      %v588 = vpop.permute.xlu0 %587
      %v593 = vrot.slane %v562, 2
      %v594 = vrot.slane %v563, 2
      %v595 = vsel %vm233, %v593, %v594
      %v596 = vrot.slane %v564, 2
      %v597 = vsel %vm233, %v594, %v596
      %v598 = vrot.slane %v565, 2
      %v599 = vsel %vm233, %v596, %v598
      %v600 = vrot.slane %v566, 2
      %v601 = vsel %vm233, %v598, %v600
      %602 = vrot.lane.b32.xlu0 %v595, 30
      %v603 = vpop.permute.xlu0 %602
      %604 = vrot.lane.b32.xlu0 %v597, 30
      %v605 = vpop.permute.xlu0 %604
      %606 = vrot.lane.b32.xlu0 %v599, 30
      %v607 = vpop.permute.xlu0 %606
      %608 = vrot.lane.b32.xlu0 %v601, 30
      %v609 = vpop.permute.xlu0 %608
      %v614 = vrot.slane %v562, 3
      %v615 = vrot.slane %v563, 3
      %v616 = vsel %vm255, %v614, %v615
      %v617 = vrot.slane %v564, 3
      %v618 = vsel %vm255, %v615, %v617
      %v619 = vrot.slane %v565, 3
      %v620 = vsel %vm255, %v617, %v619
      %v621 = vrot.slane %v566, 3
      %v622 = vsel %vm255, %v619, %v621
      %623 = vrot.lane.b32.xlu0 %v616, 45
      %v624 = vpop.permute.xlu0 %623
      %625 = vrot.lane.b32.xlu0 %v618, 45
      %v626 = vpop.permute.xlu0 %625
      %627 = vrot.lane.b32.xlu0 %v620, 45
      %v628 = vpop.permute.xlu0 %627
      %629 = vrot.lane.b32.xlu0 %v622, 45
      %v630 = vpop.permute.xlu0 %629
      %v635 = vrot.slane %v562, 4
      %v636 = vrot.slane %v563, 4
      %v637 = vsel %vm277, %v635, %v636
      %v638 = vrot.slane %v564, 4
      %v639 = vsel %vm277, %v636, %v638
      %v640 = vrot.slane %v565, 4
      %v641 = vsel %vm277, %v638, %v640
      %v642 = vrot.slane %v566, 4
      %v643 = vsel %vm277, %v640, %v642
      %644 = vrot.lane.b32.xlu0 %v637, 60
      %v645 = vpop.permute.xlu0 %644
      %646 = vrot.lane.b32.xlu0 %v639, 60
      %v647 = vpop.permute.xlu0 %646
      %648 = vrot.lane.b32.xlu0 %v641, 60
      %v649 = vpop.permute.xlu0 %648
      %650 = vrot.lane.b32.xlu0 %v643, 60
      %v651 = vpop.permute.xlu0 %650
      %v656 = vsel %vm299, %v562, %v582
      %v657 = vsel %vm299, %v563, %v584
      %v658 = vsel %vm299, %v564, %v586
      %v659 = vsel %vm299, %v565, %v588
      %v660 = vsel %vm304, %v656, %v603
      %v661 = vsel %vm304, %v657, %v605
      %v662 = vsel %vm304, %v658, %v607
      %v663 = vsel %vm304, %v659, %v609
      %v664 = vsel %vm309, %v660, %v624
      %v665 = vsel %vm309, %v661, %v626
      %v666 = vsel %vm309, %v662, %v628
      %v667 = vsel %vm309, %v663, %v630
      %v668 = vsel %vm314, %v664, %v645
      %v669 = vsel %vm314, %v665, %v647
      %v670 = vsel %vm314, %v666, %v649
      %v671 = vsel %vm314, %v667, %v651
      %v672 = vpack.c.bf16 %v669, %v668
      %v673 = vpack.c.bf16 %v671, %v670
      %v675 = vsel %vm356, %v672, 0
      %v678 = vsel %vm356, %v673, 0
      %680 = vmatprep.subr.bf16.mxu0 0
      %681 = vmatpush1.bf16.msra.mxu0 0
      %682 = vmatprep.subr.bf16.mxu0 0
      %683 = vmatpush1.bf16.msra.mxu0 0
      %684 = vmatprep.subr.bf16.mxu0 0
      %685 = vmatpush1.bf16.msra.mxu0 0
      %686 = vmatprep.subr.bf16.mxu0 0
      %687 = vmatpush1.bf16.msra.mxu0 %v366
      %688 = vmatprep.subr.bf16.mxu0 0
      %689 = vmatpush1.bf16.msra.mxu0 %v350
      %690 = vmatprep.subr.bf16.mxu0 0
      %691 = vmatpush1.bf16.msra.mxu0 %v349
      %692 = vmatprep.subr.bf16.mxu0 0
      %693 = vmatpush1.bf16.msra.mxu0 %v348
      %694 = vmatprep.subr.bf16.mxu0 0
      %695 = vmatpush1.bf16.msra.mxu0 %v347
      %696 = vmatprep.subr.bf16.mxu0 0
      %697 = vmatpush2.bf16.msra.mxu0 0
      %698 = vmatprep.subr.bf16.mxu0 0
      %699 = vmatpush2.bf16.msra.mxu0 0
      %700 = vmatprep.subr.bf16.mxu0 0
      %701 = vmatpush2.bf16.msra.mxu0 0
      %702 = vmatprep.subr.bf16.mxu0 0
      %703 = vmatpush2.bf16.msra.mxu0 0
      %704 = vmatprep.subr.bf16.mxu0 0
      %705 = vmatpush2.bf16.msra.mxu0 0
      %706 = vmatprep.subr.bf16.mxu0 0
      %707 = vmatpush2.bf16.msra.mxu0 0
      %708 = vmatprep.subr.bf16.mxu0 0
      %709 = vmatpush2.bf16.msra.mxu0 0
      %710 = vmatprep.subr.bf16.mxu0 0
      %711 = vmatpush2.bf16.msra.mxu0 0
      %712 = vmatprep.mubr.bf16.mxu0 0
      %713 = vmatmul.mubr.bf16.gmra.mxu0 %v675
      %v714 = vpop.f32.mrf.mxu0
      %v715 = vadd.f32 %v325, %v714
      %v716 = vpop.f32.mrf.mxu0
      %v717 = vpop.f32.mrf.mxu0
      %v718 = vadd.f32 %v325, %v717
      %v719 = vpop.f32.mrf.mxu0
      %720 = vmatprep.mubr.bf16.mxu0 0
      %721 = vmatmul.mubr.bf16.gmra.mxu0 %v678
      %v722 = vpop.f32.mrf.mxu0
      %v723 = vadd.f32 %v325, %v722
      %v724 = vpop.f32.mrf.mxu0
      %v725 = vpop.f32.mrf.mxu0
      %v726 = vadd.f32 %v325, %v725
      %v727 = vpop.f32.mrf.mxu0
      %728 = vdwg.mxu0
      %v729 = vmax.f32 %v715, 0.0
      %v730 = vmax.f32 %v718, 0.0
      %v731 = vmax.f32 %v723, 0.0
      %v732 = vmax.f32 %v726, 0.0
      %s733 = sadd.s32 %s58, 32
      %s734 = smul.u32 %s733, 32
      %s735 = scalar_lea.vmem [#allocation2], %s734
      %736 = vst.msk [vmem:[%s735] sm:$0xff] %vm188, %v729
      %737 = vst.msk [vmem:[%s735 + $0x8] sm:$0xff] %vm188, %v730
      %738 = vst.msk [vmem:[%s735 + $0x10] sm:$0xff] %vm188, %v731
      %739 = vst.msk [vmem:[%s735 + $0x18] sm:$0xff] %vm188, %v732
    $region58: #{net_forward.1} parent=1 // loop_footer
      %s62 = sadd.s32 1, %s58
    $region59: #{net_forward.1} parent=1 // loop_footer_branch
      %57 = sbr.rel target = $region55
    $region60: #{net_forward.1} parent=1 // loop_exit
      _
    %v740 = vlaneseq
    %v741 = vshrl.u32 %v740, 7
    %v742 = vadd.s32 %v741, 8
    %v743 = vlaneseq
    %v744 = vand.u32 %v743, 127
    %v745 = vmul.u32 %v741, 2
    %v746 = vmul.u32 %v742, 2
    %vm747 = vcmp.eq.s32.totalorder %v744, %v745
    %vm748 = vcmp.eq.s32.totalorder %v744, %v746
    %v749 = vsel %vm747, 1, 0
    %v750 = vsel %vm748, 1, 0
    %v751 = vcvt.s32.f32 %v749
    %v752 = vcvt.s32.f32 %v750
    %v753 = vadd.s32 %v745, 1
    %v754 = vadd.s32 %v746, 1
    %vm755 = vcmp.eq.s32.totalorder %v744, %v753
    %vm756 = vcmp.eq.s32.totalorder %v744, %v754
    %v757 = vsel %vm755, 1, 0
    %v758 = vsel %vm756, 1, 0
    %v759 = vcvt.s32.f32 %v757
    %v760 = vcvt.s32.f32 %v758
    loop: start=0, step=1, limit=16
    $region61: #{net_forward.1} parent=1 // loop_pre_header
      _
    $region62: #{net_forward.1} parent=1 // loop_header
      %s762 = sphi 0, %s766
      %p763 = scmp.ge.s32.totalorder %s762, 16
    $region63: #{net_forward.1} parent=1 // loop_header_branch
      %765 = sbr.rel (%p763) target = $region67
    $region64: #{net_forward.1} parent=1 // loop_body
      %s767 = smul.u32 %s762, 2
      %s768 = smul.u32 %s767, 32
      %s769 = scalar_lea.vmem [#allocation2], %s768
      %v770 = vld [vmem:[%s769] sm:$0xff]
      %v771 = vld [vmem:[%s769 + $0x8] sm:$0xff]
      %v772 = vld [vmem:[%s769 + $0x10] sm:$0xff]
      %v773 = vld [vmem:[%s769 + $0x18] sm:$0xff]
      %s774 = sadd.s32 %s767, 1
      %s775 = smul.u32 %s774, 32
      %s776 = scalar_lea.vmem [#allocation2], %s775
      %v777 = vld [vmem:[%s776] sm:$0xff]
      %v778 = vld [vmem:[%s776 + $0x8] sm:$0xff]
      %v779 = vld [vmem:[%s776 + $0x10] sm:$0xff]
      %v780 = vld [vmem:[%s776 + $0x18] sm:$0xff]
      %v781 = vmax.f32 %v770, %v777
      %v782 = vmax.f32 %v771, %v778
      %v783 = vmax.f32 %v772, %v779
      %v784 = vmax.f32 %v773, %v780
      %vm785 = vcmask 261120
      %v787 = vsel %vm785, %v751, 0
      %v790 = vsel %vm785, %v752, 0
      %792 = vmatprep.subr.mxu0 0.0
      %793 = vmatpush1.msra.mxu0 0.0
      %794 = vmatprep.subr.mxu0 0.0
      %795 = vmatpush1.msra.mxu0 0.0
      %796 = vmatprep.subr.mxu0 0.0
      %797 = vmatpush1.msra.mxu0 0.0
      %798 = vmatprep.subr.mxu0 0.0
      %799 = vmatpush1.msra.mxu0 0.0
      %800 = vmatprep.subr.mxu0 0.0
      %801 = vmatpush1.msra.mxu0 0.0
      %802 = vmatprep.subr.mxu0 0.0
      %803 = vmatpush1.msra.mxu0 0.0
      %804 = vmatprep.subr.mxu0 0.0
      %805 = vmatpush1.msra.mxu0 0.0
      %806 = vmatprep.subr.mxu0 0.0
      %807 = vmatpush1.msra.mxu0 0.0
      %808 = vmatprep.subr.mxu0 0.0
      %809 = vmatpush1.msra.mxu0 0.0
      %810 = vmatprep.subr.mxu0 0.0
      %811 = vmatpush1.msra.mxu0 0.0
      %812 = vmatprep.subr.mxu0 0.0
      %813 = vmatpush1.msra.mxu0 0.0
      %814 = vmatprep.subr.mxu0 0.0
      %815 = vmatpush1.msra.mxu0 0.0
      %816 = vmatprep.subr.mxu0 0.0
      %817 = vmatpush1.msra.mxu0 %v784
      %818 = vmatprep.subr.mxu0 0.0
      %819 = vmatpush1.msra.mxu0 %v783
      %820 = vmatprep.subr.mxu0 0.0
      %821 = vmatpush1.msra.mxu0 %v782
      %822 = vmatprep.subr.mxu0 0.0
      %823 = vmatpush1.msra.mxu0 %v781
      %824 = vmatprep.subr.mxu0 0.0
      %825 = vmatpush2.msra.mxu0 0.0
      %826 = vmatprep.subr.mxu0 0.0
      %827 = vmatpush2.msra.mxu0 0.0
      %828 = vmatprep.subr.mxu0 0.0
      %829 = vmatpush2.msra.mxu0 0.0
      %830 = vmatprep.subr.mxu0 0.0
      %831 = vmatpush2.msra.mxu0 0.0
      %832 = vmatprep.subr.mxu0 0.0
      %833 = vmatpush2.msra.mxu0 0.0
      %834 = vmatprep.subr.mxu0 0.0
      %835 = vmatpush2.msra.mxu0 0.0
      %836 = vmatprep.subr.mxu0 0.0
      %837 = vmatpush2.msra.mxu0 0.0
      %838 = vmatprep.subr.mxu0 0.0
      %839 = vmatpush2.msra.mxu0 0.0
      %840 = vmatprep.subr.mxu0 0.0
      %841 = vmatpush2.msra.mxu0 0.0
      %842 = vmatprep.subr.mxu0 0.0
      %843 = vmatpush2.msra.mxu0 0.0
      %844 = vmatprep.subr.mxu0 0.0
      %845 = vmatpush2.msra.mxu0 0.0
      %846 = vmatprep.subr.mxu0 0.0
      %847 = vmatpush2.msra.mxu0 0.0
      %848 = vmatprep.subr.mxu0 0.0
      %849 = vmatpush2.msra.mxu0 0.0
      %850 = vmatprep.subr.mxu0 0.0
      %851 = vmatpush2.msra.mxu0 0.0
      %852 = vmatprep.subr.mxu0 0.0
      %853 = vmatpush2.msra.mxu0 0.0
      %854 = vmatprep.subr.mxu0 0.0
      %855 = vmatpush2.msra.mxu0 0.0
      %856 = vmatprep.mubr.f32.mxu0 0.0
      %857 = vmatmul.mubr.f32.gmra.mxu0 %v787
      %v858 = vpop.f32.mrf.mxu0
      %v859 = vadd.f32 0.0, %v858
      %v860 = vpop.f32.mrf.mxu0
      %861 = vmatprep.mubr.f32.mxu0 0.0
      %862 = vmatmul.mubr.f32.gmra.mxu0 %v790
      %v863 = vpop.f32.mrf.mxu0
      %v864 = vadd.f32 0.0, %v863
      %v865 = vpop.f32.mrf.mxu0
      %866 = vdwg.mxu0
      %v868 = vsel %vm785, %v759, 0
      %v871 = vsel %vm785, %v760, 0
      %873 = vmatprep.subr.mxu0 0.0
      %874 = vmatpush1.msra.mxu0 0.0
      %875 = vmatprep.subr.mxu0 0.0
      %876 = vmatpush1.msra.mxu0 0.0
      %877 = vmatprep.subr.mxu0 0.0
      %878 = vmatpush1.msra.mxu0 0.0
      %879 = vmatprep.subr.mxu0 0.0
      %880 = vmatpush1.msra.mxu0 0.0
      %881 = vmatprep.subr.mxu0 0.0
      %882 = vmatpush1.msra.mxu0 0.0
      %883 = vmatprep.subr.mxu0 0.0
      %884 = vmatpush1.msra.mxu0 0.0
      %885 = vmatprep.subr.mxu0 0.0
      %886 = vmatpush1.msra.mxu0 0.0
      %887 = vmatprep.subr.mxu0 0.0
      %888 = vmatpush1.msra.mxu0 0.0
      %889 = vmatprep.subr.mxu0 0.0
      %890 = vmatpush1.msra.mxu0 0.0
      %891 = vmatprep.subr.mxu0 0.0
      %892 = vmatpush1.msra.mxu0 0.0
      %893 = vmatprep.subr.mxu0 0.0
      %894 = vmatpush1.msra.mxu0 0.0
      %895 = vmatprep.subr.mxu0 0.0
      %896 = vmatpush1.msra.mxu0 0.0
      %897 = vmatprep.subr.mxu0 0.0
      %898 = vmatpush1.msra.mxu0 %v784
      %899 = vmatprep.subr.mxu0 0.0
      %900 = vmatpush1.msra.mxu0 %v783
      %901 = vmatprep.subr.mxu0 0.0
      %902 = vmatpush1.msra.mxu0 %v782
      %903 = vmatprep.subr.mxu0 0.0
      %904 = vmatpush1.msra.mxu0 %v781
      %905 = vmatprep.subr.mxu0 0.0
      %906 = vmatpush2.msra.mxu0 0.0
      %907 = vmatprep.subr.mxu0 0.0
      %908 = vmatpush2.msra.mxu0 0.0
      %909 = vmatprep.subr.mxu0 0.0
      %910 = vmatpush2.msra.mxu0 0.0
      %911 = vmatprep.subr.mxu0 0.0
      %912 = vmatpush2.msra.mxu0 0.0
      %913 = vmatprep.subr.mxu0 0.0
      %914 = vmatpush2.msra.mxu0 0.0
      %915 = vmatprep.subr.mxu0 0.0
      %916 = vmatpush2.msra.mxu0 0.0
      %917 = vmatprep.subr.mxu0 0.0
      %918 = vmatpush2.msra.mxu0 0.0
      %919 = vmatprep.subr.mxu0 0.0
      %920 = vmatpush2.msra.mxu0 0.0
      %921 = vmatprep.subr.mxu0 0.0
      %922 = vmatpush2.msra.mxu0 0.0
      %923 = vmatprep.subr.mxu0 0.0
      %924 = vmatpush2.msra.mxu0 0.0
      %925 = vmatprep.subr.mxu0 0.0
      %926 = vmatpush2.msra.mxu0 0.0
      %927 = vmatprep.subr.mxu0 0.0
      %928 = vmatpush2.msra.mxu0 0.0
      %929 = vmatprep.subr.mxu0 0.0
      %930 = vmatpush2.msra.mxu0 0.0
      %931 = vmatprep.subr.mxu0 0.0
      %932 = vmatpush2.msra.mxu0 0.0
      %933 = vmatprep.subr.mxu0 0.0
      %934 = vmatpush2.msra.mxu0 0.0
      %935 = vmatprep.subr.mxu0 0.0
      %936 = vmatpush2.msra.mxu0 0.0
      %937 = vmatprep.mubr.f32.mxu0 0.0
      %938 = vmatmul.mubr.f32.gmra.mxu0 %v868
      %v939 = vpop.f32.mrf.mxu0
      %v940 = vadd.f32 0.0, %v939
      %v941 = vpop.f32.mrf.mxu0
      %942 = vmatprep.mubr.f32.mxu0 0.0
      %943 = vmatmul.mubr.f32.gmra.mxu0 %v871
      %v944 = vpop.f32.mrf.mxu0
      %v945 = vadd.f32 0.0, %v944
      %v946 = vpop.f32.mrf.mxu0
      %947 = vdwg.mxu0
      %v948 = vmax.f32 %v859, %v940
      %v949 = vmax.f32 %v864, %v945
      %s950 = smul.u32 %s762, 16
      %s951 = scalar_lea.vmem [#allocation3], %s950
      %vm952 = vcmask 48128
      %953 = vst.msk [vmem:[%s951] sm:$0xff] %vm952, %v948
      %954 = vst.msk [vmem:[%s951 + $0x8] sm:$0xff] %vm952, %v949
      %s955 = sadd.s32 %s767, 32
      %s956 = smul.u32 %s955, 32
      %s957 = scalar_lea.vmem [#allocation2], %s956
      %v958 = vld [vmem:[%s957] sm:$0xff]
      %v959 = vld [vmem:[%s957 + $0x8] sm:$0xff]
      %v960 = vld [vmem:[%s957 + $0x10] sm:$0xff]
      %v961 = vld [vmem:[%s957 + $0x18] sm:$0xff]
      %s962 = sadd.s32 %s767, 33
      %s963 = smul.u32 %s962, 32
      %s964 = scalar_lea.vmem [#allocation2], %s963
      %v965 = vld [vmem:[%s964] sm:$0xff]
      %v966 = vld [vmem:[%s964 + $0x8] sm:$0xff]
      %v967 = vld [vmem:[%s964 + $0x10] sm:$0xff]
      %v968 = vld [vmem:[%s964 + $0x18] sm:$0xff]
      %v969 = vmax.f32 %v958, %v965
      %v970 = vmax.f32 %v959, %v966
      %v971 = vmax.f32 %v960, %v967
      %v972 = vmax.f32 %v961, %v968
      %973 = vmatprep.subr.mxu0 0.0
      %974 = vmatpush1.msra.mxu0 0.0
      %975 = vmatprep.subr.mxu0 0.0
      %976 = vmatpush1.msra.mxu0 0.0
      %977 = vmatprep.subr.mxu0 0.0
      %978 = vmatpush1.msra.mxu0 0.0
      %979 = vmatprep.subr.mxu0 0.0
      %980 = vmatpush1.msra.mxu0 0.0
      %981 = vmatprep.subr.mxu0 0.0
      %982 = vmatpush1.msra.mxu0 0.0
      %983 = vmatprep.subr.mxu0 0.0
      %984 = vmatpush1.msra.mxu0 0.0
      %985 = vmatprep.subr.mxu0 0.0
      %986 = vmatpush1.msra.mxu0 0.0
      %987 = vmatprep.subr.mxu0 0.0
      %988 = vmatpush1.msra.mxu0 0.0
      %989 = vmatprep.subr.mxu0 0.0
      %990 = vmatpush1.msra.mxu0 0.0
      %991 = vmatprep.subr.mxu0 0.0
      %992 = vmatpush1.msra.mxu0 0.0
      %993 = vmatprep.subr.mxu0 0.0
      %994 = vmatpush1.msra.mxu0 0.0
      %995 = vmatprep.subr.mxu0 0.0
      %996 = vmatpush1.msra.mxu0 0.0
      %997 = vmatprep.subr.mxu0 0.0
      %998 = vmatpush1.msra.mxu0 %v972
      %999 = vmatprep.subr.mxu0 0.0
      %1000 = vmatpush1.msra.mxu0 %v971
      %1001 = vmatprep.subr.mxu0 0.0
      %1002 = vmatpush1.msra.mxu0 %v970
      %1003 = vmatprep.subr.mxu0 0.0
      %1004 = vmatpush1.msra.mxu0 %v969
      %1005 = vmatprep.subr.mxu0 0.0
      %1006 = vmatpush2.msra.mxu0 0.0
      %1007 = vmatprep.subr.mxu0 0.0
      %1008 = vmatpush2.msra.mxu0 0.0
      %1009 = vmatprep.subr.mxu0 0.0
      %1010 = vmatpush2.msra.mxu0 0.0
      %1011 = vmatprep.subr.mxu0 0.0
      %1012 = vmatpush2.msra.mxu0 0.0
      %1013 = vmatprep.subr.mxu0 0.0
      %1014 = vmatpush2.msra.mxu0 0.0
      %1015 = vmatprep.subr.mxu0 0.0
      %1016 = vmatpush2.msra.mxu0 0.0
      %1017 = vmatprep.subr.mxu0 0.0
      %1018 = vmatpush2.msra.mxu0 0.0
      %1019 = vmatprep.subr.mxu0 0.0
      %1020 = vmatpush2.msra.mxu0 0.0
      %1021 = vmatprep.subr.mxu0 0.0
      %1022 = vmatpush2.msra.mxu0 0.0
      %1023 = vmatprep.subr.mxu0 0.0
      %1024 = vmatpush2.msra.mxu0 0.0
      %1025 = vmatprep.subr.mxu0 0.0
      %1026 = vmatpush2.msra.mxu0 0.0
      %1027 = vmatprep.subr.mxu0 0.0
      %1028 = vmatpush2.msra.mxu0 0.0
      %1029 = vmatprep.subr.mxu0 0.0
      %1030 = vmatpush2.msra.mxu0 0.0
      %1031 = vmatprep.subr.mxu0 0.0
      %1032 = vmatpush2.msra.mxu0 0.0
      %1033 = vmatprep.subr.mxu0 0.0
      %1034 = vmatpush2.msra.mxu0 0.0
      %1035 = vmatprep.subr.mxu0 0.0
      %1036 = vmatpush2.msra.mxu0 0.0
      %1037 = vmatprep.mubr.f32.mxu0 0.0
      %1038 = vmatmul.mubr.f32.gmra.mxu0 %v787
      %v1039 = vpop.f32.mrf.mxu0
      %v1040 = vadd.f32 0.0, %v1039
      %v1041 = vpop.f32.mrf.mxu0
      %1042 = vmatprep.mubr.f32.mxu0 0.0
      %1043 = vmatmul.mubr.f32.gmra.mxu0 %v790
      %v1044 = vpop.f32.mrf.mxu0
      %v1045 = vadd.f32 0.0, %v1044
      %v1046 = vpop.f32.mrf.mxu0
      %1047 = vdwg.mxu0
      %1048 = vmatprep.subr.mxu0 0.0
      %1049 = vmatpush1.msra.mxu0 0.0
      %1050 = vmatprep.subr.mxu0 0.0
      %1051 = vmatpush1.msra.mxu0 0.0
      %1052 = vmatprep.subr.mxu0 0.0
      %1053 = vmatpush1.msra.mxu0 0.0
      %1054 = vmatprep.subr.mxu0 0.0
      %1055 = vmatpush1.msra.mxu0 0.0
      %1056 = vmatprep.subr.mxu0 0.0
      %1057 = vmatpush1.msra.mxu0 0.0
      %1058 = vmatprep.subr.mxu0 0.0
      %1059 = vmatpush1.msra.mxu0 0.0
      %1060 = vmatprep.subr.mxu0 0.0
      %1061 = vmatpush1.msra.mxu0 0.0
      %1062 = vmatprep.subr.mxu0 0.0
      %1063 = vmatpush1.msra.mxu0 0.0
      %1064 = vmatprep.subr.mxu0 0.0
      %1065 = vmatpush1.msra.mxu0 0.0
      %1066 = vmatprep.subr.mxu0 0.0
      %1067 = vmatpush1.msra.mxu0 0.0
      %1068 = vmatprep.subr.mxu0 0.0
      %1069 = vmatpush1.msra.mxu0 0.0
      %1070 = vmatprep.subr.mxu0 0.0
      %1071 = vmatpush1.msra.mxu0 0.0
      %1072 = vmatprep.subr.mxu0 0.0
      %1073 = vmatpush1.msra.mxu0 %v972
      %1074 = vmatprep.subr.mxu0 0.0
      %1075 = vmatpush1.msra.mxu0 %v971
      %1076 = vmatprep.subr.mxu0 0.0
      %1077 = vmatpush1.msra.mxu0 %v970
      %1078 = vmatprep.subr.mxu0 0.0
      %1079 = vmatpush1.msra.mxu0 %v969
      %1080 = vmatprep.subr.mxu0 0.0
      %1081 = vmatpush2.msra.mxu0 0.0
      %1082 = vmatprep.subr.mxu0 0.0
      %1083 = vmatpush2.msra.mxu0 0.0
      %1084 = vmatprep.subr.mxu0 0.0
      %1085 = vmatpush2.msra.mxu0 0.0
      %1086 = vmatprep.subr.mxu0 0.0
      %1087 = vmatpush2.msra.mxu0 0.0
      %1088 = vmatprep.subr.mxu0 0.0
      %1089 = vmatpush2.msra.mxu0 0.0
      %1090 = vmatprep.subr.mxu0 0.0
      %1091 = vmatpush2.msra.mxu0 0.0
      %1092 = vmatprep.subr.mxu0 0.0
      %1093 = vmatpush2.msra.mxu0 0.0
      %1094 = vmatprep.subr.mxu0 0.0
      %1095 = vmatpush2.msra.mxu0 0.0
      %1096 = vmatprep.subr.mxu0 0.0
      %1097 = vmatpush2.msra.mxu0 0.0
      %1098 = vmatprep.subr.mxu0 0.0
      %1099 = vmatpush2.msra.mxu0 0.0
      %1100 = vmatprep.subr.mxu0 0.0
      %1101 = vmatpush2.msra.mxu0 0.0
      %1102 = vmatprep.subr.mxu0 0.0
      %1103 = vmatpush2.msra.mxu0 0.0
      %1104 = vmatprep.subr.mxu0 0.0
      %1105 = vmatpush2.msra.mxu0 0.0
      %1106 = vmatprep.subr.mxu0 0.0
      %1107 = vmatpush2.msra.mxu0 0.0
      %1108 = vmatprep.subr.mxu0 0.0
      %1109 = vmatpush2.msra.mxu0 0.0
      %1110 = vmatprep.subr.mxu0 0.0
      %1111 = vmatpush2.msra.mxu0 0.0
      %1112 = vmatprep.mubr.f32.mxu0 0.0
      %1113 = vmatmul.mubr.f32.gmra.mxu0 %v868
      %v1114 = vpop.f32.mrf.mxu0
      %v1115 = vadd.f32 0.0, %v1114
      %v1116 = vpop.f32.mrf.mxu0
      %1117 = vmatprep.mubr.f32.mxu0 0.0
      %1118 = vmatmul.mubr.f32.gmra.mxu0 %v871
      %v1119 = vpop.f32.mrf.mxu0
      %v1120 = vadd.f32 0.0, %v1119
      %v1121 = vpop.f32.mrf.mxu0
      %1122 = vdwg.mxu0
      %v1123 = vmax.f32 %v1040, %v1115
      %v1124 = vmax.f32 %v1045, %v1120
      %s1125 = sadd.s32 %s762, 16
      %s1126 = smul.u32 %s1125, 16
      %s1127 = scalar_lea.vmem [#allocation3], %s1126
      %1128 = vst.msk [vmem:[%s1127] sm:$0xff] %vm952, %v1123
      %1129 = vst.msk [vmem:[%s1127 + $0x8] sm:$0xff] %vm952, %v1124
    $region65: #{net_forward.1} parent=1 // loop_footer
      %s766 = sadd.s32 1, %s762
    $region66: #{net_forward.1} parent=1 // loop_footer_branch
      %761 = sbr.rel target = $region62
    $region67: #{net_forward.1} parent=1 // loop_exit
      _
    %v1130 = vld [vmem:[%s3] sm:$0xf]
    %v1131 = vld [vmem:[%s3 + $0x4] sm:$0xf]
    %v1132 = vld [vmem:[%s3 + $0x8] sm:$0xf]
    %v1133 = vld [vmem:[%s3 + $0xc] sm:$0xf]
    %v1134 = vld [vmem:[%s3 + $0x10] sm:$0xf]
    %v1135 = vld [vmem:[%s3 + $0x14] sm:$0xf]
    %v1136 = vld [vmem:[%s3 + $0x18] sm:$0x7]
    %v1137 = vld [vmem:[%s4] sm:$0x1]
    loop: start=0, step=1, limit=14
    $region68: #{net_forward.1} parent=1 // loop_pre_header
      _
    $region69: #{net_forward.1} parent=1 // loop_header
      %s1139 = sphi 0, %s1143
      %p1140 = scmp.ge.s32.totalorder %s1139, 14
    $region70: #{net_forward.1} parent=1 // loop_header_branch
      %1142 = sbr.rel (%p1140) target = $region74
    $region71: #{net_forward.1} parent=1 // loop_body
      %s1144 = smul.u32 %s1139, 16
      %s1145 = scalar_lea.vmem [#allocation3], %s1144
      %v1146 = vld [vmem:[%s1145] sm:$0xff]
      %v1147 = vld [vmem:[%s1145 + $0x8] sm:$0xff]
      %s1148 = sadd.s32 %s1139, 1
      %s1149 = smul.u32 %s1148, 16
      %s1150 = scalar_lea.vmem [#allocation3], %s1149
      %v1151 = vld [vmem:[%s1150] sm:$0xff]
      %v1152 = vld [vmem:[%s1150 + $0x8] sm:$0xff]
      %s1153 = sadd.s32 %s1139, 2
      %s1154 = smul.u32 %s1153, 16
      %s1155 = scalar_lea.vmem [#allocation3], %s1154
      %v1156 = vld [vmem:[%s1155] sm:$0xff]
      %v1157 = vld [vmem:[%s1155 + $0x8] sm:$0xff]
      %1160 = vrot.lane.b32.xlu0 %v1151, 6
      %v1161 = vpop.permute.xlu0 %1160
      %1162 = vrot.lane.b32.xlu0 %v1152, 6
      %v1163 = vpop.permute.xlu0 %1162
      %1168 = vrot.lane.b32.xlu0 %v1156, 12
      %v1169 = vpop.permute.xlu0 %1168
      %1170 = vrot.lane.b32.xlu0 %v1157, 12
      %v1171 = vpop.permute.xlu0 %1170
      %vm1174 = vcmask 48128
      %v1175 = vsel %vm1174, %v1146, %v1161
      %v1176 = vsel %vm1174, %v1147, %v1163
      %vm1177 = vcmask 97280
      %v1178 = vsel %vm1177, %v1175, %v1169
      %v1179 = vsel %vm1177, %v1176, %v1171
      %vm1182 = vcmask 1046528
      %v1183 = vrot.slane %v1178, 1
      %v1184 = vrot.slane %v1179, 1
      %v1185 = vsel %vm1182, %v1183, %v1184
      %1186 = vrot.lane.b32.xlu0 %v1185, 18
      %v1187 = vpop.permute.xlu0 %1186
      %1188 = vrot.lane.b32.xlu0 %v1184, 18
      %v1189 = vpop.permute.xlu0 %1188
      %vm1192 = vcmask 1045504
      %v1193 = vrot.slane %v1178, 2
      %v1194 = vrot.slane %v1179, 2
      %v1195 = vsel %vm1192, %v1193, %v1194
      %1196 = vrot.lane.b32.xlu0 %v1195, 36
      %v1197 = vpop.permute.xlu0 %1196
      %1198 = vrot.lane.b32.xlu0 %v1194, 36
      %v1199 = vpop.permute.xlu0 %1198
      %vm1202 = vcmask 146432
      %v1203 = vsel %vm1202, %v1178, %v1187
      %v1204 = vsel %vm1202, %v1179, %v1189
      %vm1205 = vcmask 293888
      %v1206 = vsel %vm1205, %v1203, %v1197
      %v1207 = vsel %vm1205, %v1204, %v1199
      %v1208 = vpack.c.bf16 %v1207, %v1206
      %v1210 = vlaneseq
      %v1211 = vshrl.u32 %v1210, 7
      %v1212 = vsub.s32 0, %v1211
      %v1213 = vrot.slane %v1137, %v1212
      %v1222 = vunpack.c.l.b16 %v1130
      %v1223 = vunpack.c.l.b16 %v1131
      %v1224 = vunpack.c.l.b16 %v1132
      %v1225 = vunpack.c.l.b16 %v1133
      %v1226 = vunpack.c.l.b16 %v1134
      %v1227 = vunpack.c.l.b16 %v1135
      %v1228 = vunpack.c.l.b16 %v1136
      %v1229 = vpack.c.b16 %v1223, %v1222
      %v1230 = vpack.c.b16 %v1225, %v1224
      %v1231 = vpack.c.b16 %v1227, %v1226
      %v1232 = vpack.c.b16 %v1228, %v1228
      %vm1236 = vcmask 441344
      %v1238 = vsel %vm1236, %v1208, 0
      %vm1240 = vcmask 1042432
      %v1242 = vsel %vm1240, %v1232, 0
      %1244 = vmatprep.subr.bf16.mxu0 0
      %1245 = vmatpush1.bf16.msra.mxu0 0
      %1246 = vmatprep.subr.bf16.mxu0 0
      %1247 = vmatpush1.bf16.msra.mxu0 0
      %1248 = vmatprep.subr.bf16.mxu0 0
      %1249 = vmatpush1.bf16.msra.mxu0 0
      %1250 = vmatprep.subr.bf16.mxu0 0
      %1251 = vmatpush1.bf16.msra.mxu0 0
      %1252 = vmatprep.subr.bf16.mxu0 0
      %1253 = vmatpush1.bf16.msra.mxu0 %v1242
      %1254 = vmatprep.subr.bf16.mxu0 0
      %1255 = vmatpush1.bf16.msra.mxu0 %v1231
      %1256 = vmatprep.subr.bf16.mxu0 0
      %1257 = vmatpush1.bf16.msra.mxu0 %v1230
      %1258 = vmatprep.subr.bf16.mxu0 0
      %1259 = vmatpush1.bf16.msra.mxu0 %v1229
      %1260 = vmatprep.subr.bf16.mxu0 0
      %1261 = vmatpush2.bf16.msra.mxu0 0
      %1262 = vmatprep.subr.bf16.mxu0 0
      %1263 = vmatpush2.bf16.msra.mxu0 0
      %1264 = vmatprep.subr.bf16.mxu0 0
      %1265 = vmatpush2.bf16.msra.mxu0 0
      %1266 = vmatprep.subr.bf16.mxu0 0
      %1267 = vmatpush2.bf16.msra.mxu0 0
      %1268 = vmatprep.subr.bf16.mxu0 0
      %1269 = vmatpush2.bf16.msra.mxu0 0
      %1270 = vmatprep.subr.bf16.mxu0 0
      %1271 = vmatpush2.bf16.msra.mxu0 0
      %1272 = vmatprep.subr.bf16.mxu0 0
      %1273 = vmatpush2.bf16.msra.mxu0 0
      %1274 = vmatprep.subr.bf16.mxu0 0
      %1275 = vmatpush2.bf16.msra.mxu0 0
      %1276 = vmatprep.mubr.bf16.mxu0 0
      %1277 = vmatmul.mubr.bf16.gmra.mxu0 %v1238
      %v1278 = vpop.f32.mrf.mxu0
      %v1279 = vadd.f32 %v1213, %v1278
      %v1280 = vpop.f32.mrf.mxu0
      %v1281 = vpop.f32.mrf.mxu0
      %v1282 = vadd.f32 %v1213, %v1281
      %v1283 = vpop.f32.mrf.mxu0
      %1284 = vdwg.mxu0
      %v1285 = vmax.f32 %v1279, 0.0
      %v1286 = vmax.f32 %v1282, 0.0
      %s1287 = scalar_lea.vmem [#allocation4], %s1144
      %vm1288 = vcmask 130048
      %1289 = vst.msk [vmem:[%s1287] sm:$0xff] %vm1288, %v1285
      %vm1290 = vcmask 128000
      %1291 = vst.msk [vmem:[%s1287 + $0x8] sm:$0x3f] %vm1290, %v1286
      %s1292 = sadd.s32 %s1139, 16
      %s1293 = smul.u32 %s1292, 16
      %s1294 = scalar_lea.vmem [#allocation3], %s1293
      %v1295 = vld [vmem:[%s1294] sm:$0xff]
      %v1296 = vld [vmem:[%s1294 + $0x8] sm:$0xff]
      %s1297 = sadd.s32 %s1139, 17
      %s1298 = smul.u32 %s1297, 16
      %s1299 = scalar_lea.vmem [#allocation3], %s1298
      %v1300 = vld [vmem:[%s1299] sm:$0xff]
      %v1301 = vld [vmem:[%s1299 + $0x8] sm:$0xff]
      %s1302 = sadd.s32 %s1139, 18
      %s1303 = smul.u32 %s1302, 16
      %s1304 = scalar_lea.vmem [#allocation3], %s1303
      %v1305 = vld [vmem:[%s1304] sm:$0xff]
      %v1306 = vld [vmem:[%s1304 + $0x8] sm:$0xff]
      %1309 = vrot.lane.b32.xlu0 %v1300, 6
      %v1310 = vpop.permute.xlu0 %1309
      %1311 = vrot.lane.b32.xlu0 %v1301, 6
      %v1312 = vpop.permute.xlu0 %1311
      %1317 = vrot.lane.b32.xlu0 %v1305, 12
      %v1318 = vpop.permute.xlu0 %1317
      %1319 = vrot.lane.b32.xlu0 %v1306, 12
      %v1320 = vpop.permute.xlu0 %1319
      %v1323 = vsel %vm1174, %v1295, %v1310
      %v1324 = vsel %vm1174, %v1296, %v1312
      %v1325 = vsel %vm1177, %v1323, %v1318
      %v1326 = vsel %vm1177, %v1324, %v1320
      %v1329 = vrot.slane %v1325, 1
      %v1330 = vrot.slane %v1326, 1
      %v1331 = vsel %vm1182, %v1329, %v1330
      %1332 = vrot.lane.b32.xlu0 %v1331, 18
      %v1333 = vpop.permute.xlu0 %1332
      %1334 = vrot.lane.b32.xlu0 %v1330, 18
      %v1335 = vpop.permute.xlu0 %1334
      %v1338 = vrot.slane %v1325, 2
      %v1339 = vrot.slane %v1326, 2
      %v1340 = vsel %vm1192, %v1338, %v1339
      %1341 = vrot.lane.b32.xlu0 %v1340, 36
      %v1342 = vpop.permute.xlu0 %1341
      %1343 = vrot.lane.b32.xlu0 %v1339, 36
      %v1344 = vpop.permute.xlu0 %1343
      %v1347 = vsel %vm1202, %v1325, %v1333
      %v1348 = vsel %vm1202, %v1326, %v1335
      %v1349 = vsel %vm1205, %v1347, %v1342
      %v1350 = vsel %vm1205, %v1348, %v1344
      %v1351 = vpack.c.bf16 %v1350, %v1349
      %v1353 = vsel %vm1236, %v1351, 0
      %1355 = vmatprep.subr.bf16.mxu0 0
      %1356 = vmatpush1.bf16.msra.mxu0 0
      %1357 = vmatprep.subr.bf16.mxu0 0
      %1358 = vmatpush1.bf16.msra.mxu0 0
      %1359 = vmatprep.subr.bf16.mxu0 0
      %1360 = vmatpush1.bf16.msra.mxu0 0
      %1361 = vmatprep.subr.bf16.mxu0 0
      %1362 = vmatpush1.bf16.msra.mxu0 0
      %1363 = vmatprep.subr.bf16.mxu0 0
      %1364 = vmatpush1.bf16.msra.mxu0 %v1242
      %1365 = vmatprep.subr.bf16.mxu0 0
      %1366 = vmatpush1.bf16.msra.mxu0 %v1231
      %1367 = vmatprep.subr.bf16.mxu0 0
      %1368 = vmatpush1.bf16.msra.mxu0 %v1230
      %1369 = vmatprep.subr.bf16.mxu0 0
      %1370 = vmatpush1.bf16.msra.mxu0 %v1229
      %1371 = vmatprep.subr.bf16.mxu0 0
      %1372 = vmatpush2.bf16.msra.mxu0 0
      %1373 = vmatprep.subr.bf16.mxu0 0
      %1374 = vmatpush2.bf16.msra.mxu0 0
      %1375 = vmatprep.subr.bf16.mxu0 0
      %1376 = vmatpush2.bf16.msra.mxu0 0
      %1377 = vmatprep.subr.bf16.mxu0 0
      %1378 = vmatpush2.bf16.msra.mxu0 0
      %1379 = vmatprep.subr.bf16.mxu0 0
      %1380 = vmatpush2.bf16.msra.mxu0 0
      %1381 = vmatprep.subr.bf16.mxu0 0
      %1382 = vmatpush2.bf16.msra.mxu0 0
      %1383 = vmatprep.subr.bf16.mxu0 0
      %1384 = vmatpush2.bf16.msra.mxu0 0
      %1385 = vmatprep.subr.bf16.mxu0 0
      %1386 = vmatpush2.bf16.msra.mxu0 0
      %1387 = vmatprep.mubr.bf16.mxu0 0
      %1388 = vmatmul.mubr.bf16.gmra.mxu0 %v1353
      %v1389 = vpop.f32.mrf.mxu0
      %v1390 = vadd.f32 %v1213, %v1389
      %v1391 = vpop.f32.mrf.mxu0
      %v1392 = vpop.f32.mrf.mxu0
      %v1393 = vadd.f32 %v1213, %v1392
      %v1394 = vpop.f32.mrf.mxu0
      %1395 = vdwg.mxu0
      %v1396 = vmax.f32 %v1390, 0.0
      %v1397 = vmax.f32 %v1393, 0.0
      %s1398 = sadd.s32 %s1139, 14
      %s1399 = smul.u32 %s1398, 16
      %s1400 = scalar_lea.vmem [#allocation4], %s1399
      %1401 = vst.msk [vmem:[%s1400] sm:$0xff] %vm1288, %v1396
      %1402 = vst.msk [vmem:[%s1400 + $0x8] sm:$0x3f] %vm1290, %v1397
    $region72: #{net_forward.1} parent=1 // loop_footer
      %s1143 = sadd.s32 1, %s1139
    $region73: #{net_forward.1} parent=1 // loop_footer_branch
      %1138 = sbr.rel target = $region69
    $region74: #{net_forward.1} parent=1 // loop_exit
      _
    loop: start=0, step=1, limit=7
    $region75: #{net_forward.1} parent=1 // loop_pre_header
      _
    $region76: #{net_forward.1} parent=1 // loop_header
      %s1404 = sphi 0, %s1408
      %p1405 = scmp.ge.s32.totalorder %s1404, 7
    $region77: #{net_forward.1} parent=1 // loop_header_branch
      %1407 = sbr.rel (%p1405) target = $region81
    $region78: #{net_forward.1} parent=1 // loop_body
      %s1409 = smul.u32 %s1404, 2
      %s1410 = smul.u32 %s1409, 16
      %s1411 = scalar_lea.vmem [#allocation4], %s1410
      %v1412 = vld [vmem:[%s1411] sm:$0xff]
      %v1413 = vld [vmem:[%s1411 + $0x8] sm:$0x3f]
      %s1414 = sadd.s32 %s1409, 1
      %s1415 = smul.u32 %s1414, 16
      %s1416 = scalar_lea.vmem [#allocation4], %s1415
      %v1417 = vld [vmem:[%s1416] sm:$0xff]
      %v1418 = vld [vmem:[%s1416 + $0x8] sm:$0x3f]
      %v1419 = vmax.f32 %v1412, %v1417
      %v1420 = vmax.f32 %v1413, %v1418
      %vm1421 = vcmask 113664
      %v1423 = vsel %vm1421, %v751, 0
      %vm1425 = vcmask 1045504
      %v1427 = vsel %vm1425, %v1420, 0
      %1429 = vmatprep.subr.mxu0 0.0
      %1430 = vmatpush1.msra.mxu0 0.0
      %1431 = vmatprep.subr.mxu0 0.0
      %1432 = vmatpush1.msra.mxu0 0.0
      %1433 = vmatprep.subr.mxu0 0.0
      %1434 = vmatpush1.msra.mxu0 0.0
      %1435 = vmatprep.subr.mxu0 0.0
      %1436 = vmatpush1.msra.mxu0 0.0
      %1437 = vmatprep.subr.mxu0 0.0
      %1438 = vmatpush1.msra.mxu0 0.0
      %1439 = vmatprep.subr.mxu0 0.0
      %1440 = vmatpush1.msra.mxu0 0.0
      %1441 = vmatprep.subr.mxu0 0.0
      %1442 = vmatpush1.msra.mxu0 0.0
      %1443 = vmatprep.subr.mxu0 0.0
      %1444 = vmatpush1.msra.mxu0 0.0
      %1445 = vmatprep.subr.mxu0 0.0
      %1446 = vmatpush1.msra.mxu0 0.0
      %1447 = vmatprep.subr.mxu0 0.0
      %1448 = vmatpush1.msra.mxu0 0.0
      %1449 = vmatprep.subr.mxu0 0.0
      %1450 = vmatpush1.msra.mxu0 0.0
      %1451 = vmatprep.subr.mxu0 0.0
      %1452 = vmatpush1.msra.mxu0 0.0
      %1453 = vmatprep.subr.mxu0 0.0
      %1454 = vmatpush1.msra.mxu0 0.0
      %1455 = vmatprep.subr.mxu0 0.0
      %1456 = vmatpush1.msra.mxu0 0.0
      %1457 = vmatprep.subr.mxu0 0.0
      %1458 = vmatpush1.msra.mxu0 %v1427
      %1459 = vmatprep.subr.mxu0 0.0
      %1460 = vmatpush1.msra.mxu0 %v1419
      %1461 = vmatprep.subr.mxu0 0.0
      %1462 = vmatpush2.msra.mxu0 0.0
      %1463 = vmatprep.subr.mxu0 0.0
      %1464 = vmatpush2.msra.mxu0 0.0
      %1465 = vmatprep.subr.mxu0 0.0
      %1466 = vmatpush2.msra.mxu0 0.0
      %1467 = vmatprep.subr.mxu0 0.0
      %1468 = vmatpush2.msra.mxu0 0.0
      %1469 = vmatprep.subr.mxu0 0.0
      %1470 = vmatpush2.msra.mxu0 0.0
      %1471 = vmatprep.subr.mxu0 0.0
      %1472 = vmatpush2.msra.mxu0 0.0
      %1473 = vmatprep.subr.mxu0 0.0
      %1474 = vmatpush2.msra.mxu0 0.0
      %1475 = vmatprep.subr.mxu0 0.0
      %1476 = vmatpush2.msra.mxu0 0.0
      %1477 = vmatprep.subr.mxu0 0.0
      %1478 = vmatpush2.msra.mxu0 0.0
      %1479 = vmatprep.subr.mxu0 0.0
      %1480 = vmatpush2.msra.mxu0 0.0
      %1481 = vmatprep.subr.mxu0 0.0
      %1482 = vmatpush2.msra.mxu0 0.0
      %1483 = vmatprep.subr.mxu0 0.0
      %1484 = vmatpush2.msra.mxu0 0.0
      %1485 = vmatprep.subr.mxu0 0.0
      %1486 = vmatpush2.msra.mxu0 0.0
      %1487 = vmatprep.subr.mxu0 0.0
      %1488 = vmatpush2.msra.mxu0 0.0
      %1489 = vmatprep.subr.mxu0 0.0
      %1490 = vmatpush2.msra.mxu0 0.0
      %1491 = vmatprep.subr.mxu0 0.0
      %1492 = vmatpush2.msra.mxu0 0.0
      %1493 = vmatprep.mubr.f32.mxu0 0.0
      %1494 = vmatmul.mubr.f32.gmra.mxu0 %v1423
      %v1495 = vpop.f32.mrf.mxu0
      %v1496 = vadd.f32 0.0, %v1495
      %v1497 = vpop.f32.mrf.mxu0
      %1498 = vdwg.mxu0
      %v1500 = vsel %vm1421, %v759, 0
      %1502 = vmatprep.subr.mxu0 0.0
      %1503 = vmatpush1.msra.mxu0 0.0
      %1504 = vmatprep.subr.mxu0 0.0
      %1505 = vmatpush1.msra.mxu0 0.0
      %1506 = vmatprep.subr.mxu0 0.0
      %1507 = vmatpush1.msra.mxu0 0.0
      %1508 = vmatprep.subr.mxu0 0.0
      %1509 = vmatpush1.msra.mxu0 0.0
      %1510 = vmatprep.subr.mxu0 0.0
      %1511 = vmatpush1.msra.mxu0 0.0
      %1512 = vmatprep.subr.mxu0 0.0
      %1513 = vmatpush1.msra.mxu0 0.0
      %1514 = vmatprep.subr.mxu0 0.0
      %1515 = vmatpush1.msra.mxu0 0.0
      %1516 = vmatprep.subr.mxu0 0.0
      %1517 = vmatpush1.msra.mxu0 0.0
      %1518 = vmatprep.subr.mxu0 0.0
      %1519 = vmatpush1.msra.mxu0 0.0
      %1520 = vmatprep.subr.mxu0 0.0
      %1521 = vmatpush1.msra.mxu0 0.0
      %1522 = vmatprep.subr.mxu0 0.0
      %1523 = vmatpush1.msra.mxu0 0.0
      %1524 = vmatprep.subr.mxu0 0.0
      %1525 = vmatpush1.msra.mxu0 0.0
      %1526 = vmatprep.subr.mxu0 0.0
      %1527 = vmatpush1.msra.mxu0 0.0
      %1528 = vmatprep.subr.mxu0 0.0
      %1529 = vmatpush1.msra.mxu0 0.0
      %1530 = vmatprep.subr.mxu0 0.0
      %1531 = vmatpush1.msra.mxu0 %v1427
      %1532 = vmatprep.subr.mxu0 0.0
      %1533 = vmatpush1.msra.mxu0 %v1419
      %1534 = vmatprep.subr.mxu0 0.0
      %1535 = vmatpush2.msra.mxu0 0.0
      %1536 = vmatprep.subr.mxu0 0.0
      %1537 = vmatpush2.msra.mxu0 0.0
      %1538 = vmatprep.subr.mxu0 0.0
      %1539 = vmatpush2.msra.mxu0 0.0
      %1540 = vmatprep.subr.mxu0 0.0
      %1541 = vmatpush2.msra.mxu0 0.0
      %1542 = vmatprep.subr.mxu0 0.0
      %1543 = vmatpush2.msra.mxu0 0.0
      %1544 = vmatprep.subr.mxu0 0.0
      %1545 = vmatpush2.msra.mxu0 0.0
      %1546 = vmatprep.subr.mxu0 0.0
      %1547 = vmatpush2.msra.mxu0 0.0
      %1548 = vmatprep.subr.mxu0 0.0
      %1549 = vmatpush2.msra.mxu0 0.0
      %1550 = vmatprep.subr.mxu0 0.0
      %1551 = vmatpush2.msra.mxu0 0.0
      %1552 = vmatprep.subr.mxu0 0.0
      %1553 = vmatpush2.msra.mxu0 0.0
      %1554 = vmatprep.subr.mxu0 0.0
      %1555 = vmatpush2.msra.mxu0 0.0
      %1556 = vmatprep.subr.mxu0 0.0
      %1557 = vmatpush2.msra.mxu0 0.0
      %1558 = vmatprep.subr.mxu0 0.0
      %1559 = vmatpush2.msra.mxu0 0.0
      %1560 = vmatprep.subr.mxu0 0.0
      %1561 = vmatpush2.msra.mxu0 0.0
      %1562 = vmatprep.subr.mxu0 0.0
      %1563 = vmatpush2.msra.mxu0 0.0
      %1564 = vmatprep.subr.mxu0 0.0
      %1565 = vmatpush2.msra.mxu0 0.0
      %1566 = vmatprep.mubr.f32.mxu0 0.0
      %1567 = vmatmul.mubr.f32.gmra.mxu0 %v1500
      %v1568 = vpop.f32.mrf.mxu0
      %v1569 = vadd.f32 0.0, %v1568
      %v1570 = vpop.f32.mrf.mxu0
      %1571 = vdwg.mxu0
      %v1572 = vmax.f32 %v1496, %v1569
      %s1573 = smul.u32 %s1404, 8
      %s1574 = scalar_lea.vmem [#allocation5], %s1573
      %vm1575 = vcmask 129024
      %1576 = vst.msk [vmem:[%s1574] sm:$0x7f] %vm1575, %v1572
      %s1577 = sadd.s32 %s1409, 14
      %s1578 = smul.u32 %s1577, 16
      %s1579 = scalar_lea.vmem [#allocation4], %s1578
      %v1580 = vld [vmem:[%s1579] sm:$0xff]
      %v1581 = vld [vmem:[%s1579 + $0x8] sm:$0x3f]
      %s1582 = sadd.s32 %s1409, 15
      %s1583 = smul.u32 %s1582, 16
      %s1584 = scalar_lea.vmem [#allocation4], %s1583
      %v1585 = vld [vmem:[%s1584] sm:$0xff]
      %v1586 = vld [vmem:[%s1584 + $0x8] sm:$0x3f]
      %v1587 = vmax.f32 %v1580, %v1585
      %v1588 = vmax.f32 %v1581, %v1586
      %v1590 = vsel %vm1425, %v1588, 0
      %1592 = vmatprep.subr.mxu0 0.0
      %1593 = vmatpush1.msra.mxu0 0.0
      %1594 = vmatprep.subr.mxu0 0.0
      %1595 = vmatpush1.msra.mxu0 0.0
      %1596 = vmatprep.subr.mxu0 0.0
      %1597 = vmatpush1.msra.mxu0 0.0
      %1598 = vmatprep.subr.mxu0 0.0
      %1599 = vmatpush1.msra.mxu0 0.0
      %1600 = vmatprep.subr.mxu0 0.0
      %1601 = vmatpush1.msra.mxu0 0.0
      %1602 = vmatprep.subr.mxu0 0.0
      %1603 = vmatpush1.msra.mxu0 0.0
      %1604 = vmatprep.subr.mxu0 0.0
      %1605 = vmatpush1.msra.mxu0 0.0
      %1606 = vmatprep.subr.mxu0 0.0
      %1607 = vmatpush1.msra.mxu0 0.0
      %1608 = vmatprep.subr.mxu0 0.0
      %1609 = vmatpush1.msra.mxu0 0.0
      %1610 = vmatprep.subr.mxu0 0.0
      %1611 = vmatpush1.msra.mxu0 0.0
      %1612 = vmatprep.subr.mxu0 0.0
      %1613 = vmatpush1.msra.mxu0 0.0
      %1614 = vmatprep.subr.mxu0 0.0
      %1615 = vmatpush1.msra.mxu0 0.0
      %1616 = vmatprep.subr.mxu0 0.0
      %1617 = vmatpush1.msra.mxu0 0.0
      %1618 = vmatprep.subr.mxu0 0.0
      %1619 = vmatpush1.msra.mxu0 0.0
      %1620 = vmatprep.subr.mxu0 0.0
      %1621 = vmatpush1.msra.mxu0 %v1590
      %1622 = vmatprep.subr.mxu0 0.0
      %1623 = vmatpush1.msra.mxu0 %v1587
      %1624 = vmatprep.subr.mxu0 0.0
      %1625 = vmatpush2.msra.mxu0 0.0
      %1626 = vmatprep.subr.mxu0 0.0
      %1627 = vmatpush2.msra.mxu0 0.0
      %1628 = vmatprep.subr.mxu0 0.0
      %1629 = vmatpush2.msra.mxu0 0.0
      %1630 = vmatprep.subr.mxu0 0.0
      %1631 = vmatpush2.msra.mxu0 0.0
      %1632 = vmatprep.subr.mxu0 0.0
      %1633 = vmatpush2.msra.mxu0 0.0
      %1634 = vmatprep.subr.mxu0 0.0
      %1635 = vmatpush2.msra.mxu0 0.0
      %1636 = vmatprep.subr.mxu0 0.0
      %1637 = vmatpush2.msra.mxu0 0.0
      %1638 = vmatprep.subr.mxu0 0.0
      %1639 = vmatpush2.msra.mxu0 0.0
      %1640 = vmatprep.subr.mxu0 0.0
      %1641 = vmatpush2.msra.mxu0 0.0
      %1642 = vmatprep.subr.mxu0 0.0
      %1643 = vmatpush2.msra.mxu0 0.0
      %1644 = vmatprep.subr.mxu0 0.0
      %1645 = vmatpush2.msra.mxu0 0.0
      %1646 = vmatprep.subr.mxu0 0.0
      %1647 = vmatpush2.msra.mxu0 0.0
      %1648 = vmatprep.subr.mxu0 0.0
      %1649 = vmatpush2.msra.mxu0 0.0
      %1650 = vmatprep.subr.mxu0 0.0
      %1651 = vmatpush2.msra.mxu0 0.0
      %1652 = vmatprep.subr.mxu0 0.0
      %1653 = vmatpush2.msra.mxu0 0.0
      %1654 = vmatprep.subr.mxu0 0.0
      %1655 = vmatpush2.msra.mxu0 0.0
      %1656 = vmatprep.mubr.f32.mxu0 0.0
      %1657 = vmatmul.mubr.f32.gmra.mxu0 %v1423
      %v1658 = vpop.f32.mrf.mxu0
      %v1659 = vadd.f32 0.0, %v1658
      %v1660 = vpop.f32.mrf.mxu0
      %1661 = vdwg.mxu0
      %1662 = vmatprep.subr.mxu0 0.0
      %1663 = vmatpush1.msra.mxu0 0.0
      %1664 = vmatprep.subr.mxu0 0.0
      %1665 = vmatpush1.msra.mxu0 0.0
      %1666 = vmatprep.subr.mxu0 0.0
      %1667 = vmatpush1.msra.mxu0 0.0
      %1668 = vmatprep.subr.mxu0 0.0
      %1669 = vmatpush1.msra.mxu0 0.0
      %1670 = vmatprep.subr.mxu0 0.0
      %1671 = vmatpush1.msra.mxu0 0.0
      %1672 = vmatprep.subr.mxu0 0.0
      %1673 = vmatpush1.msra.mxu0 0.0
      %1674 = vmatprep.subr.mxu0 0.0
      %1675 = vmatpush1.msra.mxu0 0.0
      %1676 = vmatprep.subr.mxu0 0.0
      %1677 = vmatpush1.msra.mxu0 0.0
      %1678 = vmatprep.subr.mxu0 0.0
      %1679 = vmatpush1.msra.mxu0 0.0
      %1680 = vmatprep.subr.mxu0 0.0
      %1681 = vmatpush1.msra.mxu0 0.0
      %1682 = vmatprep.subr.mxu0 0.0
      %1683 = vmatpush1.msra.mxu0 0.0
      %1684 = vmatprep.subr.mxu0 0.0
      %1685 = vmatpush1.msra.mxu0 0.0
      %1686 = vmatprep.subr.mxu0 0.0
      %1687 = vmatpush1.msra.mxu0 0.0
      %1688 = vmatprep.subr.mxu0 0.0
      %1689 = vmatpush1.msra.mxu0 0.0
      %1690 = vmatprep.subr.mxu0 0.0
      %1691 = vmatpush1.msra.mxu0 %v1590
      %1692 = vmatprep.subr.mxu0 0.0
      %1693 = vmatpush1.msra.mxu0 %v1587
      %1694 = vmatprep.subr.mxu0 0.0
      %1695 = vmatpush2.msra.mxu0 0.0
      %1696 = vmatprep.subr.mxu0 0.0
      %1697 = vmatpush2.msra.mxu0 0.0
      %1698 = vmatprep.subr.mxu0 0.0
      %1699 = vmatpush2.msra.mxu0 0.0
      %1700 = vmatprep.subr.mxu0 0.0
      %1701 = vmatpush2.msra.mxu0 0.0
      %1702 = vmatprep.subr.mxu0 0.0
      %1703 = vmatpush2.msra.mxu0 0.0
      %1704 = vmatprep.subr.mxu0 0.0
      %1705 = vmatpush2.msra.mxu0 0.0
      %1706 = vmatprep.subr.mxu0 0.0
      %1707 = vmatpush2.msra.mxu0 0.0
      %1708 = vmatprep.subr.mxu0 0.0
      %1709 = vmatpush2.msra.mxu0 0.0
      %1710 = vmatprep.subr.mxu0 0.0
      %1711 = vmatpush2.msra.mxu0 0.0
      %1712 = vmatprep.subr.mxu0 0.0
      %1713 = vmatpush2.msra.mxu0 0.0
      %1714 = vmatprep.subr.mxu0 0.0
      %1715 = vmatpush2.msra.mxu0 0.0
      %1716 = vmatprep.subr.mxu0 0.0
      %1717 = vmatpush2.msra.mxu0 0.0
      %1718 = vmatprep.subr.mxu0 0.0
      %1719 = vmatpush2.msra.mxu0 0.0
      %1720 = vmatprep.subr.mxu0 0.0
      %1721 = vmatpush2.msra.mxu0 0.0
      %1722 = vmatprep.subr.mxu0 0.0
      %1723 = vmatpush2.msra.mxu0 0.0
      %1724 = vmatprep.subr.mxu0 0.0
      %1725 = vmatpush2.msra.mxu0 0.0
      %1726 = vmatprep.mubr.f32.mxu0 0.0
      %1727 = vmatmul.mubr.f32.gmra.mxu0 %v1500
      %v1728 = vpop.f32.mrf.mxu0
      %v1729 = vadd.f32 0.0, %v1728
      %v1730 = vpop.f32.mrf.mxu0
      %1731 = vdwg.mxu0
      %v1732 = vmax.f32 %v1659, %v1729
      %s1733 = sadd.s32 %s1404, 7
      %s1734 = smul.u32 %s1733, 8
      %s1735 = scalar_lea.vmem [#allocation5], %s1734
      %1736 = vst.msk [vmem:[%s1735] sm:$0x7f] %vm1575, %v1732
    $region79: #{net_forward.1} parent=1 // loop_footer
      %s1408 = sadd.s32 1, %s1404
    $region80: #{net_forward.1} parent=1 // loop_footer_branch
      %1403 = sbr.rel target = $region76
    $region81: #{net_forward.1} parent=1 // loop_exit
      _
    %v1737 = vld [vmem:[%s5] sm:$0xf]
    %v1738 = vld [vmem:[%s5 + $0x4] sm:$0xf]
    %v1739 = vld [vmem:[%s5 + $0x8] sm:$0xf]
    %v1740 = vld [vmem:[%s5 + $0xc] sm:$0xf]
    %v1741 = vld [vmem:[%s5 + $0x10] sm:$0xf]
    %v1742 = vld [vmem:[%s5 + $0x14] sm:$0xf]
    %v1743 = vld [vmem:[%s5 + $0x18] sm:$0xf]
    %v1744 = vld [vmem:[%s5 + $0x1c] sm:$0xf]
    %v1745 = vld [vmem:[%s5 + $0x20] sm:$0xf]
    %v1746 = vld [vmem:[%s5 + $0x24] sm:$0xf]
    %v1747 = vld [vmem:[%s5 + $0x28] sm:$0xf]
    %v1748 = vld [vmem:[%s5 + $0x2c] sm:$0xf]
    %v1749 = vld [vmem:[%s5 + $0x30] sm:$0xf]
    %v1750 = vld [vmem:[%s5 + $0x34] sm:$0xf]
    %v1751 = vld [vmem:[%s5 + $0x38] sm:$0xf]
    %v1752 = vld [vmem:[%s5 + $0x3c] sm:$0xf]
    %v1753 = vld [vmem:[%s5 + $0x40] sm:$0xf]
    %v1754 = vld [vmem:[%s5 + $0x44] sm:$0xf]
    %v1755 = vld [vmem:[%s6] sm:$0x1]
    %v1756 = vld [vmem:[#allocation5] sm:$0x7f]
    %s1757 = scalar_lea.vmem [#allocation5], 8
    %v1758 = vld [vmem:[%s1757] sm:$0x7f]
    %s1759 = scalar_lea.vmem [#allocation5], 16
    %v1760 = vld [vmem:[%s1759] sm:$0x7f]
    %1762 = vrot.lane.b32.xlu0 %v1758, 16
    %v1763 = vpop.permute.xlu0 %1762
    %1766 = vrot.lane.b32.xlu0 %v1760, 32
    %v1767 = vpop.permute.xlu0 %1766
    %vm1769 = vcmask 130048
    %v1770 = vsel %vm1769, %v1756, %v1763
    %vm1771 = vcmask 261120
    %v1772 = vsel %vm1771, %v1770, %v1767
    %v1774 = vrot.slane %v1772, 1
    %1775 = vrot.lane.b32.xlu0 %v1774, 48
    %v1776 = vpop.permute.xlu0 %1775
    %v1778 = vrot.slane %v1772, 2
    %1779 = vrot.lane.b32.xlu0 %v1778, 96
    %v1780 = vpop.permute.xlu0 %1779
    %vm1782 = vcmask 392192
    %v1783 = vsel %vm1782, %v1772, %v1776
    %vm1784 = vcmask 785408
    %v1785 = vsel %vm1784, %v1783, %v1780
    %v1786 = vpack.c.bf16 %v1785, %v1785
    %v1787 = vpack.c.bf16 %v1780, %v1780
    %v1789 = vlaneseq
    %v1790 = vshrl.u32 %v1789, 7
    %v1791 = vsub.s32 0, %v1790
    %v1792 = vrot.slane %v1755, %v1791
    %v1812 = vunpack.c.l.b16 %v1737
    %v1813 = vunpack.c.l.b16 %v1738
    %v1814 = vunpack.c.l.b16 %v1739
    %v1815 = vunpack.c.l.b16 %v1740
    %v1816 = vunpack.c.l.b16 %v1741
    %v1817 = vunpack.c.l.b16 %v1742
    %v1818 = vunpack.c.l.b16 %v1743
    %v1819 = vunpack.c.l.b16 %v1744
    %v1820 = vunpack.c.l.b16 %v1745
    %v1821 = vunpack.c.l.b16 %v1746
    %v1822 = vunpack.c.l.b16 %v1747
    %v1823 = vunpack.c.l.b16 %v1748
    %v1824 = vunpack.c.l.b16 %v1749
    %v1825 = vunpack.c.l.b16 %v1750
    %v1826 = vunpack.c.l.b16 %v1751
    %v1827 = vunpack.c.l.b16 %v1752
    %v1828 = vunpack.c.l.b16 %v1753
    %v1829 = vunpack.c.l.b16 %v1754
    %v1830 = vpack.c.b16 %v1813, %v1812
    %v1831 = vpack.c.b16 %v1815, %v1814
    %v1832 = vpack.c.b16 %v1817, %v1816
    %v1833 = vpack.c.b16 %v1819, %v1818
    %v1834 = vpack.c.b16 %v1821, %v1820
    %v1835 = vpack.c.b16 %v1823, %v1822
    %v1836 = vpack.c.b16 %v1825, %v1824
    %v1837 = vpack.c.b16 %v1827, %v1826
    %v1838 = vpack.c.b16 %v1829, %v1828
    %v1849 = vsel %vm1769, %v1787, 0
    %1851 = vmatprep.subr.bf16.mxu0 0
    %1852 = vmatpush1.bf16.msra.mxu0 %v1837
    %1853 = vmatprep.subr.bf16.mxu0 0
    %1854 = vmatpush1.bf16.msra.mxu0 %v1836
    %1855 = vmatprep.subr.bf16.mxu0 0
    %1856 = vmatpush1.bf16.msra.mxu0 %v1835
    %1857 = vmatprep.subr.bf16.mxu0 0
    %1858 = vmatpush1.bf16.msra.mxu0 %v1834
    %1859 = vmatprep.subr.bf16.mxu0 0
    %1860 = vmatpush1.bf16.msra.mxu0 %v1833
    %1861 = vmatprep.subr.bf16.mxu0 0
    %1862 = vmatpush1.bf16.msra.mxu0 %v1832
    %1863 = vmatprep.subr.bf16.mxu0 0
    %1864 = vmatpush1.bf16.msra.mxu0 %v1831
    %1865 = vmatprep.subr.bf16.mxu0 0
    %1866 = vmatpush1.bf16.msra.mxu0 %v1830
    %1867 = vmatprep.subr.bf16.mxu0 0
    %1868 = vmatpush2.bf16.msra.mxu0 0
    %1869 = vmatprep.subr.bf16.mxu0 0
    %1870 = vmatpush2.bf16.msra.mxu0 0
    %1871 = vmatprep.subr.bf16.mxu0 0
    %1872 = vmatpush2.bf16.msra.mxu0 0
    %1873 = vmatprep.subr.bf16.mxu0 0
    %1874 = vmatpush2.bf16.msra.mxu0 0
    %1875 = vmatprep.subr.bf16.mxu0 0
    %1876 = vmatpush2.bf16.msra.mxu0 0
    %1877 = vmatprep.subr.bf16.mxu0 0
    %1878 = vmatpush2.bf16.msra.mxu0 0
    %1879 = vmatprep.subr.bf16.mxu0 0
    %1880 = vmatpush2.bf16.msra.mxu0 0
    %1881 = vmatprep.subr.bf16.mxu0 0
    %1882 = vmatpush2.bf16.msra.mxu0 %v1838
    %1883 = vmatprep.mubr.bf16.mxu0 %v1849
    %1884 = vmatmul.mubr.bf16.gmra.mxu0 %v1786
    %v1885 = vpop.f32.mrf.mxu0
    %v1886 = vadd.f32 %v1792, %v1885
    %v1887 = vpop.f32.mrf.mxu0
    %v1888 = vpop.f32.mrf.mxu0
    %v1889 = vpop.f32.mrf.mxu0
    %1890 = vdwg.mxu0
    %v1891 = vmax.f32 %v1886, 0.0
    %s1892 = scalar_lea.vmem [#allocation5], 24
    %v1893 = vld [vmem:[%s1892] sm:$0x7f]
    %1894 = vrot.lane.b32.xlu0 %v1760, 16
    %v1895 = vpop.permute.xlu0 %1894
    %1898 = vrot.lane.b32.xlu0 %v1893, 32
    %v1899 = vpop.permute.xlu0 %1898
    %v1901 = vsel %vm1769, %v1758, %v1895
    %v1902 = vsel %vm1771, %v1901, %v1899
    %v1904 = vrot.slane %v1902, 1
    %1905 = vrot.lane.b32.xlu0 %v1904, 48
    %v1906 = vpop.permute.xlu0 %1905
    %v1908 = vrot.slane %v1902, 2
    %1909 = vrot.lane.b32.xlu0 %v1908, 96
    %v1910 = vpop.permute.xlu0 %1909
    %v1912 = vsel %vm1782, %v1902, %v1906
    %v1913 = vsel %vm1784, %v1912, %v1910
    %v1914 = vpack.c.bf16 %v1913, %v1913
    %v1915 = vpack.c.bf16 %v1910, %v1910
    %v1917 = vsel %vm1769, %v1915, 0
    %1919 = vmatprep.subr.bf16.mxu0 0
    %1920 = vmatpush1.bf16.msra.mxu0 %v1837
    %1921 = vmatprep.subr.bf16.mxu0 0
    %1922 = vmatpush1.bf16.msra.mxu0 %v1836
    %1923 = vmatprep.subr.bf16.mxu0 0
    %1924 = vmatpush1.bf16.msra.mxu0 %v1835
    %1925 = vmatprep.subr.bf16.mxu0 0
    %1926 = vmatpush1.bf16.msra.mxu0 %v1834
    %1927 = vmatprep.subr.bf16.mxu0 0
    %1928 = vmatpush1.bf16.msra.mxu0 %v1833
    %1929 = vmatprep.subr.bf16.mxu0 0
    %1930 = vmatpush1.bf16.msra.mxu0 %v1832
    %1931 = vmatprep.subr.bf16.mxu0 0
    %1932 = vmatpush1.bf16.msra.mxu0 %v1831
    %1933 = vmatprep.subr.bf16.mxu0 0
    %1934 = vmatpush1.bf16.msra.mxu0 %v1830
    %1935 = vmatprep.subr.bf16.mxu0 0
    %1936 = vmatpush2.bf16.msra.mxu0 0
    %1937 = vmatprep.subr.bf16.mxu0 0
    %1938 = vmatpush2.bf16.msra.mxu0 0
    %1939 = vmatprep.subr.bf16.mxu0 0
    %1940 = vmatpush2.bf16.msra.mxu0 0
    %1941 = vmatprep.subr.bf16.mxu0 0
    %1942 = vmatpush2.bf16.msra.mxu0 0
    %1943 = vmatprep.subr.bf16.mxu0 0
    %1944 = vmatpush2.bf16.msra.mxu0 0
    %1945 = vmatprep.subr.bf16.mxu0 0
    %1946 = vmatpush2.bf16.msra.mxu0 0
    %1947 = vmatprep.subr.bf16.mxu0 0
    %1948 = vmatpush2.bf16.msra.mxu0 0
    %1949 = vmatprep.subr.bf16.mxu0 0
    %1950 = vmatpush2.bf16.msra.mxu0 %v1838
    %1951 = vmatprep.mubr.bf16.mxu0 %v1917
    %1952 = vmatmul.mubr.bf16.gmra.mxu0 %v1914
    %v1953 = vpop.f32.mrf.mxu0
    %v1954 = vadd.f32 %v1792, %v1953
    %v1955 = vpop.f32.mrf.mxu0
    %v1956 = vpop.f32.mrf.mxu0
    %v1957 = vpop.f32.mrf.mxu0
    %1958 = vdwg.mxu0
    %v1959 = vmax.f32 %v1954, 0.0
    %s1960 = scalar_lea.vmem [#allocation5], 32
    %v1961 = vld [vmem:[%s1960] sm:$0x7f]
    %1962 = vrot.lane.b32.xlu0 %v1893, 16
    %v1963 = vpop.permute.xlu0 %1962
    %1966 = vrot.lane.b32.xlu0 %v1961, 32
    %v1967 = vpop.permute.xlu0 %1966
    %v1969 = vsel %vm1769, %v1760, %v1963
    %v1970 = vsel %vm1771, %v1969, %v1967
    %v1972 = vrot.slane %v1970, 1
    %1973 = vrot.lane.b32.xlu0 %v1972, 48
    %v1974 = vpop.permute.xlu0 %1973
    %v1976 = vrot.slane %v1970, 2
    %1977 = vrot.lane.b32.xlu0 %v1976, 96
    %v1978 = vpop.permute.xlu0 %1977
    %v1980 = vsel %vm1782, %v1970, %v1974
    %v1981 = vsel %vm1784, %v1980, %v1978
    %v1982 = vpack.c.bf16 %v1981, %v1981
    %v1983 = vpack.c.bf16 %v1978, %v1978
    %v1985 = vsel %vm1769, %v1983, 0
    %1987 = vmatprep.subr.bf16.mxu0 0
    %1988 = vmatpush1.bf16.msra.mxu0 %v1837
    %1989 = vmatprep.subr.bf16.mxu0 0
    %1990 = vmatpush1.bf16.msra.mxu0 %v1836
    %1991 = vmatprep.subr.bf16.mxu0 0
    %1992 = vmatpush1.bf16.msra.mxu0 %v1835
    %1993 = vmatprep.subr.bf16.mxu0 0
    %1994 = vmatpush1.bf16.msra.mxu0 %v1834
    %1995 = vmatprep.subr.bf16.mxu0 0
    %1996 = vmatpush1.bf16.msra.mxu0 %v1833
    %1997 = vmatprep.subr.bf16.mxu0 0
    %1998 = vmatpush1.bf16.msra.mxu0 %v1832
    %1999 = vmatprep.subr.bf16.mxu0 0
    %2000 = vmatpush1.bf16.msra.mxu0 %v1831
    %2001 = vmatprep.subr.bf16.mxu0 0
    %2002 = vmatpush1.bf16.msra.mxu0 %v1830
    %2003 = vmatprep.subr.bf16.mxu0 0
    %2004 = vmatpush2.bf16.msra.mxu0 0
    %2005 = vmatprep.subr.bf16.mxu0 0
    %2006 = vmatpush2.bf16.msra.mxu0 0
    %2007 = vmatprep.subr.bf16.mxu0 0
    %2008 = vmatpush2.bf16.msra.mxu0 0
    %2009 = vmatprep.subr.bf16.mxu0 0
    %2010 = vmatpush2.bf16.msra.mxu0 0
    %2011 = vmatprep.subr.bf16.mxu0 0
    %2012 = vmatpush2.bf16.msra.mxu0 0
    %2013 = vmatprep.subr.bf16.mxu0 0
    %2014 = vmatpush2.bf16.msra.mxu0 0
    %2015 = vmatprep.subr.bf16.mxu0 0
    %2016 = vmatpush2.bf16.msra.mxu0 0
    %2017 = vmatprep.subr.bf16.mxu0 0
    %2018 = vmatpush2.bf16.msra.mxu0 %v1838
    %2019 = vmatprep.mubr.bf16.mxu0 %v1985
    %2020 = vmatmul.mubr.bf16.gmra.mxu0 %v1982
    %v2021 = vpop.f32.mrf.mxu0
    %v2022 = vadd.f32 %v1792, %v2021
    %v2023 = vpop.f32.mrf.mxu0
    %v2024 = vpop.f32.mrf.mxu0
    %v2025 = vpop.f32.mrf.mxu0
    %2026 = vdwg.mxu0
    %v2027 = vmax.f32 %v2022, 0.0
    %s2028 = scalar_lea.vmem [#allocation5], 40
    %v2029 = vld [vmem:[%s2028] sm:$0x7f]
    %2030 = vrot.lane.b32.xlu0 %v1961, 16
    %v2031 = vpop.permute.xlu0 %2030
    %2034 = vrot.lane.b32.xlu0 %v2029, 32
    %v2035 = vpop.permute.xlu0 %2034
    %v2037 = vsel %vm1769, %v1893, %v2031
    %v2038 = vsel %vm1771, %v2037, %v2035
    %v2040 = vrot.slane %v2038, 1
    %2041 = vrot.lane.b32.xlu0 %v2040, 48
    %v2042 = vpop.permute.xlu0 %2041
    %v2044 = vrot.slane %v2038, 2
    %2045 = vrot.lane.b32.xlu0 %v2044, 96
    %v2046 = vpop.permute.xlu0 %2045
    %v2048 = vsel %vm1782, %v2038, %v2042
    %v2049 = vsel %vm1784, %v2048, %v2046
    %v2050 = vpack.c.bf16 %v2049, %v2049
    %v2051 = vpack.c.bf16 %v2046, %v2046
    %v2053 = vsel %vm1769, %v2051, 0
    %2055 = vmatprep.subr.bf16.mxu0 0
    %2056 = vmatpush1.bf16.msra.mxu0 %v1837
    %2057 = vmatprep.subr.bf16.mxu0 0
    %2058 = vmatpush1.bf16.msra.mxu0 %v1836
    %2059 = vmatprep.subr.bf16.mxu0 0
    %2060 = vmatpush1.bf16.msra.mxu0 %v1835
    %2061 = vmatprep.subr.bf16.mxu0 0
    %2062 = vmatpush1.bf16.msra.mxu0 %v1834
    %2063 = vmatprep.subr.bf16.mxu0 0
    %2064 = vmatpush1.bf16.msra.mxu0 %v1833
    %2065 = vmatprep.subr.bf16.mxu0 0
    %2066 = vmatpush1.bf16.msra.mxu0 %v1832
    %2067 = vmatprep.subr.bf16.mxu0 0
    %2068 = vmatpush1.bf16.msra.mxu0 %v1831
    %2069 = vmatprep.subr.bf16.mxu0 0
    %2070 = vmatpush1.bf16.msra.mxu0 %v1830
    %2071 = vmatprep.subr.bf16.mxu0 0
    %2072 = vmatpush2.bf16.msra.mxu0 0
    %2073 = vmatprep.subr.bf16.mxu0 0
    %2074 = vmatpush2.bf16.msra.mxu0 0
    %2075 = vmatprep.subr.bf16.mxu0 0
    %2076 = vmatpush2.bf16.msra.mxu0 0
    %2077 = vmatprep.subr.bf16.mxu0 0
    %2078 = vmatpush2.bf16.msra.mxu0 0
    %2079 = vmatprep.subr.bf16.mxu0 0
    %2080 = vmatpush2.bf16.msra.mxu0 0
    %2081 = vmatprep.subr.bf16.mxu0 0
    %2082 = vmatpush2.bf16.msra.mxu0 0
    %2083 = vmatprep.subr.bf16.mxu0 0
    %2084 = vmatpush2.bf16.msra.mxu0 0
    %2085 = vmatprep.subr.bf16.mxu0 0
    %2086 = vmatpush2.bf16.msra.mxu0 %v1838
    %2087 = vmatprep.mubr.bf16.mxu0 %v2053
    %2088 = vmatmul.mubr.bf16.gmra.mxu0 %v2050
    %v2089 = vpop.f32.mrf.mxu0
    %v2090 = vadd.f32 %v1792, %v2089
    %v2091 = vpop.f32.mrf.mxu0
    %v2092 = vpop.f32.mrf.mxu0
    %v2093 = vpop.f32.mrf.mxu0
    %2094 = vdwg.mxu0
    %v2095 = vmax.f32 %v2090, 0.0
    %s2096 = scalar_lea.vmem [#allocation5], 48
    %v2097 = vld [vmem:[%s2096] sm:$0x7f]
    %2098 = vrot.lane.b32.xlu0 %v2029, 16
    %v2099 = vpop.permute.xlu0 %2098
    %2102 = vrot.lane.b32.xlu0 %v2097, 32
    %v2103 = vpop.permute.xlu0 %2102
    %v2105 = vsel %vm1769, %v1961, %v2099
    %v2106 = vsel %vm1771, %v2105, %v2103
    %v2108 = vrot.slane %v2106, 1
    %2109 = vrot.lane.b32.xlu0 %v2108, 48
    %v2110 = vpop.permute.xlu0 %2109
    %v2112 = vrot.slane %v2106, 2
    %2113 = vrot.lane.b32.xlu0 %v2112, 96
    %v2114 = vpop.permute.xlu0 %2113
    %v2116 = vsel %vm1782, %v2106, %v2110
    %v2117 = vsel %vm1784, %v2116, %v2114
    %v2118 = vpack.c.bf16 %v2117, %v2117
    %v2119 = vpack.c.bf16 %v2114, %v2114
    %v2121 = vsel %vm1769, %v2119, 0
    %2123 = vmatprep.subr.bf16.mxu0 0
    %2124 = vmatpush1.bf16.msra.mxu0 %v1837
    %2125 = vmatprep.subr.bf16.mxu0 0
    %2126 = vmatpush1.bf16.msra.mxu0 %v1836
    %2127 = vmatprep.subr.bf16.mxu0 0
    %2128 = vmatpush1.bf16.msra.mxu0 %v1835
    %2129 = vmatprep.subr.bf16.mxu0 0
    %2130 = vmatpush1.bf16.msra.mxu0 %v1834
    %2131 = vmatprep.subr.bf16.mxu0 0
    %2132 = vmatpush1.bf16.msra.mxu0 %v1833
    %2133 = vmatprep.subr.bf16.mxu0 0
    %2134 = vmatpush1.bf16.msra.mxu0 %v1832
    %2135 = vmatprep.subr.bf16.mxu0 0
    %2136 = vmatpush1.bf16.msra.mxu0 %v1831
    %2137 = vmatprep.subr.bf16.mxu0 0
    %2138 = vmatpush1.bf16.msra.mxu0 %v1830
    %2139 = vmatprep.subr.bf16.mxu0 0
    %2140 = vmatpush2.bf16.msra.mxu0 0
    %2141 = vmatprep.subr.bf16.mxu0 0
    %2142 = vmatpush2.bf16.msra.mxu0 0
    %2143 = vmatprep.subr.bf16.mxu0 0
    %2144 = vmatpush2.bf16.msra.mxu0 0
    %2145 = vmatprep.subr.bf16.mxu0 0
    %2146 = vmatpush2.bf16.msra.mxu0 0
    %2147 = vmatprep.subr.bf16.mxu0 0
    %2148 = vmatpush2.bf16.msra.mxu0 0
    %2149 = vmatprep.subr.bf16.mxu0 0
    %2150 = vmatpush2.bf16.msra.mxu0 0
    %2151 = vmatprep.subr.bf16.mxu0 0
    %2152 = vmatpush2.bf16.msra.mxu0 0
    %2153 = vmatprep.subr.bf16.mxu0 0
    %2154 = vmatpush2.bf16.msra.mxu0 %v1838
    %2155 = vmatprep.mubr.bf16.mxu0 %v2121
    %2156 = vmatmul.mubr.bf16.gmra.mxu0 %v2118
    %v2157 = vpop.f32.mrf.mxu0
    %v2158 = vadd.f32 %v1792, %v2157
    %v2159 = vpop.f32.mrf.mxu0
    %v2160 = vpop.f32.mrf.mxu0
    %v2161 = vpop.f32.mrf.mxu0
    %2162 = vdwg.mxu0
    %v2163 = vmax.f32 %v2158, 0.0
    %v2165 = vrot.slane %v1891, 1
    %2166 = vrot.lane.b32.xlu0 %v2165, 32
    %v2167 = vpop.permute.xlu0 %2166
    %v2169 = vrot.slane %v1891, 2
    %2170 = vrot.lane.b32.xlu0 %v2169, 64
    %v2171 = vpop.permute.xlu0 %2170
    %v2173 = vrot.slane %v1891, 3
    %2174 = vrot.lane.b32.xlu0 %v2173, 96
    %v2175 = vpop.permute.xlu0 %2174
    %v2177 = vrot.slane %v1891, 4
    %2180 = vrot.lane.b32.xlu0 %v1959, 32
    %v2181 = vpop.permute.xlu0 %2180
    %v2183 = vrot.slane %v1959, 1
    %2184 = vrot.lane.b32.xlu0 %v2183, 64
    %v2185 = vpop.permute.xlu0 %2184
    %v2187 = vrot.slane %v1959, 2
    %2188 = vrot.lane.b32.xlu0 %v2187, 96
    %v2189 = vpop.permute.xlu0 %2188
    %v2191 = vrot.slane %v1959, 3
    %v2193 = vrot.slane %v1959, 4
    %2194 = vrot.lane.b32.xlu0 %v2193, 32
    %v2195 = vpop.permute.xlu0 %2194
    %2198 = vrot.lane.b32.xlu0 %v2027, 64
    %v2199 = vpop.permute.xlu0 %2198
    %v2201 = vrot.slane %v2027, 1
    %2202 = vrot.lane.b32.xlu0 %v2201, 96
    %v2203 = vpop.permute.xlu0 %2202
    %v2205 = vrot.slane %v2027, 2
    %v2207 = vrot.slane %v2027, 3
    %2208 = vrot.lane.b32.xlu0 %v2207, 32
    %v2209 = vpop.permute.xlu0 %2208
    %v2211 = vrot.slane %v2027, 4
    %2212 = vrot.lane.b32.xlu0 %v2211, 64
    %v2213 = vpop.permute.xlu0 %2212
    %2216 = vrot.lane.b32.xlu0 %v2095, 96
    %v2217 = vpop.permute.xlu0 %2216
    %v2219 = vsel %vm1771, %v1891, %v2167
    %vm2220 = vcmask 523264
    %v2221 = vsel %vm2220, %v2219, %v2171
    %v2222 = vsel %vm1784, %v2221, %v2175
    %v2223 = vsel %vm1771, %v2177, %v2181
    %v2224 = vsel %vm2220, %v2223, %v2185
    %v2225 = vsel %vm1784, %v2224, %v2189
    %v2226 = vsel %vm1771, %v2191, %v2195
    %v2227 = vsel %vm2220, %v2226, %v2199
    %v2228 = vsel %vm1784, %v2227, %v2203
    %v2229 = vsel %vm1771, %v2205, %v2209
    %v2230 = vsel %vm2220, %v2229, %v2213
    %v2231 = vsel %vm1784, %v2230, %v2217
    %v2232 = vrot.slane %v2095, 1
    %2233 = vrot.lane.b32.xlu0 %v2232, 32
    %v2234 = vpop.permute.xlu0 %2233
    %v2236 = vrot.slane %v2095, 2
    %2237 = vrot.lane.b32.xlu0 %v2236, 64
    %v2238 = vpop.permute.xlu0 %2237
    %v2240 = vrot.slane %v2095, 3
    %2241 = vrot.lane.b32.xlu0 %v2240, 96
    %v2242 = vpop.permute.xlu0 %2241
    %v2245 = vrot.slane %v2163, 7
    %2247 = vrot.lane.b32.xlu0 %v2163, 32
    %v2248 = vpop.permute.xlu0 %2247
    %v2250 = vrot.slane %v2163, 1
    %2251 = vrot.lane.b32.xlu0 %v2250, 64
    %v2252 = vpop.permute.xlu0 %2251
    %v2254 = vrot.slane %v2163, 2
    %2255 = vrot.lane.b32.xlu0 %v2254, 96
    %v2256 = vpop.permute.xlu0 %2255
    %v2258 = vrot.slane %v2163, 3
    %v2259 = vsel %vm1771, %v2095, %v2234
    %v2260 = vsel %vm2220, %v2259, %v2238
    %v2261 = vsel %vm1784, %v2260, %v2242
    %v2262 = vsel %vm1771, %v2245, %v2248
    %v2263 = vsel %vm2220, %v2262, %v2252
    %v2264 = vsel %vm1784, %v2263, %v2256
    %v2267 = vrot.slane %v2261, 1
    %v2268 = vrot.slane %v2264, 1
    %v2269 = vrot.slane %v2258, 1
    %s2273 = scalar_lea.vmem [#allocation5], 56
    %v2274 = vld [vmem:[%s2273] sm:$0x7f]
    %s2275 = scalar_lea.vmem [#allocation5], 64
    %v2276 = vld [vmem:[%s2275] sm:$0x7f]
    %s2277 = scalar_lea.vmem [#allocation5], 72
    %v2278 = vld [vmem:[%s2277] sm:$0x7f]
    %2280 = vrot.lane.b32.xlu0 %v2276, 16
    %v2281 = vpop.permute.xlu0 %2280
    %2284 = vrot.lane.b32.xlu0 %v2278, 32
    %v2285 = vpop.permute.xlu0 %2284
    %v2287 = vsel %vm1769, %v2274, %v2281
    %v2288 = vsel %vm1771, %v2287, %v2285
    %v2290 = vrot.slane %v2288, 1
    %2291 = vrot.lane.b32.xlu0 %v2290, 48
    %v2292 = vpop.permute.xlu0 %2291
    %v2294 = vrot.slane %v2288, 2
    %2295 = vrot.lane.b32.xlu0 %v2294, 96
    %v2296 = vpop.permute.xlu0 %2295
    %v2298 = vsel %vm1782, %v2288, %v2292
    %v2299 = vsel %vm1784, %v2298, %v2296
    %v2300 = vpack.c.bf16 %v2299, %v2299
    %v2301 = vpack.c.bf16 %v2296, %v2296
    %v2303 = vsel %vm1769, %v2301, 0
    %2305 = vmatprep.subr.bf16.mxu0 0
    %2306 = vmatpush1.bf16.msra.mxu0 %v1837
    %2307 = vmatprep.subr.bf16.mxu0 0
    %2308 = vmatpush1.bf16.msra.mxu0 %v1836
    %2309 = vmatprep.subr.bf16.mxu0 0
    %2310 = vmatpush1.bf16.msra.mxu0 %v1835
    %2311 = vmatprep.subr.bf16.mxu0 0
    %2312 = vmatpush1.bf16.msra.mxu0 %v1834
    %2313 = vmatprep.subr.bf16.mxu0 0
    %2314 = vmatpush1.bf16.msra.mxu0 %v1833
    %2315 = vmatprep.subr.bf16.mxu0 0
    %2316 = vmatpush1.bf16.msra.mxu0 %v1832
    %2317 = vmatprep.subr.bf16.mxu0 0
    %2318 = vmatpush1.bf16.msra.mxu0 %v1831
    %2319 = vmatprep.subr.bf16.mxu0 0
    %2320 = vmatpush1.bf16.msra.mxu0 %v1830
    %2321 = vmatprep.subr.bf16.mxu0 0
    %2322 = vmatpush2.bf16.msra.mxu0 0
    %2323 = vmatprep.subr.bf16.mxu0 0
    %2324 = vmatpush2.bf16.msra.mxu0 0
    %2325 = vmatprep.subr.bf16.mxu0 0
    %2326 = vmatpush2.bf16.msra.mxu0 0
    %2327 = vmatprep.subr.bf16.mxu0 0
    %2328 = vmatpush2.bf16.msra.mxu0 0
    %2329 = vmatprep.subr.bf16.mxu0 0
    %2330 = vmatpush2.bf16.msra.mxu0 0
    %2331 = vmatprep.subr.bf16.mxu0 0
    %2332 = vmatpush2.bf16.msra.mxu0 0
    %2333 = vmatprep.subr.bf16.mxu0 0
    %2334 = vmatpush2.bf16.msra.mxu0 0
    %2335 = vmatprep.subr.bf16.mxu0 0
    %2336 = vmatpush2.bf16.msra.mxu0 %v1838
    %2337 = vmatprep.mubr.bf16.mxu0 %v2303
    %2338 = vmatmul.mubr.bf16.gmra.mxu0 %v2300
    %v2339 = vpop.f32.mrf.mxu0
    %v2340 = vadd.f32 %v1792, %v2339
    %v2341 = vpop.f32.mrf.mxu0
    %v2342 = vpop.f32.mrf.mxu0
    %v2343 = vpop.f32.mrf.mxu0
    %2344 = vdwg.mxu0
    %v2345 = vmax.f32 %v2340, 0.0
    %s2346 = scalar_lea.vmem [#allocation5], 80
    %v2347 = vld [vmem:[%s2346] sm:$0x7f]
    %2348 = vrot.lane.b32.xlu0 %v2278, 16
    %v2349 = vpop.permute.xlu0 %2348
    %2352 = vrot.lane.b32.xlu0 %v2347, 32
    %v2353 = vpop.permute.xlu0 %2352
    %v2355 = vsel %vm1769, %v2276, %v2349
    %v2356 = vsel %vm1771, %v2355, %v2353
    %v2358 = vrot.slane %v2356, 1
    %2359 = vrot.lane.b32.xlu0 %v2358, 48
    %v2360 = vpop.permute.xlu0 %2359
    %v2362 = vrot.slane %v2356, 2
    %2363 = vrot.lane.b32.xlu0 %v2362, 96
    %v2364 = vpop.permute.xlu0 %2363
    %v2366 = vsel %vm1782, %v2356, %v2360
    %v2367 = vsel %vm1784, %v2366, %v2364
    %v2368 = vpack.c.bf16 %v2367, %v2367
    %v2369 = vpack.c.bf16 %v2364, %v2364
    %v2371 = vsel %vm1769, %v2369, 0
    %2373 = vmatprep.subr.bf16.mxu0 0
    %2374 = vmatpush1.bf16.msra.mxu0 %v1837
    %2375 = vmatprep.subr.bf16.mxu0 0
    %2376 = vmatpush1.bf16.msra.mxu0 %v1836
    %2377 = vmatprep.subr.bf16.mxu0 0
    %2378 = vmatpush1.bf16.msra.mxu0 %v1835
    %2379 = vmatprep.subr.bf16.mxu0 0
    %2380 = vmatpush1.bf16.msra.mxu0 %v1834
    %2381 = vmatprep.subr.bf16.mxu0 0
    %2382 = vmatpush1.bf16.msra.mxu0 %v1833
    %2383 = vmatprep.subr.bf16.mxu0 0
    %2384 = vmatpush1.bf16.msra.mxu0 %v1832
    %2385 = vmatprep.subr.bf16.mxu0 0
    %2386 = vmatpush1.bf16.msra.mxu0 %v1831
    %2387 = vmatprep.subr.bf16.mxu0 0
    %2388 = vmatpush1.bf16.msra.mxu0 %v1830
    %2389 = vmatprep.subr.bf16.mxu0 0
    %2390 = vmatpush2.bf16.msra.mxu0 0
    %2391 = vmatprep.subr.bf16.mxu0 0
    %2392 = vmatpush2.bf16.msra.mxu0 0
    %2393 = vmatprep.subr.bf16.mxu0 0
    %2394 = vmatpush2.bf16.msra.mxu0 0
    %2395 = vmatprep.subr.bf16.mxu0 0
    %2396 = vmatpush2.bf16.msra.mxu0 0
    %2397 = vmatprep.subr.bf16.mxu0 0
    %2398 = vmatpush2.bf16.msra.mxu0 0
    %2399 = vmatprep.subr.bf16.mxu0 0
    %2400 = vmatpush2.bf16.msra.mxu0 0
    %2401 = vmatprep.subr.bf16.mxu0 0
    %2402 = vmatpush2.bf16.msra.mxu0 0
    %2403 = vmatprep.subr.bf16.mxu0 0
    %2404 = vmatpush2.bf16.msra.mxu0 %v1838
    %2405 = vmatprep.mubr.bf16.mxu0 %v2371
    %2406 = vmatmul.mubr.bf16.gmra.mxu0 %v2368
    %v2407 = vpop.f32.mrf.mxu0
    %v2408 = vadd.f32 %v1792, %v2407
    %v2409 = vpop.f32.mrf.mxu0
    %v2410 = vpop.f32.mrf.mxu0
    %v2411 = vpop.f32.mrf.mxu0
    %2412 = vdwg.mxu0
    %v2413 = vmax.f32 %v2408, 0.0
    %s2414 = scalar_lea.vmem [#allocation5], 88
    %v2415 = vld [vmem:[%s2414] sm:$0x7f]
    %2416 = vrot.lane.b32.xlu0 %v2347, 16
    %v2417 = vpop.permute.xlu0 %2416
    %2420 = vrot.lane.b32.xlu0 %v2415, 32
    %v2421 = vpop.permute.xlu0 %2420
    %v2423 = vsel %vm1769, %v2278, %v2417
    %v2424 = vsel %vm1771, %v2423, %v2421
    %v2426 = vrot.slane %v2424, 1
    %2427 = vrot.lane.b32.xlu0 %v2426, 48
    %v2428 = vpop.permute.xlu0 %2427
    %v2430 = vrot.slane %v2424, 2
    %2431 = vrot.lane.b32.xlu0 %v2430, 96
    %v2432 = vpop.permute.xlu0 %2431
    %v2434 = vsel %vm1782, %v2424, %v2428
    %v2435 = vsel %vm1784, %v2434, %v2432
    %v2436 = vpack.c.bf16 %v2435, %v2435
    %v2437 = vpack.c.bf16 %v2432, %v2432
    %v2439 = vsel %vm1769, %v2437, 0
    %2441 = vmatprep.subr.bf16.mxu0 0
    %2442 = vmatpush1.bf16.msra.mxu0 %v1837
    %2443 = vmatprep.subr.bf16.mxu0 0
    %2444 = vmatpush1.bf16.msra.mxu0 %v1836
    %2445 = vmatprep.subr.bf16.mxu0 0
    %2446 = vmatpush1.bf16.msra.mxu0 %v1835
    %2447 = vmatprep.subr.bf16.mxu0 0
    %2448 = vmatpush1.bf16.msra.mxu0 %v1834
    %2449 = vmatprep.subr.bf16.mxu0 0
    %2450 = vmatpush1.bf16.msra.mxu0 %v1833
    %2451 = vmatprep.subr.bf16.mxu0 0
    %2452 = vmatpush1.bf16.msra.mxu0 %v1832
    %2453 = vmatprep.subr.bf16.mxu0 0
    %2454 = vmatpush1.bf16.msra.mxu0 %v1831
    %2455 = vmatprep.subr.bf16.mxu0 0
    %2456 = vmatpush1.bf16.msra.mxu0 %v1830
    %2457 = vmatprep.subr.bf16.mxu0 0
    %2458 = vmatpush2.bf16.msra.mxu0 0
    %2459 = vmatprep.subr.bf16.mxu0 0
    %2460 = vmatpush2.bf16.msra.mxu0 0
    %2461 = vmatprep.subr.bf16.mxu0 0
    %2462 = vmatpush2.bf16.msra.mxu0 0
    %2463 = vmatprep.subr.bf16.mxu0 0
    %2464 = vmatpush2.bf16.msra.mxu0 0
    %2465 = vmatprep.subr.bf16.mxu0 0
    %2466 = vmatpush2.bf16.msra.mxu0 0
    %2467 = vmatprep.subr.bf16.mxu0 0
    %2468 = vmatpush2.bf16.msra.mxu0 0
    %2469 = vmatprep.subr.bf16.mxu0 0
    %2470 = vmatpush2.bf16.msra.mxu0 0
    %2471 = vmatprep.subr.bf16.mxu0 0
    %2472 = vmatpush2.bf16.msra.mxu0 %v1838
    %2473 = vmatprep.mubr.bf16.mxu0 %v2439
    %2474 = vmatmul.mubr.bf16.gmra.mxu0 %v2436
    %v2475 = vpop.f32.mrf.mxu0
    %v2476 = vadd.f32 %v1792, %v2475
    %v2477 = vpop.f32.mrf.mxu0
    %v2478 = vpop.f32.mrf.mxu0
    %v2479 = vpop.f32.mrf.mxu0
    %2480 = vdwg.mxu0
    %v2481 = vmax.f32 %v2476, 0.0
    %s2482 = scalar_lea.vmem [#allocation5], 96
    %v2483 = vld [vmem:[%s2482] sm:$0x7f]
    %2484 = vrot.lane.b32.xlu0 %v2415, 16
    %v2485 = vpop.permute.xlu0 %2484
    %2488 = vrot.lane.b32.xlu0 %v2483, 32
    %v2489 = vpop.permute.xlu0 %2488
    %v2491 = vsel %vm1769, %v2347, %v2485
    %v2492 = vsel %vm1771, %v2491, %v2489
    %v2494 = vrot.slane %v2492, 1
    %2495 = vrot.lane.b32.xlu0 %v2494, 48
    %v2496 = vpop.permute.xlu0 %2495
    %v2498 = vrot.slane %v2492, 2
    %2499 = vrot.lane.b32.xlu0 %v2498, 96
    %v2500 = vpop.permute.xlu0 %2499
    %v2502 = vsel %vm1782, %v2492, %v2496
    %v2503 = vsel %vm1784, %v2502, %v2500
    %v2504 = vpack.c.bf16 %v2503, %v2503
    %v2505 = vpack.c.bf16 %v2500, %v2500
    %v2507 = vsel %vm1769, %v2505, 0
    %2509 = vmatprep.subr.bf16.mxu0 0
    %2510 = vmatpush1.bf16.msra.mxu0 %v1837
    %2511 = vmatprep.subr.bf16.mxu0 0
    %2512 = vmatpush1.bf16.msra.mxu0 %v1836
    %2513 = vmatprep.subr.bf16.mxu0 0
    %2514 = vmatpush1.bf16.msra.mxu0 %v1835
    %2515 = vmatprep.subr.bf16.mxu0 0
    %2516 = vmatpush1.bf16.msra.mxu0 %v1834
    %2517 = vmatprep.subr.bf16.mxu0 0
    %2518 = vmatpush1.bf16.msra.mxu0 %v1833
    %2519 = vmatprep.subr.bf16.mxu0 0
    %2520 = vmatpush1.bf16.msra.mxu0 %v1832
    %2521 = vmatprep.subr.bf16.mxu0 0
    %2522 = vmatpush1.bf16.msra.mxu0 %v1831
    %2523 = vmatprep.subr.bf16.mxu0 0
    %2524 = vmatpush1.bf16.msra.mxu0 %v1830
    %2525 = vmatprep.subr.bf16.mxu0 0
    %2526 = vmatpush2.bf16.msra.mxu0 0
    %2527 = vmatprep.subr.bf16.mxu0 0
    %2528 = vmatpush2.bf16.msra.mxu0 0
    %2529 = vmatprep.subr.bf16.mxu0 0
    %2530 = vmatpush2.bf16.msra.mxu0 0
    %2531 = vmatprep.subr.bf16.mxu0 0
    %2532 = vmatpush2.bf16.msra.mxu0 0
    %2533 = vmatprep.subr.bf16.mxu0 0
    %2534 = vmatpush2.bf16.msra.mxu0 0
    %2535 = vmatprep.subr.bf16.mxu0 0
    %2536 = vmatpush2.bf16.msra.mxu0 0
    %2537 = vmatprep.subr.bf16.mxu0 0
    %2538 = vmatpush2.bf16.msra.mxu0 0
    %2539 = vmatprep.subr.bf16.mxu0 0
    %2540 = vmatpush2.bf16.msra.mxu0 %v1838
    %2541 = vmatprep.mubr.bf16.mxu0 %v2507
    %2542 = vmatmul.mubr.bf16.gmra.mxu0 %v2504
    %v2543 = vpop.f32.mrf.mxu0
    %v2544 = vadd.f32 %v1792, %v2543
    %v2545 = vpop.f32.mrf.mxu0
    %v2546 = vpop.f32.mrf.mxu0
    %v2547 = vpop.f32.mrf.mxu0
    %2548 = vdwg.mxu0
    %v2549 = vmax.f32 %v2544, 0.0
    %s2550 = scalar_lea.vmem [#allocation5], 104
    %v2551 = vld [vmem:[%s2550] sm:$0x7f]
    %2552 = vrot.lane.b32.xlu0 %v2483, 16
    %v2553 = vpop.permute.xlu0 %2552
    %2556 = vrot.lane.b32.xlu0 %v2551, 32
    %v2557 = vpop.permute.xlu0 %2556
    %v2559 = vsel %vm1769, %v2415, %v2553
    %v2560 = vsel %vm1771, %v2559, %v2557
    %v2562 = vrot.slane %v2560, 1
    %2563 = vrot.lane.b32.xlu0 %v2562, 48
    %v2564 = vpop.permute.xlu0 %2563
    %v2566 = vrot.slane %v2560, 2
    %2567 = vrot.lane.b32.xlu0 %v2566, 96
    %v2568 = vpop.permute.xlu0 %2567
    %v2570 = vsel %vm1782, %v2560, %v2564
    %v2571 = vsel %vm1784, %v2570, %v2568
    %v2572 = vpack.c.bf16 %v2571, %v2571
    %v2573 = vpack.c.bf16 %v2568, %v2568
    %v2575 = vsel %vm1769, %v2573, 0
    %2577 = vmatprep.subr.bf16.mxu0 0
    %2578 = vmatpush1.bf16.msra.mxu0 %v1837
    %2579 = vmatprep.subr.bf16.mxu0 0
    %2580 = vmatpush1.bf16.msra.mxu0 %v1836
    %2581 = vmatprep.subr.bf16.mxu0 0
    %2582 = vmatpush1.bf16.msra.mxu0 %v1835
    %2583 = vmatprep.subr.bf16.mxu0 0
    %2584 = vmatpush1.bf16.msra.mxu0 %v1834
    %2585 = vmatprep.subr.bf16.mxu0 0
    %2586 = vmatpush1.bf16.msra.mxu0 %v1833
    %2587 = vmatprep.subr.bf16.mxu0 0
    %2588 = vmatpush1.bf16.msra.mxu0 %v1832
    %2589 = vmatprep.subr.bf16.mxu0 0
    %2590 = vmatpush1.bf16.msra.mxu0 %v1831
    %2591 = vmatprep.subr.bf16.mxu0 0
    %2592 = vmatpush1.bf16.msra.mxu0 %v1830
    %2593 = vmatprep.subr.bf16.mxu0 0
    %2594 = vmatpush2.bf16.msra.mxu0 0
    %2595 = vmatprep.subr.bf16.mxu0 0
    %2596 = vmatpush2.bf16.msra.mxu0 0
    %2597 = vmatprep.subr.bf16.mxu0 0
    %2598 = vmatpush2.bf16.msra.mxu0 0
    %2599 = vmatprep.subr.bf16.mxu0 0
    %2600 = vmatpush2.bf16.msra.mxu0 0
    %2601 = vmatprep.subr.bf16.mxu0 0
    %2602 = vmatpush2.bf16.msra.mxu0 0
    %2603 = vmatprep.subr.bf16.mxu0 0
    %2604 = vmatpush2.bf16.msra.mxu0 0
    %2605 = vmatprep.subr.bf16.mxu0 0
    %2606 = vmatpush2.bf16.msra.mxu0 0
    %2607 = vmatprep.subr.bf16.mxu0 0
    %2608 = vmatpush2.bf16.msra.mxu0 %v1838
    %2609 = vmatprep.mubr.bf16.mxu0 %v2575
    %2610 = vmatmul.mubr.bf16.gmra.mxu0 %v2572
    %v2611 = vpop.f32.mrf.mxu0
    %v2612 = vadd.f32 %v1792, %v2611
    %v2613 = vpop.f32.mrf.mxu0
    %v2614 = vpop.f32.mrf.mxu0
    %v2615 = vpop.f32.mrf.mxu0
    %2616 = vdwg.mxu0
    %v2617 = vmax.f32 %v2612, 0.0
    %v2619 = vrot.slane %v2345, 1
    %2620 = vrot.lane.b32.xlu0 %v2619, 32
    %v2621 = vpop.permute.xlu0 %2620
    %v2623 = vrot.slane %v2345, 2
    %2624 = vrot.lane.b32.xlu0 %v2623, 64
    %v2625 = vpop.permute.xlu0 %2624
    %v2627 = vrot.slane %v2345, 3
    %2628 = vrot.lane.b32.xlu0 %v2627, 96
    %v2629 = vpop.permute.xlu0 %2628
    %v2631 = vrot.slane %v2345, 4
    %2634 = vrot.lane.b32.xlu0 %v2413, 32
    %v2635 = vpop.permute.xlu0 %2634
    %v2637 = vrot.slane %v2413, 1
    %2638 = vrot.lane.b32.xlu0 %v2637, 64
    %v2639 = vpop.permute.xlu0 %2638
    %v2641 = vrot.slane %v2413, 2
    %2642 = vrot.lane.b32.xlu0 %v2641, 96
    %v2643 = vpop.permute.xlu0 %2642
    %v2645 = vrot.slane %v2413, 3
    %v2647 = vrot.slane %v2413, 4
    %2648 = vrot.lane.b32.xlu0 %v2647, 32
    %v2649 = vpop.permute.xlu0 %2648
    %2652 = vrot.lane.b32.xlu0 %v2481, 64
    %v2653 = vpop.permute.xlu0 %2652
    %v2655 = vrot.slane %v2481, 1
    %2656 = vrot.lane.b32.xlu0 %v2655, 96
    %v2657 = vpop.permute.xlu0 %2656
    %v2659 = vrot.slane %v2481, 2
    %v2661 = vrot.slane %v2481, 3
    %2662 = vrot.lane.b32.xlu0 %v2661, 32
    %v2663 = vpop.permute.xlu0 %2662
    %v2665 = vrot.slane %v2481, 4
    %2666 = vrot.lane.b32.xlu0 %v2665, 64
    %v2667 = vpop.permute.xlu0 %2666
    %2670 = vrot.lane.b32.xlu0 %v2549, 96
    %v2671 = vpop.permute.xlu0 %2670
    %v2673 = vsel %vm1771, %v2345, %v2621
    %v2674 = vsel %vm2220, %v2673, %v2625
    %v2675 = vsel %vm1784, %v2674, %v2629
    %v2676 = vsel %vm1771, %v2631, %v2635
    %v2677 = vsel %vm2220, %v2676, %v2639
    %v2678 = vsel %vm1784, %v2677, %v2643
    %v2679 = vsel %vm1771, %v2645, %v2649
    %v2680 = vsel %vm2220, %v2679, %v2653
    %v2681 = vsel %vm1784, %v2680, %v2657
    %v2682 = vsel %vm1771, %v2659, %v2663
    %v2683 = vsel %vm2220, %v2682, %v2667
    %v2684 = vsel %vm1784, %v2683, %v2671
    %v2685 = vrot.slane %v2549, 1
    %2686 = vrot.lane.b32.xlu0 %v2685, 32
    %v2687 = vpop.permute.xlu0 %2686
    %v2689 = vrot.slane %v2549, 2
    %2690 = vrot.lane.b32.xlu0 %v2689, 64
    %v2691 = vpop.permute.xlu0 %2690
    %v2693 = vrot.slane %v2549, 3
    %2694 = vrot.lane.b32.xlu0 %v2693, 96
    %v2695 = vpop.permute.xlu0 %2694
    %v2698 = vrot.slane %v2617, 7
    %2700 = vrot.lane.b32.xlu0 %v2617, 32
    %v2701 = vpop.permute.xlu0 %2700
    %v2703 = vrot.slane %v2617, 1
    %2704 = vrot.lane.b32.xlu0 %v2703, 64
    %v2705 = vpop.permute.xlu0 %2704
    %v2707 = vrot.slane %v2617, 2
    %2708 = vrot.lane.b32.xlu0 %v2707, 96
    %v2709 = vpop.permute.xlu0 %2708
    %v2711 = vrot.slane %v2617, 3
    %v2712 = vsel %vm1771, %v2549, %v2687
    %v2713 = vsel %vm2220, %v2712, %v2691
    %v2714 = vsel %vm1784, %v2713, %v2695
    %v2715 = vsel %vm1771, %v2698, %v2701
    %v2716 = vsel %vm2220, %v2715, %v2705
    %v2717 = vsel %vm1784, %v2716, %v2709
    %v2720 = vrot.slane %v2714, 1
    %v2721 = vrot.slane %v2717, 1
    %v2722 = vrot.slane %v2711, 1
    %v2727 = vrot.slane %v2675, 7
    %v2728 = vrot.slane %v2678, 7
    %v2729 = vrot.slane %v2681, 7
    %v2730 = vrot.slane %v2684, 7
    %v2731 = vrot.slane %v2720, 7
    %v2732 = vrot.slane %v2721, 7
    %v2733 = vrot.slane %v2722, 7
    %vm2741 = vcmask 1040384
    %v2742 = vsel %vm2741, %v2222, %v2727
    %v2743 = vsel %vm2741, %v2225, %v2728
    %v2744 = vsel %vm2741, %v2228, %v2729
    %v2745 = vsel %vm2741, %v2231, %v2730
    %v2746 = vsel %vm2741, %v2267, %v2731
    %v2747 = vsel %vm2741, %v2268, %v2732
    %v2748 = vsel %vm2741, %v2269, %v2733
    %v2749 = vpack.c.bf16 %v2742, %v2742
    %v2750 = vpack.c.bf16 %v2743, %v2743
    %v2751 = vpack.c.bf16 %v2744, %v2744
    %v2752 = vpack.c.bf16 %v2745, %v2745
    %v2753 = vpack.c.bf16 %v2746, %v2746
    %v2754 = vpack.c.bf16 %v2747, %v2747
    %v2755 = vpack.c.bf16 %v2748, %v2748
    %v2756 = vld [vmem:[%s7] sm:$0xff]
    %v2757 = vld [vmem:[%s7 + $0x8] sm:$0xff]
    %v2758 = vld [vmem:[%s7 + $0x10] sm:$0xff]
    %v2759 = vld [vmem:[%s7 + $0x18] sm:$0xff]
    %v2760 = vld [vmem:[%s7 + $0x20] sm:$0xff]
    %v2761 = vld [vmem:[%s7 + $0x28] sm:$0xff]
    %v2762 = vld [vmem:[%s7 + $0x30] sm:$0xff]
    %v2763 = vld [vmem:[%s7 + $0x38] sm:$0xff]
    %v2764 = vld [vmem:[%s7 + $0x40] sm:$0xff]
    %v2765 = vld [vmem:[%s7 + $0x48] sm:$0xff]
    %v2766 = vld [vmem:[%s7 + $0x50] sm:$0xff]
    %v2767 = vld [vmem:[%s7 + $0x58] sm:$0xff]
    %v2768 = vld [vmem:[%s7 + $0x60] sm:$0xff]
    %v2769 = vld [vmem:[%s7 + $0x68] sm:$0xff]
    %v2770 = vld [vmem:[%s7 + $0x70] sm:$0xff]
    %v2771 = vld [vmem:[%s7 + $0x78] sm:$0xff]
    %v2772 = vld [vmem:[%s7 + $0x80] sm:$0xff]
    %v2773 = vld [vmem:[%s7 + $0x88] sm:$0xff]
    %v2774 = vld [vmem:[%s7 + $0x90] sm:$0xff]
    %v2775 = vld [vmem:[%s7 + $0x98] sm:$0xff]
    %v2776 = vld [vmem:[%s7 + $0xa0] sm:$0xff]
    %v2777 = vld [vmem:[%s7 + $0xa8] sm:$0xff]
    %v2778 = vld [vmem:[%s7 + $0xb0] sm:$0xff]
    %v2779 = vld [vmem:[%s7 + $0xb8] sm:$0xff]
    %v2780 = vld [vmem:[%s7 + $0xc0] sm:$0xff]
    %v2781 = vld [vmem:[%s7 + $0xc8] sm:$0xff]
    %v2782 = vld [vmem:[%s7 + $0xd0] sm:$0xff]
    %v2783 = vld [vmem:[%s7 + $0xd8] sm:$0xff]
    %v2784 = vld [vmem:[%s7 + $0xe0] sm:$0xff]
    %v2785 = vld [vmem:[%s7 + $0xe8] sm:$0xff]
    %v2786 = vld [vmem:[%s7 + $0xf0] sm:$0xff]
    %v2787 = vld [vmem:[%s7 + $0xf8] sm:$0xff]
    %v2788 = vld [vmem:[%s7 + $0x100] sm:$0xff]
    %v2789 = vld [vmem:[%s7 + $0x108] sm:$0xff]
    %v2790 = vld [vmem:[%s7 + $0x110] sm:$0xff]
    %v2791 = vld [vmem:[%s7 + $0x118] sm:$0xff]
    %v2792 = vld [vmem:[%s7 + $0x120] sm:$0xff]
    %v2793 = vld [vmem:[%s7 + $0x128] sm:$0xff]
    %v2794 = vld [vmem:[%s7 + $0x130] sm:$0xff]
    %v2795 = vld [vmem:[%s7 + $0x138] sm:$0xff]
    %v2796 = vld [vmem:[%s7 + $0x140] sm:$0xff]
    %v2797 = vld [vmem:[%s7 + $0x148] sm:$0xff]
    %v2798 = vld [vmem:[%s7 + $0x150] sm:$0xff]
    %v2799 = vld [vmem:[%s7 + $0x158] sm:$0xff]
    %v2800 = vld [vmem:[%s7 + $0x160] sm:$0xff]
    %v2801 = vld [vmem:[%s7 + $0x168] sm:$0xff]
    %v2802 = vld [vmem:[%s7 + $0x170] sm:$0xff]
    %v2803 = vld [vmem:[%s7 + $0x178] sm:$0xff]
    %v2804 = vld [vmem:[%s7 + $0x180] sm:$0xff]
    %v2805 = vld [vmem:[%s7 + $0x188] sm:$0xff]
    %v2806 = vld [vmem:[%s7 + $0x190] sm:$0xff]
    %v2807 = vld [vmem:[%s7 + $0x198] sm:$0xff]
    %v2808 = vld [vmem:[%s7 + $0x1a0] sm:$0xff]
    %v2809 = vld [vmem:[%s7 + $0x1a8] sm:$0xff]
    %v2810 = vld [vmem:[%s7 + $0x1b0] sm:$0xff]
    %v2811 = vld [vmem:[%s7 + $0x1b8] sm:$0xff]
    %v2812 = vld [vmem:[%s7 + $0x1c0] sm:$0xff]
    %v2813 = vld [vmem:[%s7 + $0x1c8] sm:$0xff]
    %v2814 = vld [vmem:[%s7 + $0x1d0] sm:$0xff]
    %v2815 = vld [vmem:[%s7 + $0x1d8] sm:$0xff]
    %v2816 = vld [vmem:[%s7 + $0x1e0] sm:$0xff]
    %v2817 = vld [vmem:[%s7 + $0x1e8] sm:$0xff]
    %v2818 = vld [vmem:[%s7 + $0x1f0] sm:$0xff]
    %v2819 = vld [vmem:[%s7 + $0x1f8] sm:$0xff]
    %v2820 = vld [vmem:[%s7 + $0x200] sm:$0xff]
    %v2821 = vld [vmem:[%s7 + $0x208] sm:$0xff]
    %v2822 = vld [vmem:[%s7 + $0x210] sm:$0xff]
    %v2823 = vld [vmem:[%s7 + $0x218] sm:$0xff]
    %v2824 = vld [vmem:[%s7 + $0x220] sm:$0xff]
    %v2825 = vld [vmem:[%s7 + $0x228] sm:$0xff]
    %v2826 = vld [vmem:[%s7 + $0x230] sm:$0xff]
    %v2827 = vld [vmem:[%s7 + $0x238] sm:$0xff]
    %v2828 = vld [vmem:[%s7 + $0x240] sm:$0xff]
    %v2829 = vld [vmem:[%s7 + $0x248] sm:$0xff]
    %v2830 = vld [vmem:[%s7 + $0x250] sm:$0xff]
    %v2831 = vld [vmem:[%s7 + $0x258] sm:$0xff]
    %v2832 = vld [vmem:[%s7 + $0x260] sm:$0xff]
    %v2833 = vld [vmem:[%s7 + $0x268] sm:$0xff]
    %v2834 = vld [vmem:[%s7 + $0x270] sm:$0xff]
    %v2835 = vld [vmem:[%s7 + $0x278] sm:$0xff]
    %v2836 = vld [vmem:[%s7 + $0x280] sm:$0xff]
    %v2837 = vld [vmem:[%s7 + $0x288] sm:$0xff]
    %v2838 = vld [vmem:[%s7 + $0x290] sm:$0xff]
    %v2839 = vld [vmem:[%s7 + $0x298] sm:$0xff]
    %v2840 = vld [vmem:[%s7 + $0x2a0] sm:$0xff]
    %v2841 = vld [vmem:[%s7 + $0x2a8] sm:$0xff]
    %v2842 = vld [vmem:[%s7 + $0x2b0] sm:$0xff]
    %v2843 = vld [vmem:[%s7 + $0x2b8] sm:$0xff]
    %v2844 = vld [vmem:[%s7 + $0x2c0] sm:$0xff]
    %v2845 = vld [vmem:[%s7 + $0x2c8] sm:$0xff]
    %v2846 = vld [vmem:[%s7 + $0x2d0] sm:$0xff]
    %v2847 = vld [vmem:[%s7 + $0x2d8] sm:$0xff]
    %v2848 = vld [vmem:[%s7 + $0x2e0] sm:$0xff]
    %v2849 = vld [vmem:[%s7 + $0x2e8] sm:$0xff]
    %v2850 = vld [vmem:[%s7 + $0x2f0] sm:$0xff]
    %v2851 = vld [vmem:[%s7 + $0x2f8] sm:$0xff]
    %v2852 = vld [vmem:[%s7 + $0x300] sm:$0xff]
    %v2853 = vld [vmem:[%s7 + $0x308] sm:$0xff]
    %v2854 = vld [vmem:[%s7 + $0x310] sm:$0xff]
    %v2855 = vld [vmem:[%s7 + $0x318] sm:$0xff]
    %v2856 = vld [vmem:[%s8] sm:$0x3]
    %v2858 = vlaneseq
    %v2859 = vshrl.u32 %v2858, 7
    %v2860 = vsub.s32 0, %v2859
    %v2861 = vrot.slane %v2856, %v2860
    %v2862 = vlaneseq
    %v2863 = vshrl.u32 %v2862, 7
    %v2864 = vsub.s32 1, %v2863
    %v2865 = vrot.slane %v2856, %v2864
    %v2968 = vunpack.c.l.b16 %v2756
    %v2969 = vunpack.c.h.b16 %v2756
    %v2970 = vunpack.c.l.b16 %v2757
    %v2971 = vunpack.c.h.b16 %v2757
    %v2972 = vunpack.c.l.b16 %v2758
    %v2973 = vunpack.c.h.b16 %v2758
    %v2974 = vunpack.c.l.b16 %v2759
    %v2975 = vunpack.c.h.b16 %v2759
    %v2976 = vunpack.c.l.b16 %v2760
    %v2977 = vunpack.c.h.b16 %v2760
    %v2978 = vunpack.c.l.b16 %v2761
    %v2979 = vunpack.c.h.b16 %v2761
    %v2980 = vunpack.c.l.b16 %v2762
    %v2981 = vunpack.c.h.b16 %v2762
    %v2982 = vunpack.c.l.b16 %v2763
    %v2983 = vunpack.c.h.b16 %v2763
    %v2984 = vunpack.c.l.b16 %v2764
    %v2985 = vunpack.c.h.b16 %v2764
    %v2986 = vunpack.c.l.b16 %v2765
    %v2987 = vunpack.c.h.b16 %v2765
    %v2988 = vunpack.c.l.b16 %v2766
    %v2989 = vunpack.c.h.b16 %v2766
    %v2990 = vunpack.c.l.b16 %v2767
    %v2991 = vunpack.c.h.b16 %v2767
    %v2992 = vunpack.c.l.b16 %v2768
    %v2993 = vunpack.c.h.b16 %v2768
    %v2994 = vunpack.c.l.b16 %v2769
    %v2995 = vunpack.c.h.b16 %v2769
    %v2996 = vunpack.c.l.b16 %v2770
    %v2997 = vunpack.c.h.b16 %v2770
    %v2998 = vunpack.c.l.b16 %v2771
    %v2999 = vunpack.c.h.b16 %v2771
    %v3000 = vunpack.c.l.b16 %v2772
    %v3001 = vunpack.c.h.b16 %v2772
    %v3002 = vunpack.c.l.b16 %v2773
    %v3003 = vunpack.c.h.b16 %v2773
    %v3004 = vunpack.c.l.b16 %v2774
    %v3005 = vunpack.c.h.b16 %v2774
    %v3006 = vunpack.c.l.b16 %v2775
    %v3007 = vunpack.c.h.b16 %v2775
    %v3008 = vunpack.c.l.b16 %v2776
    %v3009 = vunpack.c.h.b16 %v2776
    %v3010 = vunpack.c.l.b16 %v2777
    %v3011 = vunpack.c.h.b16 %v2777
    %v3012 = vunpack.c.l.b16 %v2778
    %v3013 = vunpack.c.h.b16 %v2778
    %v3014 = vunpack.c.l.b16 %v2779
    %v3015 = vunpack.c.h.b16 %v2779
    %v3016 = vunpack.c.l.b16 %v2780
    %v3017 = vunpack.c.h.b16 %v2780
    %v3018 = vunpack.c.l.b16 %v2781
    %v3019 = vunpack.c.h.b16 %v2781
    %v3020 = vunpack.c.l.b16 %v2782
    %v3021 = vunpack.c.h.b16 %v2782
    %v3022 = vunpack.c.l.b16 %v2783
    %v3023 = vunpack.c.h.b16 %v2783
    %v3024 = vunpack.c.l.b16 %v2784
    %v3025 = vunpack.c.h.b16 %v2784
    %v3026 = vunpack.c.l.b16 %v2785
    %v3027 = vunpack.c.h.b16 %v2785
    %v3028 = vunpack.c.l.b16 %v2786
    %v3029 = vunpack.c.h.b16 %v2786
    %v3030 = vunpack.c.l.b16 %v2787
    %v3031 = vunpack.c.h.b16 %v2787
    %v3032 = vunpack.c.l.b16 %v2788
    %v3033 = vunpack.c.h.b16 %v2788
    %v3034 = vunpack.c.l.b16 %v2789
    %v3035 = vunpack.c.h.b16 %v2789
    %v3036 = vunpack.c.l.b16 %v2790
    %v3037 = vunpack.c.h.b16 %v2790
    %v3038 = vunpack.c.l.b16 %v2791
    %v3039 = vunpack.c.h.b16 %v2791
    %v3040 = vunpack.c.l.b16 %v2792
    %v3041 = vunpack.c.h.b16 %v2792
    %v3042 = vunpack.c.l.b16 %v2793
    %v3043 = vunpack.c.h.b16 %v2793
    %v3044 = vunpack.c.l.b16 %v2794
    %v3045 = vunpack.c.h.b16 %v2794
    %v3046 = vunpack.c.l.b16 %v2795
    %v3047 = vunpack.c.h.b16 %v2795
    %v3048 = vunpack.c.l.b16 %v2796
    %v3049 = vunpack.c.h.b16 %v2796
    %v3050 = vunpack.c.l.b16 %v2797
    %v3051 = vunpack.c.h.b16 %v2797
    %v3052 = vunpack.c.l.b16 %v2798
    %v3053 = vunpack.c.h.b16 %v2798
    %v3054 = vunpack.c.l.b16 %v2799
    %v3055 = vunpack.c.h.b16 %v2799
    %v3056 = vunpack.c.l.b16 %v2800
    %v3057 = vunpack.c.h.b16 %v2800
    %v3058 = vunpack.c.l.b16 %v2801
    %v3059 = vunpack.c.h.b16 %v2801
    %v3060 = vunpack.c.l.b16 %v2802
    %v3061 = vunpack.c.h.b16 %v2802
    %v3062 = vunpack.c.l.b16 %v2803
    %v3063 = vunpack.c.h.b16 %v2803
    %v3064 = vunpack.c.l.b16 %v2804
    %v3065 = vunpack.c.h.b16 %v2804
    %v3066 = vunpack.c.l.b16 %v2805
    %v3067 = vunpack.c.h.b16 %v2805
    %v3068 = vunpack.c.l.b16 %v2806
    %v3069 = vunpack.c.h.b16 %v2806
    %v3070 = vunpack.c.l.b16 %v2807
    %v3071 = vunpack.c.h.b16 %v2807
    %v3072 = vunpack.c.l.b16 %v2808
    %v3073 = vunpack.c.h.b16 %v2808
    %v3074 = vunpack.c.l.b16 %v2809
    %v3075 = vunpack.c.h.b16 %v2809
    %v3076 = vunpack.c.l.b16 %v2810
    %v3077 = vunpack.c.h.b16 %v2810
    %v3078 = vunpack.c.l.b16 %v2811
    %v3079 = vunpack.c.h.b16 %v2811
    %v3080 = vunpack.c.l.b16 %v2812
    %v3081 = vunpack.c.h.b16 %v2812
    %v3082 = vunpack.c.l.b16 %v2813
    %v3083 = vunpack.c.h.b16 %v2813
    %v3084 = vunpack.c.l.b16 %v2814
    %v3085 = vunpack.c.h.b16 %v2814
    %v3086 = vunpack.c.l.b16 %v2815
    %v3087 = vunpack.c.h.b16 %v2815
    %v3088 = vunpack.c.l.b16 %v2816
    %v3089 = vunpack.c.h.b16 %v2816
    %v3090 = vunpack.c.l.b16 %v2817
    %v3091 = vunpack.c.h.b16 %v2817
    %v3092 = vunpack.c.l.b16 %v2818
    %v3093 = vunpack.c.h.b16 %v2818
    %v3094 = vunpack.c.l.b16 %v2819
    %v3095 = vunpack.c.h.b16 %v2819
    %v3096 = vunpack.c.l.b16 %v2820
    %v3097 = vunpack.c.h.b16 %v2820
    %v3098 = vunpack.c.l.b16 %v2821
    %v3099 = vunpack.c.h.b16 %v2821
    %v3100 = vunpack.c.l.b16 %v2822
    %v3101 = vunpack.c.h.b16 %v2822
    %v3102 = vunpack.c.l.b16 %v2823
    %v3103 = vunpack.c.h.b16 %v2823
    %v3104 = vunpack.c.l.b16 %v2824
    %v3105 = vunpack.c.h.b16 %v2824
    %v3106 = vunpack.c.l.b16 %v2825
    %v3107 = vunpack.c.h.b16 %v2825
    %v3108 = vunpack.c.l.b16 %v2826
    %v3109 = vunpack.c.h.b16 %v2826
    %v3110 = vunpack.c.l.b16 %v2827
    %v3111 = vunpack.c.h.b16 %v2827
    %v3112 = vunpack.c.l.b16 %v2828
    %v3113 = vunpack.c.h.b16 %v2828
    %v3114 = vunpack.c.l.b16 %v2829
    %v3115 = vunpack.c.h.b16 %v2829
    %v3116 = vunpack.c.l.b16 %v2830
    %v3117 = vunpack.c.h.b16 %v2830
    %v3118 = vunpack.c.l.b16 %v2831
    %v3119 = vunpack.c.h.b16 %v2831
    %v3120 = vunpack.c.l.b16 %v2832
    %v3121 = vunpack.c.h.b16 %v2832
    %v3122 = vunpack.c.l.b16 %v2833
    %v3123 = vunpack.c.h.b16 %v2833
    %v3124 = vunpack.c.l.b16 %v2834
    %v3125 = vunpack.c.h.b16 %v2834
    %v3126 = vunpack.c.l.b16 %v2835
    %v3127 = vunpack.c.h.b16 %v2835
    %v3128 = vunpack.c.l.b16 %v2836
    %v3129 = vunpack.c.h.b16 %v2836
    %v3130 = vunpack.c.l.b16 %v2837
    %v3131 = vunpack.c.h.b16 %v2837
    %v3132 = vunpack.c.l.b16 %v2838
    %v3133 = vunpack.c.h.b16 %v2838
    %v3134 = vunpack.c.l.b16 %v2839
    %v3135 = vunpack.c.h.b16 %v2839
    %v3136 = vunpack.c.l.b16 %v2840
    %v3137 = vunpack.c.h.b16 %v2840
    %v3138 = vunpack.c.l.b16 %v2841
    %v3139 = vunpack.c.h.b16 %v2841
    %v3140 = vunpack.c.l.b16 %v2842
    %v3141 = vunpack.c.h.b16 %v2842
    %v3142 = vunpack.c.l.b16 %v2843
    %v3143 = vunpack.c.h.b16 %v2843
    %v3144 = vunpack.c.l.b16 %v2844
    %v3145 = vunpack.c.h.b16 %v2844
    %v3146 = vunpack.c.l.b16 %v2845
    %v3147 = vunpack.c.h.b16 %v2845
    %v3148 = vunpack.c.l.b16 %v2846
    %v3149 = vunpack.c.h.b16 %v2846
    %v3150 = vunpack.c.l.b16 %v2847
    %v3151 = vunpack.c.h.b16 %v2847
    %v3152 = vunpack.c.l.b16 %v2848
    %v3153 = vunpack.c.h.b16 %v2848
    %v3154 = vunpack.c.l.b16 %v2849
    %v3155 = vunpack.c.h.b16 %v2849
    %v3156 = vunpack.c.l.b16 %v2850
    %v3157 = vunpack.c.h.b16 %v2850
    %v3158 = vunpack.c.l.b16 %v2851
    %v3159 = vunpack.c.h.b16 %v2851
    %v3160 = vunpack.c.l.b16 %v2852
    %v3161 = vunpack.c.h.b16 %v2852
    %v3162 = vunpack.c.l.b16 %v2853
    %v3163 = vunpack.c.h.b16 %v2853
    %v3164 = vunpack.c.l.b16 %v2854
    %v3165 = vunpack.c.h.b16 %v2854
    %v3166 = vunpack.c.l.b16 %v2855
    %v3167 = vunpack.c.h.b16 %v2855
    %v3168 = vpack.c.b16 %v2970, %v2968
    %v3169 = vpack.c.b16 %v2971, %v2969
    %v3170 = vpack.c.b16 %v2974, %v2972
    %v3171 = vpack.c.b16 %v2975, %v2973
    %v3172 = vpack.c.b16 %v2978, %v2976
    %v3173 = vpack.c.b16 %v2979, %v2977
    %v3174 = vpack.c.b16 %v2982, %v2980
    %v3175 = vpack.c.b16 %v2983, %v2981
    %v3176 = vpack.c.b16 %v2986, %v2984
    %v3177 = vpack.c.b16 %v2987, %v2985
    %v3178 = vpack.c.b16 %v2990, %v2988
    %v3179 = vpack.c.b16 %v2991, %v2989
    %v3180 = vpack.c.b16 %v2994, %v2992
    %v3181 = vpack.c.b16 %v2995, %v2993
    %v3182 = vpack.c.b16 %v2998, %v2996
    %v3183 = vpack.c.b16 %v2999, %v2997
    %v3184 = vpack.c.b16 %v3002, %v3000
    %v3185 = vpack.c.b16 %v3003, %v3001
    %v3186 = vpack.c.b16 %v3006, %v3004
    %v3187 = vpack.c.b16 %v3007, %v3005
    %v3188 = vpack.c.b16 %v3010, %v3008
    %v3189 = vpack.c.b16 %v3011, %v3009
    %v3190 = vpack.c.b16 %v3014, %v3012
    %v3191 = vpack.c.b16 %v3015, %v3013
    %v3192 = vpack.c.b16 %v3018, %v3016
    %v3193 = vpack.c.b16 %v3019, %v3017
    %v3194 = vpack.c.b16 %v3022, %v3020
    %v3195 = vpack.c.b16 %v3023, %v3021
    %v3196 = vpack.c.b16 %v3026, %v3024
    %v3197 = vpack.c.b16 %v3027, %v3025
    %v3198 = vpack.c.b16 %v3030, %v3028
    %v3199 = vpack.c.b16 %v3031, %v3029
    %v3200 = vpack.c.b16 %v3034, %v3032
    %v3201 = vpack.c.b16 %v3035, %v3033
    %v3202 = vpack.c.b16 %v3038, %v3036
    %v3203 = vpack.c.b16 %v3039, %v3037
    %v3204 = vpack.c.b16 %v3042, %v3040
    %v3205 = vpack.c.b16 %v3043, %v3041
    %v3206 = vpack.c.b16 %v3046, %v3044
    %v3207 = vpack.c.b16 %v3047, %v3045
    %v3208 = vpack.c.b16 %v3050, %v3048
    %v3209 = vpack.c.b16 %v3051, %v3049
    %v3210 = vpack.c.b16 %v3054, %v3052
    %v3211 = vpack.c.b16 %v3055, %v3053
    %v3212 = vpack.c.b16 %v3058, %v3056
    %v3213 = vpack.c.b16 %v3059, %v3057
    %v3214 = vpack.c.b16 %v3062, %v3060
    %v3215 = vpack.c.b16 %v3063, %v3061
    %v3216 = vpack.c.b16 %v3066, %v3064
    %v3217 = vpack.c.b16 %v3067, %v3065
    %v3218 = vpack.c.b16 %v3070, %v3068
    %v3219 = vpack.c.b16 %v3071, %v3069
    %v3220 = vpack.c.b16 %v3074, %v3072
    %v3221 = vpack.c.b16 %v3075, %v3073
    %v3222 = vpack.c.b16 %v3078, %v3076
    %v3223 = vpack.c.b16 %v3079, %v3077
    %v3224 = vpack.c.b16 %v3082, %v3080
    %v3225 = vpack.c.b16 %v3083, %v3081
    %v3226 = vpack.c.b16 %v3086, %v3084
    %v3227 = vpack.c.b16 %v3087, %v3085
    %v3228 = vpack.c.b16 %v3090, %v3088
    %v3229 = vpack.c.b16 %v3091, %v3089
    %v3230 = vpack.c.b16 %v3094, %v3092
    %v3231 = vpack.c.b16 %v3095, %v3093
    %v3232 = vpack.c.b16 %v3098, %v3096
    %v3233 = vpack.c.b16 %v3099, %v3097
    %v3234 = vpack.c.b16 %v3102, %v3100
    %v3235 = vpack.c.b16 %v3103, %v3101
    %v3236 = vpack.c.b16 %v3106, %v3104
    %v3237 = vpack.c.b16 %v3107, %v3105
    %v3238 = vpack.c.b16 %v3110, %v3108
    %v3239 = vpack.c.b16 %v3111, %v3109
    %v3240 = vpack.c.b16 %v3114, %v3112
    %v3241 = vpack.c.b16 %v3115, %v3113
    %v3242 = vpack.c.b16 %v3118, %v3116
    %v3243 = vpack.c.b16 %v3119, %v3117
    %v3244 = vpack.c.b16 %v3122, %v3120
    %v3245 = vpack.c.b16 %v3123, %v3121
    %v3246 = vpack.c.b16 %v3126, %v3124
    %v3247 = vpack.c.b16 %v3127, %v3125
    %v3248 = vpack.c.b16 %v3130, %v3128
    %v3249 = vpack.c.b16 %v3131, %v3129
    %v3250 = vpack.c.b16 %v3134, %v3132
    %v3251 = vpack.c.b16 %v3135, %v3133
    %v3252 = vpack.c.b16 %v3138, %v3136
    %v3253 = vpack.c.b16 %v3139, %v3137
    %v3254 = vpack.c.b16 %v3142, %v3140
    %v3255 = vpack.c.b16 %v3143, %v3141
    %v3256 = vpack.c.b16 %v3146, %v3144
    %v3257 = vpack.c.b16 %v3147, %v3145
    %v3258 = vpack.c.b16 %v3150, %v3148
    %v3259 = vpack.c.b16 %v3151, %v3149
    %v3260 = vpack.c.b16 %v3154, %v3152
    %v3261 = vpack.c.b16 %v3155, %v3153
    %v3262 = vpack.c.b16 %v3158, %v3156
    %v3263 = vpack.c.b16 %v3159, %v3157
    %v3264 = vpack.c.b16 %v3162, %v3160
    %v3265 = vpack.c.b16 %v3163, %v3161
    %v3266 = vpack.c.b16 %v3166, %v3164
    %v3267 = vpack.c.b16 %v3167, %v3165
    %v3369 = vsel %vm1771, %v2755, 0
    %3371 = vmatprep.subr.bf16.mxu0 %v3183
    %3372 = vmatpush1.bf16.msra.mxu0 %v3182
    %3373 = vmatprep.subr.bf16.mxu0 %v3181
    %3374 = vmatpush1.bf16.msra.mxu0 %v3180
    %3375 = vmatprep.subr.bf16.mxu0 %v3179
    %3376 = vmatpush1.bf16.msra.mxu0 %v3178
    %3377 = vmatprep.subr.bf16.mxu0 %v3177
    %3378 = vmatpush1.bf16.msra.mxu0 %v3176
    %3379 = vmatprep.subr.bf16.mxu0 %v3175
    %3380 = vmatpush1.bf16.msra.mxu0 %v3174
    %3381 = vmatprep.subr.bf16.mxu0 %v3173
    %3382 = vmatpush1.bf16.msra.mxu0 %v3172
    %3383 = vmatprep.subr.bf16.mxu0 %v3171
    %3384 = vmatpush1.bf16.msra.mxu0 %v3170
    %3385 = vmatprep.subr.bf16.mxu0 %v3169
    %3386 = vmatpush1.bf16.msra.mxu0 %v3168
    %3387 = vmatprep.subr.bf16.mxu0 %v3199
    %3388 = vmatpush2.bf16.msra.mxu0 %v3198
    %3389 = vmatprep.subr.bf16.mxu0 %v3197
    %3390 = vmatpush2.bf16.msra.mxu0 %v3196
    %3391 = vmatprep.subr.bf16.mxu0 %v3195
    %3392 = vmatpush2.bf16.msra.mxu0 %v3194
    %3393 = vmatprep.subr.bf16.mxu0 %v3193
    %3394 = vmatpush2.bf16.msra.mxu0 %v3192
    %3395 = vmatprep.subr.bf16.mxu0 %v3191
    %3396 = vmatpush2.bf16.msra.mxu0 %v3190
    %3397 = vmatprep.subr.bf16.mxu0 %v3189
    %3398 = vmatpush2.bf16.msra.mxu0 %v3188
    %3399 = vmatprep.subr.bf16.mxu0 %v3187
    %3400 = vmatpush2.bf16.msra.mxu0 %v3186
    %3401 = vmatprep.subr.bf16.mxu0 %v3185
    %3402 = vmatpush2.bf16.msra.mxu0 %v3184
    %3403 = vmatprep.mubr.bf16.mxu0 %v2750
    %3404 = vmatmul.mubr.bf16.gmra.mxu0 %v2749
    %v3405 = vpop.f32.mrf.mxu0
    %v3406 = vadd.f32 %v2861, %v3405
    %v3407 = vpop.f32.mrf.mxu0
    %v3408 = vadd.f32 %v2865, %v3407
    %v3409 = vpop.f32.mrf.mxu0
    %v3410 = vpop.f32.mrf.mxu0
    %3411 = vdwg.mxu0
    %3412 = vmatprep.subr.bf16.mxu0 %v3215
    %3413 = vmatpush1.bf16.msra.mxu0 %v3214
    %3414 = vmatprep.subr.bf16.mxu0 %v3213
    %3415 = vmatpush1.bf16.msra.mxu0 %v3212
    %3416 = vmatprep.subr.bf16.mxu0 %v3211
    %3417 = vmatpush1.bf16.msra.mxu0 %v3210
    %3418 = vmatprep.subr.bf16.mxu0 %v3209
    %3419 = vmatpush1.bf16.msra.mxu0 %v3208
    %3420 = vmatprep.subr.bf16.mxu0 %v3207
    %3421 = vmatpush1.bf16.msra.mxu0 %v3206
    %3422 = vmatprep.subr.bf16.mxu0 %v3205
    %3423 = vmatpush1.bf16.msra.mxu0 %v3204
    %3424 = vmatprep.subr.bf16.mxu0 %v3203
    %3425 = vmatpush1.bf16.msra.mxu0 %v3202
    %3426 = vmatprep.subr.bf16.mxu0 %v3201
    %3427 = vmatpush1.bf16.msra.mxu0 %v3200
    %3428 = vmatprep.subr.bf16.mxu0 %v3231
    %3429 = vmatpush2.bf16.msra.mxu0 %v3230
    %3430 = vmatprep.subr.bf16.mxu0 %v3229
    %3431 = vmatpush2.bf16.msra.mxu0 %v3228
    %3432 = vmatprep.subr.bf16.mxu0 %v3227
    %3433 = vmatpush2.bf16.msra.mxu0 %v3226
    %3434 = vmatprep.subr.bf16.mxu0 %v3225
    %3435 = vmatpush2.bf16.msra.mxu0 %v3224
    %3436 = vmatprep.subr.bf16.mxu0 %v3223
    %3437 = vmatpush2.bf16.msra.mxu0 %v3222
    %3438 = vmatprep.subr.bf16.mxu0 %v3221
    %3439 = vmatpush2.bf16.msra.mxu0 %v3220
    %3440 = vmatprep.subr.bf16.mxu0 %v3219
    %3441 = vmatpush2.bf16.msra.mxu0 %v3218
    %3442 = vmatprep.subr.bf16.mxu0 %v3217
    %3443 = vmatpush2.bf16.msra.mxu0 %v3216
    %3444 = vmatprep.mubr.bf16.mxu0 %v2752
    %3445 = vmatmul.mubr.bf16.gmra.mxu0 %v2751
    %v3446 = vpop.f32.mrf.mxu0
    %v3447 = vadd.f32 %v3406, %v3446
    %v3448 = vpop.f32.mrf.mxu0
    %v3449 = vadd.f32 %v3408, %v3448
    %v3450 = vpop.f32.mrf.mxu0
    %v3451 = vpop.f32.mrf.mxu0
    %3452 = vdwg.mxu0
    %3453 = vmatprep.subr.bf16.mxu0 %v3247
    %3454 = vmatpush1.bf16.msra.mxu0 %v3246
    %3455 = vmatprep.subr.bf16.mxu0 %v3245
    %3456 = vmatpush1.bf16.msra.mxu0 %v3244
    %3457 = vmatprep.subr.bf16.mxu0 %v3243
    %3458 = vmatpush1.bf16.msra.mxu0 %v3242
    %3459 = vmatprep.subr.bf16.mxu0 %v3241
    %3460 = vmatpush1.bf16.msra.mxu0 %v3240
    %3461 = vmatprep.subr.bf16.mxu0 %v3239
    %3462 = vmatpush1.bf16.msra.mxu0 %v3238
    %3463 = vmatprep.subr.bf16.mxu0 %v3237
    %3464 = vmatpush1.bf16.msra.mxu0 %v3236
    %3465 = vmatprep.subr.bf16.mxu0 %v3235
    %3466 = vmatpush1.bf16.msra.mxu0 %v3234
    %3467 = vmatprep.subr.bf16.mxu0 %v3233
    %3468 = vmatpush1.bf16.msra.mxu0 %v3232
    %3469 = vmatprep.subr.bf16.mxu0 %v3263
    %3470 = vmatpush2.bf16.msra.mxu0 %v3262
    %3471 = vmatprep.subr.bf16.mxu0 %v3261
    %3472 = vmatpush2.bf16.msra.mxu0 %v3260
    %3473 = vmatprep.subr.bf16.mxu0 %v3259
    %3474 = vmatpush2.bf16.msra.mxu0 %v3258
    %3475 = vmatprep.subr.bf16.mxu0 %v3257
    %3476 = vmatpush2.bf16.msra.mxu0 %v3256
    %3477 = vmatprep.subr.bf16.mxu0 %v3255
    %3478 = vmatpush2.bf16.msra.mxu0 %v3254
    %3479 = vmatprep.subr.bf16.mxu0 %v3253
    %3480 = vmatpush2.bf16.msra.mxu0 %v3252
    %3481 = vmatprep.subr.bf16.mxu0 %v3251
    %3482 = vmatpush2.bf16.msra.mxu0 %v3250
    %3483 = vmatprep.subr.bf16.mxu0 %v3249
    %3484 = vmatpush2.bf16.msra.mxu0 %v3248
    %3485 = vmatprep.mubr.bf16.mxu0 %v2754
    %3486 = vmatmul.mubr.bf16.gmra.mxu0 %v2753
    %v3487 = vpop.f32.mrf.mxu0
    %v3488 = vadd.f32 %v3447, %v3487
    %v3489 = vpop.f32.mrf.mxu0
    %v3490 = vadd.f32 %v3449, %v3489
    %v3491 = vpop.f32.mrf.mxu0
    %v3492 = vpop.f32.mrf.mxu0
    %3493 = vdwg.mxu0
    %3494 = vmatprep.subr.bf16.mxu0 0
    %3495 = vmatpush1.bf16.msra.mxu0 0
    %3496 = vmatprep.subr.bf16.mxu0 0
    %3497 = vmatpush1.bf16.msra.mxu0 0
    %3498 = vmatprep.subr.bf16.mxu0 0
    %3499 = vmatpush1.bf16.msra.mxu0 0
    %3500 = vmatprep.subr.bf16.mxu0 0
    %3501 = vmatpush1.bf16.msra.mxu0 0
    %3502 = vmatprep.subr.bf16.mxu0 0
    %3503 = vmatpush1.bf16.msra.mxu0 0
    %3504 = vmatprep.subr.bf16.mxu0 0
    %3505 = vmatpush1.bf16.msra.mxu0 0
    %3506 = vmatprep.subr.bf16.mxu0 %v3267
    %3507 = vmatpush1.bf16.msra.mxu0 %v3266
    %3508 = vmatprep.subr.bf16.mxu0 %v3265
    %3509 = vmatpush1.bf16.msra.mxu0 %v3264
    %3510 = vmatprep.subr.bf16.mxu0 0
    %3511 = vmatpush2.bf16.msra.mxu0 0
    %3512 = vmatprep.subr.bf16.mxu0 0
    %3513 = vmatpush2.bf16.msra.mxu0 0
    %3514 = vmatprep.subr.bf16.mxu0 0
    %3515 = vmatpush2.bf16.msra.mxu0 0
    %3516 = vmatprep.subr.bf16.mxu0 0
    %3517 = vmatpush2.bf16.msra.mxu0 0
    %3518 = vmatprep.subr.bf16.mxu0 0
    %3519 = vmatpush2.bf16.msra.mxu0 0
    %3520 = vmatprep.subr.bf16.mxu0 0
    %3521 = vmatpush2.bf16.msra.mxu0 0
    %3522 = vmatprep.subr.bf16.mxu0 0
    %3523 = vmatpush2.bf16.msra.mxu0 0
    %3524 = vmatprep.subr.bf16.mxu0 0
    %3525 = vmatpush2.bf16.msra.mxu0 0
    %3526 = vmatprep.mubr.bf16.mxu0 0
    %3527 = vmatmul.mubr.bf16.gmra.mxu0 %v3369
    %v3528 = vpop.f32.mrf.mxu0
    %v3529 = vadd.f32 %v3488, %v3528
    %v3530 = vpop.f32.mrf.mxu0
    %v3531 = vadd.f32 %v3490, %v3530
    %v3532 = vpop.f32.mrf.mxu0
    %v3533 = vpop.f32.mrf.mxu0
    %3534 = vdwg.mxu0
    %v3535 = vmax.f32 %v3529, 0.0
    %v3536 = vmax.f32 %v3531, 0.0
    %v3537 = vpack.c.bf16 %v3535, %v3535
    %v3538 = vpack.c.bf16 %v3536, %v3536
    %v3539 = vld [vmem:[%s9] sm:$0xf]
    %v3540 = vld [vmem:[%s9 + $0x4] sm:$0xf]
    %v3541 = vld [vmem:[%s9 + $0x8] sm:$0xf]
    %v3542 = vld [vmem:[%s9 + $0xc] sm:$0xf]
    %v3543 = vld [vmem:[%s9 + $0x10] sm:$0xf]
    %v3544 = vld [vmem:[%s9 + $0x14] sm:$0xf]
    %v3545 = vld [vmem:[%s9 + $0x18] sm:$0xf]
    %v3546 = vld [vmem:[%s9 + $0x1c] sm:$0xf]
    %v3547 = vld [vmem:[%s9 + $0x20] sm:$0xf]
    %v3548 = vld [vmem:[%s9 + $0x24] sm:$0xf]
    %v3549 = vld [vmem:[%s9 + $0x28] sm:$0xf]
    %v3550 = vld [vmem:[%s9 + $0x2c] sm:$0xf]
    %v3551 = vld [vmem:[%s9 + $0x30] sm:$0xf]
    %v3552 = vld [vmem:[%s9 + $0x34] sm:$0xf]
    %v3553 = vld [vmem:[%s9 + $0x38] sm:$0xf]
    %v3554 = vld [vmem:[%s9 + $0x3c] sm:$0xf]
    %v3555 = vld [vmem:[%s9 + $0x40] sm:$0xf]
    %v3556 = vld [vmem:[%s9 + $0x44] sm:$0xf]
    %v3557 = vld [vmem:[%s9 + $0x48] sm:$0x7]
    %v3558 = vld [vmem:[%s10] sm:$0x1]
    %v3560 = vlaneseq
    %v3561 = vshrl.u32 %v3560, 7
    %v3562 = vsub.s32 0, %v3561
    %v3563 = vrot.slane %v3558, %v3562
    %v3584 = vunpack.c.l.b16 %v3539
    %v3585 = vunpack.c.l.b16 %v3540
    %v3586 = vunpack.c.l.b16 %v3541
    %v3587 = vunpack.c.l.b16 %v3542
    %v3588 = vunpack.c.l.b16 %v3543
    %v3589 = vunpack.c.l.b16 %v3544
    %v3590 = vunpack.c.l.b16 %v3545
    %v3591 = vunpack.c.l.b16 %v3546
    %v3592 = vunpack.c.l.b16 %v3547
    %v3593 = vunpack.c.l.b16 %v3548
    %v3594 = vunpack.c.l.b16 %v3549
    %v3595 = vunpack.c.l.b16 %v3550
    %v3596 = vunpack.c.l.b16 %v3551
    %v3597 = vunpack.c.l.b16 %v3552
    %v3598 = vunpack.c.l.b16 %v3553
    %v3599 = vunpack.c.l.b16 %v3554
    %v3600 = vunpack.c.l.b16 %v3555
    %v3601 = vunpack.c.l.b16 %v3556
    %v3602 = vunpack.c.l.b16 %v3557
    %v3603 = vpack.c.b16 %v3585, %v3584
    %v3604 = vpack.c.b16 %v3587, %v3586
    %v3605 = vpack.c.b16 %v3589, %v3588
    %v3606 = vpack.c.b16 %v3591, %v3590
    %v3607 = vpack.c.b16 %v3593, %v3592
    %v3608 = vpack.c.b16 %v3595, %v3594
    %v3609 = vpack.c.b16 %v3597, %v3596
    %v3610 = vpack.c.b16 %v3599, %v3598
    %v3611 = vpack.c.b16 %v3601, %v3600
    %v3612 = vpack.c.b16 %v3602, %v3602
    %vm3622 = vcmask 179200
    %v3624 = vsel %vm3622, %v3538, 0
    %vm3626 = vcmask 1042432
    %v3628 = vsel %vm3626, %v3612, 0
    %3630 = vmatprep.subr.bf16.mxu0 0
    %3631 = vmatpush1.bf16.msra.mxu0 %v3610
    %3632 = vmatprep.subr.bf16.mxu0 0
    %3633 = vmatpush1.bf16.msra.mxu0 %v3609
    %3634 = vmatprep.subr.bf16.mxu0 0
    %3635 = vmatpush1.bf16.msra.mxu0 %v3608
    %3636 = vmatprep.subr.bf16.mxu0 0
    %3637 = vmatpush1.bf16.msra.mxu0 %v3607
    %3638 = vmatprep.subr.bf16.mxu0 0
    %3639 = vmatpush1.bf16.msra.mxu0 %v3606
    %3640 = vmatprep.subr.bf16.mxu0 0
    %3641 = vmatpush1.bf16.msra.mxu0 %v3605
    %3642 = vmatprep.subr.bf16.mxu0 0
    %3643 = vmatpush1.bf16.msra.mxu0 %v3604
    %3644 = vmatprep.subr.bf16.mxu0 0
    %3645 = vmatpush1.bf16.msra.mxu0 %v3603
    %3646 = vmatprep.subr.bf16.mxu0 0
    %3647 = vmatpush2.bf16.msra.mxu0 0
    %3648 = vmatprep.subr.bf16.mxu0 0
    %3649 = vmatpush2.bf16.msra.mxu0 0
    %3650 = vmatprep.subr.bf16.mxu0 0
    %3651 = vmatpush2.bf16.msra.mxu0 0
    %3652 = vmatprep.subr.bf16.mxu0 0
    %3653 = vmatpush2.bf16.msra.mxu0 0
    %3654 = vmatprep.subr.bf16.mxu0 0
    %3655 = vmatpush2.bf16.msra.mxu0 0
    %3656 = vmatprep.subr.bf16.mxu0 0
    %3657 = vmatpush2.bf16.msra.mxu0 0
    %3658 = vmatprep.subr.bf16.mxu0 0
    %3659 = vmatpush2.bf16.msra.mxu0 %v3628
    %3660 = vmatprep.subr.bf16.mxu0 0
    %3661 = vmatpush2.bf16.msra.mxu0 %v3611
    %3662 = vmatprep.mubr.bf16.mxu0 %v3624
    %3663 = vmatmul.mubr.bf16.gmra.mxu0 %v3537
    %v3664 = vpop.f32.mrf.mxu0
    %v3665 = vadd.f32 %v3563, %v3664
    %v3666 = vpop.f32.mrf.mxu0
    %v3667 = vpop.f32.mrf.mxu0
    %v3668 = vpop.f32.mrf.mxu0
    %3669 = vdwg.mxu0
    %v3670 = vmin.f32 %v3665, 0.0
    %v3671 = vand.u32 2147483647, %v3665
    %v3672 = vsub.f32 0.0, %v3671
    %v3673 = vmul.f32 %v3672, 1.442695
    %v3674 = vpow.pop %v3673
    %v3675 = vadd.f32 %v3674, 1.0
    %v3676 = vlog2.pop %v3675
    %v3677 = vmul.f32 %v3676, 0.6931472
    %v3678 = vsub.f32 %v3670, %v3677
    %v3679 = vpack.c.bf16 %v3678, %v3678
    %v3680 = vld [vmem:[%s11] sm:$0xf]
    %v3681 = vld [vmem:[%s11 + $0x4] sm:$0xf]
    %v3682 = vld [vmem:[%s11 + $0x8] sm:$0xf]
    %v3683 = vld [vmem:[%s11 + $0xc] sm:$0xf]
    %v3684 = vld [vmem:[%s11 + $0x10] sm:$0xf]
    %v3685 = vld [vmem:[%s11 + $0x14] sm:$0xf]
    %v3686 = vld [vmem:[%s11 + $0x18] sm:$0xf]
    %v3687 = vld [vmem:[%s11 + $0x1c] sm:$0xf]
    %v3688 = vld [vmem:[%s11 + $0x20] sm:$0xf]
    %v3689 = vld [vmem:[%s11 + $0x24] sm:$0xf]
    %v3690 = vld [vmem:[%s11 + $0x28] sm:$0xf]
    %v3691 = vld [vmem:[%s11 + $0x2c] sm:$0x1]
    %v3692 = vld [vmem:[%s12] sm:$0x1]
    %v3694 = vlaneseq
    %v3695 = vshrl.u32 %v3694, 7
    %v3696 = vsub.s32 0, %v3695
    %v3697 = vrot.slane %v3692, %v3696
    %v3711 = vunpack.c.l.b16 %v3680
    %v3712 = vunpack.c.l.b16 %v3681
    %v3713 = vunpack.c.l.b16 %v3682
    %v3714 = vunpack.c.l.b16 %v3683
    %v3715 = vunpack.c.l.b16 %v3684
    %v3716 = vunpack.c.l.b16 %v3685
    %v3717 = vunpack.c.l.b16 %v3686
    %v3718 = vunpack.c.l.b16 %v3687
    %v3719 = vunpack.c.l.b16 %v3688
    %v3720 = vunpack.c.l.b16 %v3689
    %v3721 = vunpack.c.l.b16 %v3690
    %v3722 = vunpack.c.l.b16 %v3691
    %v3723 = vpack.c.b16 %v3712, %v3711
    %v3724 = vpack.c.b16 %v3714, %v3713
    %v3725 = vpack.c.b16 %v3716, %v3715
    %v3726 = vpack.c.b16 %v3718, %v3717
    %v3727 = vpack.c.b16 %v3720, %v3719
    %v3728 = vpack.c.b16 %v3722, %v3721
    %vm3734 = vcmask 736256
    %v3736 = vsel %vm3734, %v3679, 0
    %vm3738 = vcmask 1044480
    %v3740 = vsel %vm3738, %v3728, 0
    %3742 = vmatprep.subr.bf16.mxu0 0
    %3743 = vmatpush1.bf16.msra.mxu0 0
    %3744 = vmatprep.subr.bf16.mxu0 0
    %3745 = vmatpush1.bf16.msra.mxu0 0
    %3746 = vmatprep.subr.bf16.mxu0 0
    %3747 = vmatpush1.bf16.msra.mxu0 %v3740
    %3748 = vmatprep.subr.bf16.mxu0 0
    %3749 = vmatpush1.bf16.msra.mxu0 %v3727
    %3750 = vmatprep.subr.bf16.mxu0 0
    %3751 = vmatpush1.bf16.msra.mxu0 %v3726
    %3752 = vmatprep.subr.bf16.mxu0 0
    %3753 = vmatpush1.bf16.msra.mxu0 %v3725
    %3754 = vmatprep.subr.bf16.mxu0 0
    %3755 = vmatpush1.bf16.msra.mxu0 %v3724
    %3756 = vmatprep.subr.bf16.mxu0 0
    %3757 = vmatpush1.bf16.msra.mxu0 %v3723
    %3758 = vmatprep.subr.bf16.mxu0 0
    %3759 = vmatpush2.bf16.msra.mxu0 0
    %3760 = vmatprep.subr.bf16.mxu0 0
    %3761 = vmatpush2.bf16.msra.mxu0 0
    %3762 = vmatprep.subr.bf16.mxu0 0
    %3763 = vmatpush2.bf16.msra.mxu0 0
    %3764 = vmatprep.subr.bf16.mxu0 0
    %3765 = vmatpush2.bf16.msra.mxu0 0
    %3766 = vmatprep.subr.bf16.mxu0 0
    %3767 = vmatpush2.bf16.msra.mxu0 0
    %3768 = vmatprep.subr.bf16.mxu0 0
    %3769 = vmatpush2.bf16.msra.mxu0 0
    %3770 = vmatprep.subr.bf16.mxu0 0
    %3771 = vmatpush2.bf16.msra.mxu0 0
    %3772 = vmatprep.subr.bf16.mxu0 0
    %3773 = vmatpush2.bf16.msra.mxu0 0
    %3774 = vmatprep.mubr.bf16.mxu0 0
    %3775 = vmatmul.mubr.bf16.gmra.mxu0 %v3736
    %v3776 = vpop.f32.mrf.mxu0
    %v3777 = vadd.f32 %v3697, %v3776
    %v3778 = vpop.f32.mrf.mxu0
    %v3779 = vpop.f32.mrf.mxu0
    %v3780 = vpop.f32.mrf.mxu0
    %3781 = vdwg.mxu0
    %vm3782 = vcmask 74752
    %3783 = vst.msk [vmem:[#allocation6] sm:$0x3] %vm3782, %v3777
    // Predicated region
    $region82: #{net_forward.1} parent=1 // pred_check
      _
    $region83: #{net_forward.1} parent=1 // pred_check_branch
      %3785 = sbr.rel (0) target = $region85
    $region84: #{net_forward.1} parent=1 // pred_region
      %s3787 = ssub.s32 32, 32
      %3788 = vsyncadd [#allocation7], %s3787
      %s3790 = sshll.u32 [#allocation6], 4
      %s3791 = int_to_ptr.vmem [resolvable:$true] %s3790
      %3793 = dma.vmem_to_hbm [thread:$0]  %s3791, 32, %s13, [#allocation7]
    $region85: #{net_forward.1} parent=1 // pred_fallthru
      _
    // Predicated region
    $region86: #{net_forward.1} parent=1 // pred_check
      _
    $region87: #{net_forward.1} parent=1 // pred_check_branch
      %3795 = sbr.rel (0) target = $region89
    $region88: #{net_forward.1} parent=1 // pred_region
      %3796 = dma.done [#allocation7], 32
    $region89: #{net_forward.1} parent=1 // pred_fallthru
      _
    %3797 = vsyncpa [#allocation7], 1

</llo_original>
